<compile_context>
chip_gen: v7x
topology: tpu7x:2x2x1
jax: 0.10.0
libtpu: 0.0.40
codegen_flags: <defaults>
</compile_context>

<pallas_src>
import functools

import jax
import jax.numpy as jnp
from jax.experimental import pallas as pl
from jax.experimental.pallas import tpu as pltpu

# ----------------------------- config ---------------------------------------

HIDDEN = 32
NUM_HEADS = 4
HEAD_DIM = HIDDEN // NUM_HEADS          # 8
SEQ = 8
VOCAB = 128
RMS_EPS = 1e-6
ROPE_THETA = 10000.0
APPROX_SOFTMAX_RECIP = True             # pl.reciprocal(approx=True) in softmax denom

# Per-layer NAS block configs (mirrors config.block_configs):
BLOCK_CONFIGS = [
    dict(attn_no_op=False, n_heads_in_group=1, ffn_no_op=False, ffn_mult=1.0),
    dict(attn_no_op=True,  n_heads_in_group=None, ffn_no_op=False, ffn_mult=2.0),
    dict(attn_no_op=False, n_heads_in_group=2, ffn_no_op=True,  ffn_mult=None),
    dict(attn_no_op=False, n_heads_in_group=4, ffn_no_op=False, ffn_mult=1.5),
]
NUM_LAYERS = len(BLOCK_CONFIGS)


def _find_multiple(n: int, k: int) -> int:
    if n % k == 0:
        return n
    return n + k - n % k


def _ffn_mult_to_intermediate_size(ffn_mult: float, n_embd: int) -> int:
    intermediate_size = int(2 * ffn_mult * n_embd / 3)
    return _find_multiple(intermediate_size, 256)


# ----------------------------- weight-slab layout ----------------------------


def _pack_layout(block_configs, hidden, num_heads, head_dim):
    """Static column/row offsets of every weight inside the packed slabs."""
    assert num_heads * head_dim == hidden
    layers = []
    off_a = 0   # columns in slab A (rows = hidden)
    off_b = 0   # rows in slab B (cols = hidden)
    off_n = 0   # rows in the f32 norm slab
    for cfg in block_configs:
        entry = {}
        if not cfg["attn_no_op"]:
            nkv = num_heads // cfg["n_heads_in_group"]
            q_size = num_heads * head_dim
            kv_size = nkv * head_dim
            # [ wq | wk | wv | wq_rotated | wk_rotated ]  (rotate_half baked into weights)
            ext_dim = 2 * q_size + 3 * kv_size
            entry["attn"] = dict(nkv=nkv, group=num_heads // nkv,
                                 q_size=q_size, kv_size=kv_size, ext_dim=ext_dim,
                                 ln=off_n, wqkv=off_a, wo=off_a + ext_dim)
            off_n += 1
            off_a += ext_dim + hidden
        if not cfg["ffn_no_op"]:
            inter = _ffn_mult_to_intermediate_size(cfg["ffn_mult"], hidden)
            entry["ffn"] = dict(inter=inter, ln=off_n, w_gu=off_a, w_dn=off_b)
            off_n += 1
            off_a += 2 * inter
            off_b += inter
        layers.append(entry)
    return layers, off_a, off_b, off_n + 1     # +1 row = final norm


LAYOUT, A_COLS, B_ROWS, N_NORMS = _pack_layout(BLOCK_CONFIGS, HIDDEN, NUM_HEADS, HEAD_DIM)


# ----------------------------- fused Pallas kernel ----------------------------


def _deci_fused_kernel(ids_ref, embed_ref, rope_ref, norms_ref, wa_ref, wb_ref, out_ref,
                       *, layout, num_heads, head_dim, eps, final_norm_row):
    T, H = out_ref.shape
    hd = head_dim
    nq = num_heads
    q_size = nq * hd
    scale = hd ** -0.5

    # --- in-kernel embedding gather: ids are SMEM scalars, table is VMEM resident ---
    rows = [embed_ref[ids_ref[t]] for t in range(T)]                  # each (1, H) bf16
    hidden = jnp.concatenate(rows, axis=0).astype(jnp.float32)        # (T, H) f32

    # --- hoisted constants: lane-tiled RoPE tables and causal masks per group size ---
    cos_q = rope_ref[0]                                               # (T, q_size) f32
    sin_q = rope_ref[1]                                               # (T, q_size) f32
    row_i = jax.lax.broadcasted_iota(jnp.int32, (T, T), 0)
    col_i = jax.lax.broadcasted_iota(jnp.int32, (T, T), 1)
    mask1 = jnp.where(row_i >= col_i, 0.0, -1e30).astype(jnp.float32)  # (T, T) additive, f32
    masks = {}
    for entry in layout:
        if "attn" in entry:
            g = entry["attn"]["group"]
            if g not in masks:
                masks[g] = mask1 if g == 1 else jnp.concatenate([mask1] * g, axis=0)

    def rmsnorm(x, w):                                                 # x (T,H) f32, w (1,H) f32
        var = jnp.mean(x * x, axis=-1, keepdims=True)
        return x * jax.lax.rsqrt(var + eps) * w

    residual = None                                                    # compile-time first-layer flag

    for entry in layout:
        # ----------------------------- attention block ----------------------
        if "attn" in entry:
            a = entry["attn"]
            nkv, kv_size, group = a["nkv"], a["kv_size"], a["group"]
            ln_w = norms_ref[a["ln"]:a["ln"] + 1, :]                   # (1, H) f32
            wqkv = wa_ref[:, a["wqkv"]:a["wqkv"] + a["ext_dim"]]       # (H, ext)  bf16
            wo = wa_ref[:, a["wo"]:a["wo"] + H]                        # (q_size=H, H) bf16

            residual = hidden if residual is None else hidden + residual
            hn = rmsnorm(residual, ln_w).astype(jnp.bfloat16)          # (T, H)

            # Single fused QKV (+ pre-rotated QK) projection.
            qkv = jnp.dot(hn, wqkv, preferred_element_type=jnp.float32)   # (T, ext) f32
            c0 = 0
            q_raw = qkv[:, c0:c0 + q_size]; c0 += q_size
            k_raw = qkv[:, c0:c0 + kv_size]; c0 += kv_size
            v_flat = qkv[:, c0:c0 + kv_size]; c0 += kv_size
            q_rot = qkv[:, c0:c0 + q_size]; c0 += q_size
            k_rot = qkv[:, c0:c0 + kv_size]

            # RoPE = two FMAs (rotate_half / sign already folded into the weight slab).
            q_flat = q_raw * cos_q + q_rot * sin_q                     # (T, q_size)
            k_flat = k_raw * cos_q[:, :kv_size] + k_rot * sin_q[:, :kv_size]

            # GQA without KV replication: fold the group into the query rows.
            qh = jnp.transpose(q_flat.reshape(T, nq, hd), (1, 0, 2)
                               ).reshape(nkv, group * T, hd)           # (nkv, g*T, hd)
            kh = jnp.transpose(k_flat.reshape(T, nkv, hd), (1, 0, 2))  # (nkv, T, hd)
            vh = jnp.transpose(v_flat.reshape(T, nkv, hd), (1, 0, 2))  # (nkv, T, hd)

            s = jnp.einsum('nqd,nkd->nqk', qh, kh,
                           preferred_element_type=jnp.float32) * scale    # (nkv, g*T, T) f32
            s = s + masks[group][None]
            s = s - jnp.max(s, axis=-1, keepdims=True)
            p = jnp.exp(s)
            denom = jnp.sum(p, axis=-1, keepdims=True)
            if APPROX_SOFTMAX_RECIP:
                p = p * pl.reciprocal(denom, approx=True)              # EUP slot
            else:
                p = p / denom
            ctx = jnp.einsum('nqk,nkd->nqd', p, vh,
                             preferred_element_type=jnp.float32)       # (nkv, g*T, hd)

            # One lane-dense O-projection matmul (32-deep contraction).
            attn_flat = jnp.transpose(ctx.reshape(nq, T, hd), (1, 0, 2)).reshape(T, q_size)
            hidden = jnp.dot(attn_flat.astype(jnp.bfloat16), wo,
                             preferred_element_type=jnp.float32)       # (T, H) f32

        # ----------------------------- FFN block -----------------------------
        if "ffn" in entry:
            f = entry["ffn"]
            inter = f["inter"]
            ln_w = norms_ref[f["ln"]:f["ln"] + 1, :]                   # (1, H) f32
            w_gu = wa_ref[:, f["w_gu"]:f["w_gu"] + 2 * inter]          # (H, 2I) bf16
            w_dn = wb_ref[f["w_dn"]:f["w_dn"] + inter, :]              # (I, H)  bf16

            residual = hidden if residual is None else hidden + residual
            hn = rmsnorm(residual, ln_w).astype(jnp.bfloat16)

            gu = jnp.dot(hn, w_gu, preferred_element_type=jnp.float32)  # (T, 2I) f32
            gate = gu[:, :inter]
            up = gu[:, inter:]
            act = (gate * jax.nn.sigmoid(gate) * up).astype(jnp.bfloat16)   # SiLU*up in f32
            hidden = jnp.dot(act, w_dn, preferred_element_type=jnp.float32)

    # final norm: hidden, _ = norm(hidden, residual)
    final_w = norms_ref[final_norm_row:final_norm_row + 1, :]
    x = hidden if residual is None else hidden + residual
    out_ref[...] = rmsnorm(x, final_w).astype(out_ref.dtype)


# ----------------------------- parameter init --------------------------------


def _rope_fold(w, n_heads, head_dim):
    """Companion weight whose output is rotate_half (with sign) of the original output."""
    w3 = w.reshape(w.shape[0], n_heads, head_dim)
    half = head_dim // 2
    w3r = jnp.concatenate([-w3[..., half:], w3[..., :half]], axis=-1)
    return w3r.reshape(w.shape[0], n_heads * head_dim)


def init_params(key):
    """bf16 weights packed host-side into two slabs + one f32 norm slab + embed table."""
    key, k_emb = jax.random.split(key)
    embed = (jax.random.normal(k_emb, (VOCAB, HIDDEN), jnp.float32) * 0.02
             ).astype(jnp.bfloat16).reshape(VOCAB, 1, HIDDEN)          # (V,1,H) for row gather

    slab_a = jnp.zeros((HIDDEN, A_COLS), jnp.float32)   # wqkv_ext | wo | w_gu   (rows = H)
    slab_b = jnp.zeros((B_ROWS, HIDDEN), jnp.float32)   # w_dn stacked by rows
    norms = jnp.ones((N_NORMS, HIDDEN), jnp.float32)    # all RMSNorm weights (ones init)

    for entry in LAYOUT:
        if "attn" in entry:
            a = entry["attn"]
            q_size, kv_size = a["q_size"], a["kv_size"]
            key, k1, k2 = jax.random.split(key, 3)
            wqkv = jax.random.normal(k1, (HIDDEN, q_size + 2 * kv_size), jnp.float32) * 0.02
            wo = jax.random.normal(k2, (q_size, HIDDEN), jnp.float32) * 0.02
            wq = wqkv[:, :q_size]
            wk = wqkv[:, q_size:q_size + kv_size]
            wv = wqkv[:, q_size + kv_size:]
            ext = jnp.concatenate(
                [wq, wk, wv,
                 _rope_fold(wq, NUM_HEADS, HEAD_DIM),
                 _rope_fold(wk, a["nkv"], HEAD_DIM)], axis=1)
            slab_a = slab_a.at[:, a["wqkv"]:a["wqkv"] + a["ext_dim"]].set(ext)
            slab_a = slab_a.at[:, a["wo"]:a["wo"] + HIDDEN].set(wo)
        if "ffn" in entry:
            f = entry["ffn"]
            inter = f["inter"]
            key, k1, k2 = jax.random.split(key, 3)
            w_gu = jax.random.normal(k1, (HIDDEN, 2 * inter), jnp.float32) * 0.02
            w_dn = jax.random.normal(k2, (inter, HIDDEN), jnp.float32) * 0.02
            slab_a = slab_a.at[:, f["w_gu"]:f["w_gu"] + 2 * inter].set(w_gu)
            slab_b = slab_b.at[f["w_dn"]:f["w_dn"] + inter, :].set(w_dn)

    return dict(embed_tokens=embed, norms=norms,
                slab_a=slab_a.astype(jnp.bfloat16),
                slab_b=slab_b.astype(jnp.bfloat16))


# ----------------------------- model forward ---------------------------------


def deci_model_forward(params, input_ids, positions):
    T = int(input_ids.shape[0])

    # RoPE tables, full head_dim width, lane-tiled across all heads (neox style).
    inv_freq = 1.0 / (ROPE_THETA ** (
        jnp.arange(0, HEAD_DIM, 2, dtype=jnp.float32) / HEAD_DIM))
    freqs = positions.astype(jnp.float32)[:, None] * inv_freq[None, :]     # (T, hd/2)
    cos = jnp.cos(freqs)
    sin = jnp.sin(freqs)
    cos_full = jnp.concatenate([cos, cos], axis=-1)                         # (T, hd)
    sin_full = jnp.concatenate([sin, sin], axis=-1)
    rope_tab = jnp.stack([jnp.tile(cos_full, (1, NUM_HEADS)),
                          jnp.tile(sin_full, (1, NUM_HEADS))], axis=0)      # (2, T, q_size)

    kernel = functools.partial(
        _deci_fused_kernel, layout=LAYOUT, num_heads=NUM_HEADS,
        head_dim=HEAD_DIM, eps=RMS_EPS, final_norm_row=N_NORMS - 1)

    vmem = pl.BlockSpec(memory_space=pltpu.MemorySpace.VMEM)
    smem = pl.BlockSpec(memory_space=pltpu.MemorySpace.SMEM)
    # TODO(synk): with batched sequences, add a leading "parallel" grid axis (v7x 2 TCs) and a
    #             lane-dense (multiple-of-128) output slab.
    return pl.pallas_call(
        kernel,
        out_shape=jax.ShapeDtypeStruct((T, HIDDEN), jnp.bfloat16),
        in_specs=[smem, vmem, vmem, vmem, vmem, vmem],
        out_specs=vmem,
    )(input_ids, params["embed_tokens"], rope_tab, params["norms"],
      params["slab_a"], params["slab_b"])


# ----------------------------- main -------------------------------------------

if __name__ == "__main__":
    key = jax.random.PRNGKey(0)
    key, k_ids = jax.random.split(key)
    params = init_params(key)

    input_ids = jax.random.randint(k_ids, (SEQ,), 0, VOCAB, dtype=jnp.int32)
    positions = jnp.arange(SEQ, dtype=jnp.int32)

    fwd = jax.jit(deci_model_forward)
    out = jax.block_until_ready(fwd(params, input_ids, positions))

    assert out.shape == (SEQ, HIDDEN)
    assert jnp.all(jnp.isfinite(out.astype(jnp.float32)))
    print("KERNEL_OK")
</pallas_src>

<mosaic_0001>
module attributes {stable_mosaic.version = 11 : i64} {
  func.func @_deci_fused_kernel(%arg0: memref<8xi32, #tpu.memory_space<smem>>, %arg1: memref<128x1x32xbf16, #tpu.memory_space<vmem>>, %arg2: memref<2x8x32xf32, #tpu.memory_space<vmem>>, %arg3: memref<7x32xf32, #tpu.memory_space<vmem>>, %arg4: memref<32x1992xbf16, #tpu.memory_space<vmem>>, %arg5: memref<768x32xbf16, #tpu.memory_space<vmem>>, %arg6: memref<8x32xbf16, #tpu.memory_space<vmem>>) attributes {dimension_semantics = [], scalar_prefetch = 0 : i64, scratch_operands = 0 : i64, tpu.core_type = #tpu.core_type<tc>} {
    %c0 = arith.constant 0 : index
    %0 = memref.load %arg0[%c0] : memref<8xi32, #tpu.memory_space<smem>>
    %1 = arith.index_cast %0 : i32 to index
    %c0_0 = arith.constant 0 : index
    %c0_1 = arith.constant 0 : index
    %2 = vector.load %arg1[%1, %c0_0, %c0_1] : memref<128x1x32xbf16, #tpu.memory_space<vmem>>, vector<1x1x32xbf16>
    %3 = vector.shape_cast %2 : vector<1x1x32xbf16> to vector<1x32xbf16>
    %c1 = arith.constant 1 : index
    %4 = memref.load %arg0[%c1] : memref<8xi32, #tpu.memory_space<smem>>
    %5 = arith.index_cast %4 : i32 to index
    %c0_2 = arith.constant 0 : index
    %c0_3 = arith.constant 0 : index
    %6 = vector.load %arg1[%5, %c0_2, %c0_3] : memref<128x1x32xbf16, #tpu.memory_space<vmem>>, vector<1x1x32xbf16>
    %7 = vector.shape_cast %6 : vector<1x1x32xbf16> to vector<1x32xbf16>
    %c2 = arith.constant 2 : index
    %8 = memref.load %arg0[%c2] : memref<8xi32, #tpu.memory_space<smem>>
    %9 = arith.index_cast %8 : i32 to index
    %c0_4 = arith.constant 0 : index
    %c0_5 = arith.constant 0 : index
    %10 = vector.load %arg1[%9, %c0_4, %c0_5] : memref<128x1x32xbf16, #tpu.memory_space<vmem>>, vector<1x1x32xbf16>
    %11 = vector.shape_cast %10 : vector<1x1x32xbf16> to vector<1x32xbf16>
    %c3 = arith.constant 3 : index
    %12 = memref.load %arg0[%c3] : memref<8xi32, #tpu.memory_space<smem>>
    %13 = arith.index_cast %12 : i32 to index
    %c0_6 = arith.constant 0 : index
    %c0_7 = arith.constant 0 : index
    %14 = vector.load %arg1[%13, %c0_6, %c0_7] : memref<128x1x32xbf16, #tpu.memory_space<vmem>>, vector<1x1x32xbf16>
    %15 = vector.shape_cast %14 : vector<1x1x32xbf16> to vector<1x32xbf16>
    %c4 = arith.constant 4 : index
    %16 = memref.load %arg0[%c4] : memref<8xi32, #tpu.memory_space<smem>>
    %17 = arith.index_cast %16 : i32 to index
    %c0_8 = arith.constant 0 : index
    %c0_9 = arith.constant 0 : index
    %18 = vector.load %arg1[%17, %c0_8, %c0_9] : memref<128x1x32xbf16, #tpu.memory_space<vmem>>, vector<1x1x32xbf16>
    %19 = vector.shape_cast %18 : vector<1x1x32xbf16> to vector<1x32xbf16>
    %c5 = arith.constant 5 : index
    %20 = memref.load %arg0[%c5] : memref<8xi32, #tpu.memory_space<smem>>
    %21 = arith.index_cast %20 : i32 to index
    %c0_10 = arith.constant 0 : index
    %c0_11 = arith.constant 0 : index
    %22 = vector.load %arg1[%21, %c0_10, %c0_11] : memref<128x1x32xbf16, #tpu.memory_space<vmem>>, vector<1x1x32xbf16>
    %23 = vector.shape_cast %22 : vector<1x1x32xbf16> to vector<1x32xbf16>
    %c6 = arith.constant 6 : index
    %24 = memref.load %arg0[%c6] : memref<8xi32, #tpu.memory_space<smem>>
    %25 = arith.index_cast %24 : i32 to index
    %c0_12 = arith.constant 0 : index
    %c0_13 = arith.constant 0 : index
    %26 = vector.load %arg1[%25, %c0_12, %c0_13] : memref<128x1x32xbf16, #tpu.memory_space<vmem>>, vector<1x1x32xbf16>
    %27 = vector.shape_cast %26 : vector<1x1x32xbf16> to vector<1x32xbf16>
    %c7 = arith.constant 7 : index
    %28 = memref.load %arg0[%c7] : memref<8xi32, #tpu.memory_space<smem>>
    %29 = arith.index_cast %28 : i32 to index
    %c0_14 = arith.constant 0 : index
    %c0_15 = arith.constant 0 : index
    %30 = vector.load %arg1[%29, %c0_14, %c0_15] : memref<128x1x32xbf16, #tpu.memory_space<vmem>>, vector<1x1x32xbf16>
    %31 = vector.shape_cast %30 : vector<1x1x32xbf16> to vector<1x32xbf16>
    %32 = tpu.concatenate %3, %7, %11, %15, %19, %23, %27, %31 in 0 : vector<1x32xbf16>, vector<1x32xbf16>, vector<1x32xbf16>, vector<1x32xbf16>, vector<1x32xbf16>, vector<1x32xbf16>, vector<1x32xbf16>, vector<1x32xbf16> -> vector<8x32xbf16>
    %33 = arith.extf %32 : vector<8x32xbf16> to vector<8x32xf32>
    %c0_16 = arith.constant 0 : index
    %c0_17 = arith.constant 0 : index
    %c0_18 = arith.constant 0 : index
    %34 = vector.load %arg2[%c0_16, %c0_17, %c0_18] : memref<2x8x32xf32, #tpu.memory_space<vmem>>, vector<1x8x32xf32>
    %35 = vector.shape_cast %34 : vector<1x8x32xf32> to vector<8x32xf32>
    %c1_19 = arith.constant 1 : index
    %c0_20 = arith.constant 0 : index
    %c0_21 = arith.constant 0 : index
    %36 = vector.load %arg2[%c1_19, %c0_20, %c0_21] : memref<2x8x32xf32, #tpu.memory_space<vmem>>, vector<1x8x32xf32>
    %37 = vector.shape_cast %36 : vector<1x8x32xf32> to vector<8x32xf32>
    %38 = tpu.iota {dimensions = array<i32: 0>} : vector<8x8xi32>
    %39 = tpu.iota {dimensions = array<i32: 1>} : vector<8x8xi32>
    %40 = arith.cmpi sge, %38, %39 : vector<8x8xi32>
    %cst = arith.constant 0.000000e+00 : f32
    %cst_22 = arith.constant -1.000000e+30 : f32
    %41 = vector.broadcast %cst : f32 to vector<8x8xf32>
    %42 = vector.broadcast %cst_22 : f32 to vector<8x8xf32>
    %43 = arith.select %40, %41, %42 : vector<8x8xi1>, vector<8x8xf32>
    %44 = tpu.concatenate %43, %43 in 0 : vector<8x8xf32>, vector<8x8xf32> -> vector<16x8xf32>
    %45 = tpu.concatenate %43, %43, %43, %43 in 0 : vector<8x8xf32>, vector<8x8xf32>, vector<8x8xf32>, vector<8x8xf32> -> vector<32x8xf32>
    %c0_23 = arith.constant 0 : index
    %c0_24 = arith.constant 0 : index
    %46 = vector.load %arg3[%c0_23, %c0_24] : memref<7x32xf32, #tpu.memory_space<vmem>>, vector<1x32xf32>
    %c0_25 = arith.constant 0 : index
    %c0_26 = arith.constant 0 : index
    %47 = vector.load %arg4[%c0_25, %c0_26] : memref<32x1992xbf16, #tpu.memory_space<vmem>>, vector<32x160xbf16>
    %c0_27 = arith.constant 0 : index
    %c160 = arith.constant 160 : index
    %48 = vector.load %arg4[%c0_27, %c160] : memref<32x1992xbf16, #tpu.memory_space<vmem>>, vector<32x32xbf16>
    %49 = arith.mulf %33, %33 : vector<8x32xf32>
    %cst_28 = arith.constant dense<0.000000e+00> : vector<8xf32>
    %50 = vector.multi_reduction <add>, %49, %cst_28 [1] : vector<8x32xf32> to vector<8xf32>
    %51 = vector.shape_cast %50 : vector<8xf32> to vector<8x1xf32>
    %cst_29 = arith.constant 3.200000e+01 : f32
    %52 = vector.broadcast %cst_29 : f32 to vector<8x1xf32>
    %53 = arith.divf %51, %52 : vector<8x1xf32>
    %cst_30 = arith.constant 9.99999997E-7 : f32
    %54 = vector.broadcast %cst_30 : f32 to vector<8x1xf32>
    %55 = arith.addf %53, %54 : vector<8x1xf32>
    %56 = math.rsqrt %55 : vector<8x1xf32>
    %57 = vector.broadcast %56 : vector<8x1xf32> to vector<8x32xf32>
    %58 = arith.mulf %33, %57 : vector<8x32xf32>
    %59 = vector.broadcast %46 : vector<1x32xf32> to vector<8x32xf32>
    %60 = arith.mulf %58, %59 : vector<8x32xf32>
    %61 = arith.truncf %60 : vector<8x32xf32> to vector<8x32xbf16>
    %cst_31 = arith.constant dense<0.000000e+00> : vector<8x160xf32>
    %62 = tpu.matmul %61, %47, %cst_31 {dimension_numbers = #tpu.dot_dimension_numbers<[1], [0], [0], [1], [0, 0, 1, 1], [], []>} : vector<8x32xbf16>, vector<32x160xbf16>, vector<8x160xf32> -> vector<8x160xf32>
    %63 = vector.extract_strided_slice %62 {offsets = [0, 0], sizes = [8, 32], strides = [1, 1]} : vector<8x160xf32> to vector<8x32xf32>
    %64 = vector.extract_strided_slice %62 {offsets = [0, 32], sizes = [8, 32], strides = [1, 1]} : vector<8x160xf32> to vector<8x32xf32>
    %65 = vector.extract_strided_slice %62 {offsets = [0, 64], sizes = [8, 32], strides = [1, 1]} : vector<8x160xf32> to vector<8x32xf32>
    %66 = vector.extract_strided_slice %62 {offsets = [0, 96], sizes = [8, 32], strides = [1, 1]} : vector<8x160xf32> to vector<8x32xf32>
    %67 = vector.extract_strided_slice %62 {offsets = [0, 128], sizes = [8, 32], strides = [1, 1]} : vector<8x160xf32> to vector<8x32xf32>
    %68 = arith.mulf %63, %35 : vector<8x32xf32>
    %69 = arith.mulf %66, %37 : vector<8x32xf32>
    %70 = arith.addf %68, %69 : vector<8x32xf32>
    %71 = arith.mulf %64, %35 : vector<8x32xf32>
    %72 = arith.mulf %67, %37 : vector<8x32xf32>
    %73 = arith.addf %71, %72 : vector<8x32xf32>
    %74 = vector.shape_cast %70 : vector<8x32xf32> to vector<8x4x8xf32>
    %75 = tpu.transpose %74, [1, 0, 2] : vector<8x4x8xf32> -> vector<4x8x8xf32>
    %76 = vector.shape_cast %73 : vector<8x32xf32> to vector<8x4x8xf32>
    %77 = tpu.transpose %76, [1, 0, 2] : vector<8x4x8xf32> -> vector<4x8x8xf32>
    %78 = vector.shape_cast %65 : vector<8x32xf32> to vector<8x4x8xf32>
    %79 = tpu.transpose %78, [1, 0, 2] : vector<8x4x8xf32> -> vector<4x8x8xf32>
    "tpu.trace_start"() <{level = 10 : i32, message = "nqd,nkd->nqk"}> : () -> ()
    %cst_32 = arith.constant dense<0.000000e+00> : vector<4x8x8xf32>
    %80 = tpu.matmul %75, %77, %cst_32 {dimension_numbers = #tpu.dot_dimension_numbers<[2], [2], [1], [1], [0, 0, 0, 1, 1, 1], [0], [0]>} : vector<4x8x8xf32>, vector<4x8x8xf32>, vector<4x8x8xf32> -> vector<4x8x8xf32>
    "tpu.trace_stop"() : () -> ()
    %cst_33 = arith.constant 0.353553385 : f32
    %81 = vector.broadcast %cst_33 : f32 to vector<4x8x8xf32>
    %82 = arith.mulf %80, %81 : vector<4x8x8xf32>
    %83 = vector.shape_cast %43 : vector<8x8xf32> to vector<1x8x8xf32>
    %84 = vector.broadcast %83 : vector<1x8x8xf32> to vector<4x8x8xf32>
    %85 = arith.addf %82, %84 : vector<4x8x8xf32>
    %cst_34 = arith.constant dense<0xFF800000> : vector<4x8xf32>
    %86 = vector.multi_reduction <maximumf>, %85, %cst_34 [2] : vector<4x8x8xf32> to vector<4x8xf32>
    %87 = vector.shape_cast %86 : vector<4x8xf32> to vector<4x8x1xf32>
    %88 = vector.broadcast %87 : vector<4x8x1xf32> to vector<4x8x8xf32>
    %89 = arith.subf %85, %88 : vector<4x8x8xf32>
    %90 = math.exp %89 : vector<4x8x8xf32>
    %cst_35 = arith.constant dense<0.000000e+00> : vector<4x8xf32>
    %91 = vector.multi_reduction <add>, %90, %cst_35 [2] : vector<4x8x8xf32> to vector<4x8xf32>
    %92 = vector.shape_cast %91 : vector<4x8xf32> to vector<4x8x1xf32>
    %93 = tpu.reciprocal %92 {approx = true} : vector<4x8x1xf32> -> vector<4x8x1xf32>
    %94 = vector.broadcast %93 : vector<4x8x1xf32> to vector<4x8x8xf32>
    %95 = arith.mulf %90, %94 : vector<4x8x8xf32>
    "tpu.trace_start"() <{level = 10 : i32, message = "nqk,nkd->nqd"}> : () -> ()
    %cst_36 = arith.constant dense<0.000000e+00> : vector<4x8x8xf32>
    %96 = tpu.matmul %95, %79, %cst_36 {dimension_numbers = #tpu.dot_dimension_numbers<[2], [1], [1], [2], [0, 0, 0, 1, 1, 2], [0], [0]>} : vector<4x8x8xf32>, vector<4x8x8xf32>, vector<4x8x8xf32> -> vector<4x8x8xf32>
    "tpu.trace_stop"() : () -> ()
    %97 = tpu.transpose %96, [1, 0, 2] : vector<4x8x8xf32> -> vector<8x4x8xf32>
    %98 = vector.shape_cast %97 : vector<8x4x8xf32> to vector<8x32xf32>
    %99 = arith.truncf %98 : vector<8x32xf32> to vector<8x32xbf16>
    %cst_37 = arith.constant dense<0.000000e+00> : vector<8x32xf32>
    %100 = tpu.matmul %99, %48, %cst_37 {dimension_numbers = #tpu.dot_dimension_numbers<[1], [0], [0], [1], [0, 0, 1, 1], [], []>} : vector<8x32xbf16>, vector<32x32xbf16>, vector<8x32xf32> -> vector<8x32xf32>
    %c1_38 = arith.constant 1 : index
    %c0_39 = arith.constant 0 : index
    %101 = vector.load %arg3[%c1_38, %c0_39] : memref<7x32xf32, #tpu.memory_space<vmem>>, vector<1x32xf32>
    %c0_40 = arith.constant 0 : index
    %c192 = arith.constant 192 : index
    %102 = vector.load %arg4[%c0_40, %c192] : memref<32x1992xbf16, #tpu.memory_space<vmem>>, vector<32x512xbf16>
    %c0_41 = arith.constant 0 : index
    %c0_42 = arith.constant 0 : index
    %103 = vector.load %arg5[%c0_41, %c0_42] : memref<768x32xbf16, #tpu.memory_space<vmem>>, vector<256x32xbf16>
    %104 = arith.addf %100, %33 : vector<8x32xf32>
    %105 = arith.mulf %104, %104 : vector<8x32xf32>
    %cst_43 = arith.constant dense<0.000000e+00> : vector<8xf32>
    %106 = vector.multi_reduction <add>, %105, %cst_43 [1] : vector<8x32xf32> to vector<8xf32>
    %107 = vector.shape_cast %106 : vector<8xf32> to vector<8x1xf32>
    %cst_44 = arith.constant 3.200000e+01 : f32
    %108 = vector.broadcast %cst_44 : f32 to vector<8x1xf32>
    %109 = arith.divf %107, %108 : vector<8x1xf32>
    %cst_45 = arith.constant 9.99999997E-7 : f32
    %110 = vector.broadcast %cst_45 : f32 to vector<8x1xf32>
    %111 = arith.addf %109, %110 : vector<8x1xf32>
    %112 = math.rsqrt %111 : vector<8x1xf32>
    %113 = vector.broadcast %112 : vector<8x1xf32> to vector<8x32xf32>
    %114 = arith.mulf %104, %113 : vector<8x32xf32>
    %115 = vector.broadcast %101 : vector<1x32xf32> to vector<8x32xf32>
    %116 = arith.mulf %114, %115 : vector<8x32xf32>
    %117 = arith.truncf %116 : vector<8x32xf32> to vector<8x32xbf16>
    %cst_46 = arith.constant dense<0.000000e+00> : vector<8x512xf32>
    %118 = tpu.matmul %117, %102, %cst_46 {dimension_numbers = #tpu.dot_dimension_numbers<[1], [0], [0], [1], [0, 0, 1, 1], [], []>} : vector<8x32xbf16>, vector<32x512xbf16>, vector<8x512xf32> -> vector<8x512xf32>
    %119 = vector.extract_strided_slice %118 {offsets = [0, 0], sizes = [8, 256], strides = [1, 1]} : vector<8x512xf32> to vector<8x256xf32>
    %120 = vector.extract_strided_slice %118 {offsets = [0, 256], sizes = [8, 256], strides = [1, 1]} : vector<8x512xf32> to vector<8x256xf32>
    %121 = arith.negf %119 : vector<8x256xf32>
    %122 = math.exp %121 : vector<8x256xf32>
    %cst_47 = arith.constant 1.000000e+00 : f32
    %123 = vector.broadcast %cst_47 : f32 to vector<8x256xf32>
    %124 = arith.addf %123, %122 : vector<8x256xf32>
    %125 = arith.divf %123, %124 : vector<8x256xf32>
    %126 = arith.mulf %119, %125 : vector<8x256xf32>
    %127 = arith.mulf %126, %120 : vector<8x256xf32>
    %128 = arith.truncf %127 : vector<8x256xf32> to vector<8x256xbf16>
    %cst_48 = arith.constant dense<0.000000e+00> : vector<8x32xf32>
    %129 = tpu.matmul %128, %103, %cst_48 {dimension_numbers = #tpu.dot_dimension_numbers<[1], [0], [0], [1], [0, 0, 1, 1], [], []>} : vector<8x256xbf16>, vector<256x32xbf16>, vector<8x32xf32> -> vector<8x32xf32>
    %c2_49 = arith.constant 2 : index
    %c0_50 = arith.constant 0 : index
    %130 = vector.load %arg3[%c2_49, %c0_50] : memref<7x32xf32, #tpu.memory_space<vmem>>, vector<1x32xf32>
    %c0_51 = arith.constant 0 : index
    %c704 = arith.constant 704 : index
    %131 = vector.load %arg4[%c0_51, %c704] : memref<32x1992xbf16, #tpu.memory_space<vmem>>, vector<32x512xbf16>
    %c256 = arith.constant 256 : index
    %c0_52 = arith.constant 0 : index
    %132 = vector.load %arg5[%c256, %c0_52] : memref<768x32xbf16, #tpu.memory_space<vmem>>, vector<256x32xbf16>
    %133 = arith.addf %129, %104 : vector<8x32xf32>
    %134 = arith.mulf %133, %133 : vector<8x32xf32>
    %cst_53 = arith.constant dense<0.000000e+00> : vector<8xf32>
    %135 = vector.multi_reduction <add>, %134, %cst_53 [1] : vector<8x32xf32> to vector<8xf32>
    %136 = vector.shape_cast %135 : vector<8xf32> to vector<8x1xf32>
    %cst_54 = arith.constant 3.200000e+01 : f32
    %137 = vector.broadcast %cst_54 : f32 to vector<8x1xf32>
    %138 = arith.divf %136, %137 : vector<8x1xf32>
    %cst_55 = arith.constant 9.99999997E-7 : f32
    %139 = vector.broadcast %cst_55 : f32 to vector<8x1xf32>
    %140 = arith.addf %138, %139 : vector<8x1xf32>
    %141 = math.rsqrt %140 : vector<8x1xf32>
    %142 = vector.broadcast %141 : vector<8x1xf32> to vector<8x32xf32>
    %143 = arith.mulf %133, %142 : vector<8x32xf32>
    %144 = vector.broadcast %130 : vector<1x32xf32> to vector<8x32xf32>
    %145 = arith.mulf %143, %144 : vector<8x32xf32>
    %146 = arith.truncf %145 : vector<8x32xf32> to vector<8x32xbf16>
    %cst_56 = arith.constant dense<0.000000e+00> : vector<8x512xf32>
    %147 = tpu.matmul %146, %131, %cst_56 {dimension_numbers = #tpu.dot_dimension_numbers<[1], [0], [0], [1], [0, 0, 1, 1], [], []>} : vector<8x32xbf16>, vector<32x512xbf16>, vector<8x512xf32> -> vector<8x512xf32>
    %148 = vector.extract_strided_slice %147 {offsets = [0, 0], sizes = [8, 256], strides = [1, 1]} : vector<8x512xf32> to vector<8x256xf32>
    %149 = vector.extract_strided_slice %147 {offsets = [0, 256], sizes = [8, 256], strides = [1, 1]} : vector<8x512xf32> to vector<8x256xf32>
    %150 = arith.negf %148 : vector<8x256xf32>
    %151 = math.exp %150 : vector<8x256xf32>
    %cst_57 = arith.constant 1.000000e+00 : f32
    %152 = vector.broadcast %cst_57 : f32 to vector<8x256xf32>
    %153 = arith.addf %152, %151 : vector<8x256xf32>
    %154 = arith.divf %152, %153 : vector<8x256xf32>
    %155 = arith.mulf %148, %154 : vector<8x256xf32>
    %156 = arith.mulf %155, %149 : vector<8x256xf32>
    %157 = arith.truncf %156 : vector<8x256xf32> to vector<8x256xbf16>
    %cst_58 = arith.constant dense<0.000000e+00> : vector<8x32xf32>
    %158 = tpu.matmul %157, %132, %cst_58 {dimension_numbers = #tpu.dot_dimension_numbers<[1], [0], [0], [1], [0, 0, 1, 1], [], []>} : vector<8x256xbf16>, vector<256x32xbf16>, vector<8x32xf32> -> vector<8x32xf32>
    %c3_59 = arith.constant 3 : index
    %c0_60 = arith.constant 0 : index
    %159 = vector.load %arg3[%c3_59, %c0_60] : memref<7x32xf32, #tpu.memory_space<vmem>>, vector<1x32xf32>
    %c0_61 = arith.constant 0 : index
    %c1216 = arith.constant 1216 : index
    %160 = vector.load %arg4[%c0_61, %c1216] : memref<32x1992xbf16, #tpu.memory_space<vmem>>, vector<32x112xbf16>
    %c0_62 = arith.constant 0 : index
    %c1328 = arith.constant 1328 : index
    %161 = vector.load %arg4[%c0_62, %c1328] : memref<32x1992xbf16, #tpu.memory_space<vmem>>, vector<32x32xbf16>
    %162 = arith.addf %158, %133 : vector<8x32xf32>
    %163 = arith.mulf %162, %162 : vector<8x32xf32>
    %cst_63 = arith.constant dense<0.000000e+00> : vector<8xf32>
    %164 = vector.multi_reduction <add>, %163, %cst_63 [1] : vector<8x32xf32> to vector<8xf32>
    %165 = vector.shape_cast %164 : vector<8xf32> to vector<8x1xf32>
    %cst_64 = arith.constant 3.200000e+01 : f32
    %166 = vector.broadcast %cst_64 : f32 to vector<8x1xf32>
    %167 = arith.divf %165, %166 : vector<8x1xf32>
    %cst_65 = arith.constant 9.99999997E-7 : f32
    %168 = vector.broadcast %cst_65 : f32 to vector<8x1xf32>
    %169 = arith.addf %167, %168 : vector<8x1xf32>
    %170 = math.rsqrt %169 : vector<8x1xf32>
    %171 = vector.broadcast %170 : vector<8x1xf32> to vector<8x32xf32>
    %172 = arith.mulf %162, %171 : vector<8x32xf32>
    %173 = vector.broadcast %159 : vector<1x32xf32> to vector<8x32xf32>
    %174 = arith.mulf %172, %173 : vector<8x32xf32>
    %175 = arith.truncf %174 : vector<8x32xf32> to vector<8x32xbf16>
    %cst_66 = arith.constant dense<0.000000e+00> : vector<8x112xf32>
    %176 = tpu.matmul %175, %160, %cst_66 {dimension_numbers = #tpu.dot_dimension_numbers<[1], [0], [0], [1], [0, 0, 1, 1], [], []>} : vector<8x32xbf16>, vector<32x112xbf16>, vector<8x112xf32> -> vector<8x112xf32>
    %177 = vector.extract_strided_slice %176 {offsets = [0, 0], sizes = [8, 32], strides = [1, 1]} : vector<8x112xf32> to vector<8x32xf32>
    %178 = vector.extract_strided_slice %176 {offsets = [0, 32], sizes = [8, 16], strides = [1, 1]} : vector<8x112xf32> to vector<8x16xf32>
    %179 = vector.extract_strided_slice %176 {offsets = [0, 48], sizes = [8, 16], strides = [1, 1]} : vector<8x112xf32> to vector<8x16xf32>
    %180 = vector.extract_strided_slice %176 {offsets = [0, 64], sizes = [8, 32], strides = [1, 1]} : vector<8x112xf32> to vector<8x32xf32>
    %181 = vector.extract_strided_slice %176 {offsets = [0, 96], sizes = [8, 16], strides = [1, 1]} : vector<8x112xf32> to vector<8x16xf32>
    %182 = arith.mulf %177, %35 : vector<8x32xf32>
    %183 = arith.mulf %180, %37 : vector<8x32xf32>
    %184 = arith.addf %182, %183 : vector<8x32xf32>
    %185 = vector.extract_strided_slice %35 {offsets = [0, 0], sizes = [8, 16], strides = [1, 1]} : vector<8x32xf32> to vector<8x16xf32>
    %186 = arith.mulf %178, %185 : vector<8x16xf32>
    %187 = vector.extract_strided_slice %37 {offsets = [0, 0], sizes = [8, 16], strides = [1, 1]} : vector<8x32xf32> to vector<8x16xf32>
    %188 = arith.mulf %181, %187 : vector<8x16xf32>
    %189 = arith.addf %186, %188 : vector<8x16xf32>
    %190 = vector.shape_cast %184 : vector<8x32xf32> to vector<8x4x8xf32>
    %191 = tpu.transpose %190, [1, 0, 2] : vector<8x4x8xf32> -> vector<4x8x8xf32>
    %192 = vector.shape_cast %191 : vector<4x8x8xf32> to vector<2x16x8xf32>
    %193 = vector.shape_cast %189 : vector<8x16xf32> to vector<8x2x8xf32>
    %194 = tpu.transpose %193, [1, 0, 2] : vector<8x2x8xf32> -> vector<2x8x8xf32>
    %195 = vector.shape_cast %179 : vector<8x16xf32> to vector<8x2x8xf32>
    %196 = tpu.transpose %195, [1, 0, 2] : vector<8x2x8xf32> -> vector<2x8x8xf32>
    "tpu.trace_start"() <{level = 10 : i32, message = "nqd,nkd->nqk"}> : () -> ()
    %cst_67 = arith.constant dense<0.000000e+00> : vector<2x16x8xf32>
    %197 = tpu.matmul %192, %194, %cst_67 {dimension_numbers = #tpu.dot_dimension_numbers<[2], [2], [1], [1], [0, 0, 0, 1, 1, 1], [0], [0]>} : vector<2x16x8xf32>, vector<2x8x8xf32>, vector<2x16x8xf32> -> vector<2x16x8xf32>
    "tpu.trace_stop"() : () -> ()
    %cst_68 = arith.constant 0.353553385 : f32
    %198 = vector.broadcast %cst_68 : f32 to vector<2x16x8xf32>
    %199 = arith.mulf %197, %198 : vector<2x16x8xf32>
    %200 = vector.shape_cast %44 : vector<16x8xf32> to vector<1x16x8xf32>
    %201 = vector.broadcast %200 : vector<1x16x8xf32> to vector<2x16x8xf32>
    %202 = arith.addf %199, %201 : vector<2x16x8xf32>
    %cst_69 = arith.constant dense<0xFF800000> : vector<2x16xf32>
    %203 = vector.multi_reduction <maximumf>, %202, %cst_69 [2] : vector<2x16x8xf32> to vector<2x16xf32>
    %204 = vector.shape_cast %203 : vector<2x16xf32> to vector<2x16x1xf32>
    %205 = vector.broadcast %204 : vector<2x16x1xf32> to vector<2x16x8xf32>
    %206 = arith.subf %202, %205 : vector<2x16x8xf32>
    %207 = math.exp %206 : vector<2x16x8xf32>
    %cst_70 = arith.constant dense<0.000000e+00> : vector<2x16xf32>
    %208 = vector.multi_reduction <add>, %207, %cst_70 [2] : vector<2x16x8xf32> to vector<2x16xf32>
    %209 = vector.shape_cast %208 : vector<2x16xf32> to vector<2x16x1xf32>
    %210 = tpu.reciprocal %209 {approx = true} : vector<2x16x1xf32> -> vector<2x16x1xf32>
    %211 = vector.broadcast %210 : vector<2x16x1xf32> to vector<2x16x8xf32>
    %212 = arith.mulf %207, %211 : vector<2x16x8xf32>
    "tpu.trace_start"() <{level = 10 : i32, message = "nqk,nkd->nqd"}> : () -> ()
    %cst_71 = arith.constant dense<0.000000e+00> : vector<2x16x8xf32>
    %213 = tpu.matmul %212, %196, %cst_71 {dimension_numbers = #tpu.dot_dimension_numbers<[2], [1], [1], [2], [0, 0, 0, 1, 1, 2], [0], [0]>} : vector<2x16x8xf32>, vector<2x8x8xf32>, vector<2x16x8xf32> -> vector<2x16x8xf32>
    "tpu.trace_stop"() : () -> ()
    %214 = vector.shape_cast %213 : vector<2x16x8xf32> to vector<4x8x8xf32>
    %215 = tpu.transpose %214, [1, 0, 2] : vector<4x8x8xf32> -> vector<8x4x8xf32>
    %216 = vector.shape_cast %215 : vector<8x4x8xf32> to vector<8x32xf32>
    %217 = arith.truncf %216 : vector<8x32xf32> to vector<8x32xbf16>
    %cst_72 = arith.constant dense<0.000000e+00> : vector<8x32xf32>
    %218 = tpu.matmul %217, %161, %cst_72 {dimension_numbers = #tpu.dot_dimension_numbers<[1], [0], [0], [1], [0, 0, 1, 1], [], []>} : vector<8x32xbf16>, vector<32x32xbf16>, vector<8x32xf32> -> vector<8x32xf32>
    %c4_73 = arith.constant 4 : index
    %c0_74 = arith.constant 0 : index
    %219 = vector.load %arg3[%c4_73, %c0_74] : memref<7x32xf32, #tpu.memory_space<vmem>>, vector<1x32xf32>
    %c0_75 = arith.constant 0 : index
    %c1360 = arith.constant 1360 : index
    %220 = vector.load %arg4[%c0_75, %c1360] : memref<32x1992xbf16, #tpu.memory_space<vmem>>, vector<32x88xbf16>
    %c0_76 = arith.constant 0 : index
    %c1448 = arith.constant 1448 : index
    %221 = vector.load %arg4[%c0_76, %c1448] : memref<32x1992xbf16, #tpu.memory_space<vmem>>, vector<32x32xbf16>
    %222 = arith.addf %218, %162 : vector<8x32xf32>
    %223 = arith.mulf %222, %222 : vector<8x32xf32>
    %cst_77 = arith.constant dense<0.000000e+00> : vector<8xf32>
    %224 = vector.multi_reduction <add>, %223, %cst_77 [1] : vector<8x32xf32> to vector<8xf32>
    %225 = vector.shape_cast %224 : vector<8xf32> to vector<8x1xf32>
    %cst_78 = arith.constant 3.200000e+01 : f32
    %226 = vector.broadcast %cst_78 : f32 to vector<8x1xf32>
    %227 = arith.divf %225, %226 : vector<8x1xf32>
    %cst_79 = arith.constant 9.99999997E-7 : f32
    %228 = vector.broadcast %cst_79 : f32 to vector<8x1xf32>
    %229 = arith.addf %227, %228 : vector<8x1xf32>
    %230 = math.rsqrt %229 : vector<8x1xf32>
    %231 = vector.broadcast %230 : vector<8x1xf32> to vector<8x32xf32>
    %232 = arith.mulf %222, %231 : vector<8x32xf32>
    %233 = vector.broadcast %219 : vector<1x32xf32> to vector<8x32xf32>
    %234 = arith.mulf %232, %233 : vector<8x32xf32>
    %235 = arith.truncf %234 : vector<8x32xf32> to vector<8x32xbf16>
    %cst_80 = arith.constant dense<0.000000e+00> : vector<8x88xf32>
    %236 = tpu.matmul %235, %220, %cst_80 {dimension_numbers = #tpu.dot_dimension_numbers<[1], [0], [0], [1], [0, 0, 1, 1], [], []>} : vector<8x32xbf16>, vector<32x88xbf16>, vector<8x88xf32> -> vector<8x88xf32>
    %237 = vector.extract_strided_slice %236 {offsets = [0, 0], sizes = [8, 32], strides = [1, 1]} : vector<8x88xf32> to vector<8x32xf32>
    %238 = vector.extract_strided_slice %236 {offsets = [0, 32], sizes = [8, 8], strides = [1, 1]} : vector<8x88xf32> to vector<8x8xf32>
    %239 = vector.extract_strided_slice %236 {offsets = [0, 40], sizes = [8, 8], strides = [1, 1]} : vector<8x88xf32> to vector<8x8xf32>
    %240 = vector.extract_strided_slice %236 {offsets = [0, 48], sizes = [8, 32], strides = [1, 1]} : vector<8x88xf32> to vector<8x32xf32>
    %241 = vector.extract_strided_slice %236 {offsets = [0, 80], sizes = [8, 8], strides = [1, 1]} : vector<8x88xf32> to vector<8x8xf32>
    %242 = arith.mulf %237, %35 : vector<8x32xf32>
    %243 = arith.mulf %240, %37 : vector<8x32xf32>
    %244 = arith.addf %242, %243 : vector<8x32xf32>
    %245 = vector.extract_strided_slice %35 {offsets = [0, 0], sizes = [8, 8], strides = [1, 1]} : vector<8x32xf32> to vector<8x8xf32>
    %246 = arith.mulf %238, %245 : vector<8x8xf32>
    %247 = vector.extract_strided_slice %37 {offsets = [0, 0], sizes = [8, 8], strides = [1, 1]} : vector<8x32xf32> to vector<8x8xf32>
    %248 = arith.mulf %241, %247 : vector<8x8xf32>
    %249 = arith.addf %246, %248 : vector<8x8xf32>
    %250 = vector.shape_cast %244 : vector<8x32xf32> to vector<8x4x8xf32>
    %251 = tpu.transpose %250, [1, 0, 2] : vector<8x4x8xf32> -> vector<4x8x8xf32>
    %252 = vector.shape_cast %251 : vector<4x8x8xf32> to vector<1x32x8xf32>
    %253 = vector.shape_cast %249 : vector<8x8xf32> to vector<8x1x8xf32>
    %254 = tpu.transpose %253, [1, 0, 2] : vector<8x1x8xf32> -> vector<1x8x8xf32>
    %255 = vector.shape_cast %239 : vector<8x8xf32> to vector<8x1x8xf32>
    %256 = tpu.transpose %255, [1, 0, 2] : vector<8x1x8xf32> -> vector<1x8x8xf32>
    "tpu.trace_start"() <{level = 10 : i32, message = "nqd,nkd->nqk"}> : () -> ()
    %cst_81 = arith.constant dense<0.000000e+00> : vector<1x32x8xf32>
    %257 = tpu.matmul %252, %254, %cst_81 {dimension_numbers = #tpu.dot_dimension_numbers<[2], [2], [1], [1], [0, 0, 0, 1, 1, 1], [0], [0]>} : vector<1x32x8xf32>, vector<1x8x8xf32>, vector<1x32x8xf32> -> vector<1x32x8xf32>
    "tpu.trace_stop"() : () -> ()
    %cst_82 = arith.constant 0.353553385 : f32
    %258 = vector.broadcast %cst_82 : f32 to vector<1x32x8xf32>
    %259 = arith.mulf %257, %258 : vector<1x32x8xf32>
    %260 = vector.shape_cast %45 : vector<32x8xf32> to vector<1x32x8xf32>
    %261 = arith.addf %259, %260 : vector<1x32x8xf32>
    %cst_83 = arith.constant dense<0xFF800000> : vector<1x32xf32>
    %262 = vector.multi_reduction <maximumf>, %261, %cst_83 [2] : vector<1x32x8xf32> to vector<1x32xf32>
    %263 = vector.shape_cast %262 : vector<1x32xf32> to vector<1x32x1xf32>
    %264 = vector.broadcast %263 : vector<1x32x1xf32> to vector<1x32x8xf32>
    %265 = arith.subf %261, %264 : vector<1x32x8xf32>
    %266 = math.exp %265 : vector<1x32x8xf32>
    %cst_84 = arith.constant dense<0.000000e+00> : vector<1x32xf32>
    %267 = vector.multi_reduction <add>, %266, %cst_84 [2] : vector<1x32x8xf32> to vector<1x32xf32>
    %268 = vector.shape_cast %267 : vector<1x32xf32> to vector<1x32x1xf32>
    %269 = tpu.reciprocal %268 {approx = true} : vector<1x32x1xf32> -> vector<1x32x1xf32>
    %270 = vector.broadcast %269 : vector<1x32x1xf32> to vector<1x32x8xf32>
    %271 = arith.mulf %266, %270 : vector<1x32x8xf32>
    "tpu.trace_start"() <{level = 10 : i32, message = "nqk,nkd->nqd"}> : () -> ()
    %cst_85 = arith.constant dense<0.000000e+00> : vector<1x32x8xf32>
    %272 = tpu.matmul %271, %256, %cst_85 {dimension_numbers = #tpu.dot_dimension_numbers<[2], [1], [1], [2], [0, 0, 0, 1, 1, 2], [0], [0]>} : vector<1x32x8xf32>, vector<1x8x8xf32>, vector<1x32x8xf32> -> vector<1x32x8xf32>
    "tpu.trace_stop"() : () -> ()
    %273 = vector.shape_cast %272 : vector<1x32x8xf32> to vector<4x8x8xf32>
    %274 = tpu.transpose %273, [1, 0, 2] : vector<4x8x8xf32> -> vector<8x4x8xf32>
    %275 = vector.shape_cast %274 : vector<8x4x8xf32> to vector<8x32xf32>
    %276 = arith.truncf %275 : vector<8x32xf32> to vector<8x32xbf16>
    %cst_86 = arith.constant dense<0.000000e+00> : vector<8x32xf32>
    %277 = tpu.matmul %276, %221, %cst_86 {dimension_numbers = #tpu.dot_dimension_numbers<[1], [0], [0], [1], [0, 0, 1, 1], [], []>} : vector<8x32xbf16>, vector<32x32xbf16>, vector<8x32xf32> -> vector<8x32xf32>
    %c5_87 = arith.constant 5 : index
    %c0_88 = arith.constant 0 : index
    %278 = vector.load %arg3[%c5_87, %c0_88] : memref<7x32xf32, #tpu.memory_space<vmem>>, vector<1x32xf32>
    %c0_89 = arith.constant 0 : index
    %c1480 = arith.constant 1480 : index
    %279 = vector.load %arg4[%c0_89, %c1480] : memref<32x1992xbf16, #tpu.memory_space<vmem>>, vector<32x512xbf16>
    %c512 = arith.constant 512 : index
    %c0_90 = arith.constant 0 : index
    %280 = vector.load %arg5[%c512, %c0_90] : memref<768x32xbf16, #tpu.memory_space<vmem>>, vector<256x32xbf16>
    %281 = arith.addf %277, %222 : vector<8x32xf32>
    %282 = arith.mulf %281, %281 : vector<8x32xf32>
    %cst_91 = arith.constant dense<0.000000e+00> : vector<8xf32>
    %283 = vector.multi_reduction <add>, %282, %cst_91 [1] : vector<8x32xf32> to vector<8xf32>
    %284 = vector.shape_cast %283 : vector<8xf32> to vector<8x1xf32>
    %cst_92 = arith.constant 3.200000e+01 : f32
    %285 = vector.broadcast %cst_92 : f32 to vector<8x1xf32>
    %286 = arith.divf %284, %285 : vector<8x1xf32>
    %cst_93 = arith.constant 9.99999997E-7 : f32
    %287 = vector.broadcast %cst_93 : f32 to vector<8x1xf32>
    %288 = arith.addf %286, %287 : vector<8x1xf32>
    %289 = math.rsqrt %288 : vector<8x1xf32>
    %290 = vector.broadcast %289 : vector<8x1xf32> to vector<8x32xf32>
    %291 = arith.mulf %281, %290 : vector<8x32xf32>
    %292 = vector.broadcast %278 : vector<1x32xf32> to vector<8x32xf32>
    %293 = arith.mulf %291, %292 : vector<8x32xf32>
    %294 = arith.truncf %293 : vector<8x32xf32> to vector<8x32xbf16>
    %cst_94 = arith.constant dense<0.000000e+00> : vector<8x512xf32>
    %295 = tpu.matmul %294, %279, %cst_94 {dimension_numbers = #tpu.dot_dimension_numbers<[1], [0], [0], [1], [0, 0, 1, 1], [], []>} : vector<8x32xbf16>, vector<32x512xbf16>, vector<8x512xf32> -> vector<8x512xf32>
    %296 = vector.extract_strided_slice %295 {offsets = [0, 0], sizes = [8, 256], strides = [1, 1]} : vector<8x512xf32> to vector<8x256xf32>
    %297 = vector.extract_strided_slice %295 {offsets = [0, 256], sizes = [8, 256], strides = [1, 1]} : vector<8x512xf32> to vector<8x256xf32>
    %298 = arith.negf %296 : vector<8x256xf32>
    %299 = math.exp %298 : vector<8x256xf32>
    %cst_95 = arith.constant 1.000000e+00 : f32
    %300 = vector.broadcast %cst_95 : f32 to vector<8x256xf32>
    %301 = arith.addf %300, %299 : vector<8x256xf32>
    %302 = arith.divf %300, %301 : vector<8x256xf32>
    %303 = arith.mulf %296, %302 : vector<8x256xf32>
    %304 = arith.mulf %303, %297 : vector<8x256xf32>
    %305 = arith.truncf %304 : vector<8x256xf32> to vector<8x256xbf16>
    %cst_96 = arith.constant dense<0.000000e+00> : vector<8x32xf32>
    %306 = tpu.matmul %305, %280, %cst_96 {dimension_numbers = #tpu.dot_dimension_numbers<[1], [0], [0], [1], [0, 0, 1, 1], [], []>} : vector<8x256xbf16>, vector<256x32xbf16>, vector<8x32xf32> -> vector<8x32xf32>
    %c6_97 = arith.constant 6 : index
    %c0_98 = arith.constant 0 : index
    %307 = vector.load %arg3[%c6_97, %c0_98] : memref<7x32xf32, #tpu.memory_space<vmem>>, vector<1x32xf32>
    %308 = arith.addf %306, %281 : vector<8x32xf32>
    %309 = arith.mulf %308, %308 : vector<8x32xf32>
    %cst_99 = arith.constant dense<0.000000e+00> : vector<8xf32>
    %310 = vector.multi_reduction <add>, %309, %cst_99 [1] : vector<8x32xf32> to vector<8xf32>
    %311 = vector.shape_cast %310 : vector<8xf32> to vector<8x1xf32>
    %cst_100 = arith.constant 3.200000e+01 : f32
    %312 = vector.broadcast %cst_100 : f32 to vector<8x1xf32>
    %313 = arith.divf %311, %312 : vector<8x1xf32>
    %cst_101 = arith.constant 9.99999997E-7 : f32
    %314 = vector.broadcast %cst_101 : f32 to vector<8x1xf32>
    %315 = arith.addf %313, %314 : vector<8x1xf32>
    %316 = math.rsqrt %315 : vector<8x1xf32>
    %317 = vector.broadcast %316 : vector<8x1xf32> to vector<8x32xf32>
    %318 = arith.mulf %308, %317 : vector<8x32xf32>
    %319 = vector.broadcast %307 : vector<1x32xf32> to vector<8x32xf32>
    %320 = arith.mulf %318, %319 : vector<8x32xf32>
    %321 = arith.truncf %320 : vector<8x32xf32> to vector<8x32xbf16>
    %c0_102 = arith.constant 0 : index
    %c0_103 = arith.constant 0 : index
    %322 = vector.load %arg6[%c0_102, %c0_103] : memref<8x32xbf16, #tpu.memory_space<vmem>>, vector<8x32xbf16>
    tpu.vector_store %arg6[%c0_102, %c0_103], %321 {strides = array<i32>} : memref<8x32xbf16, #tpu.memory_space<vmem>>, vector<8x32xbf16>,
    return
  }
}

</mosaic_0001>

<llo_original>
// kernel: deci_model_forward.1
$region0: #{deci_model_forward.1}
  #allocation0 [shape = 'u32[]', space=smem, size = 0x4, offset = 0x4, fixed_abs, tag = 'smem constant byte address 0x4 - core index']
  #allocation1 [shape = 'u32[144,128]{1,0:T(1,128)}', space=vmem, size = 0x12000, scoped, tag = 'internal scratch']
  %s0 = inlined_call_operand.vmem [shape: s32[8], index: 0, kind: input, shape index: {}]
  %s1 = inlined_call_operand.vmem [shape: bf16[128,1,32], index: 1, kind: input, shape index: {}]
  %s2 = inlined_call_operand.vmem [shape: f32[2,8,32], index: 2, kind: input, shape index: {}]
  %s3 = inlined_call_operand.vmem [shape: f32[7,32], index: 3, kind: input, shape index: {}]
  %s4 = inlined_call_operand.vmem [shape: bf16[32,1992], index: 4, kind: input, shape index: {}]
  %s5 = inlined_call_operand.vmem [shape: bf16[768,32], index: 5, kind: input, shape index: {}]
  %s6 = inlined_call_operand.hbm [shape: bf16[8,32], index: 6, kind: output, shape index: {}]
  %s7 = sld [smem:[#allocation0]]
  $region38: #{deci_model_forward.1} parent=0
    _
  %s9 = ssub.s32 1, %s7
  %s10 = scalar_select 0, %s9, %s7
  $region1: #{deci_model_forward.1} parent=0
    #allocation2 [shape = 'u8[512]{0}', space=smem, size = 0x200, scoped, tag = 'input window, operand 0, single buffered']
    #allocation3 [shape = 's32[1]{0}', space=sflag, size = 0x4, scoped, tag = 'scoped memory for deci_model_forward.1']
    #allocation4 [shape = 's32[1]{0}', space=sflag, size = 0x4, scoped, tag = 'scoped memory for deci_model_forward.1']
    #allocation5 [shape = 'u8[2048]{0}', space=vmem, size = 0x800, scoped, tag = 'output window, operand 0, single buffered']
    %11 = vsyncpa [#allocation4], 0
    %12 = vsyncpa [#allocation3], 0
    // Predicated region
    $region2: #{deci_model_forward.1} parent=1 // pred_check
      _
    $region3: #{deci_model_forward.1} parent=1 // pred_check_branch
      %14 = sbr.rel (0) target = $region5
    $region4: #{deci_model_forward.1} parent=1 // pred_region
      %s16 = ssub.s32 16, 16
      %17 = vsyncadd [#allocation4], %s16
      %s19 = sshll.u32 %s0, 4
      %s20 = int_to_ptr.vmem [resolvable:$true] %s19
      %22 = dma.vmem_to_smem %s20, 16, [#allocation2], [#allocation4]
    $region5: #{deci_model_forward.1} parent=1 // pred_fallthru
      _
    // Predicated region
    $region6: #{deci_model_forward.1} parent=1 // pred_check
      _
    $region7: #{deci_model_forward.1} parent=1 // pred_check_branch
      %24 = sbr.rel (0) target = $region9
    $region8: #{deci_model_forward.1} parent=1 // pred_region
      _
    $region9: #{deci_model_forward.1} parent=1 // pred_fallthru
      _
    // Predicated region
    $region10: #{deci_model_forward.1} parent=1 // pred_check
      _
    $region11: #{deci_model_forward.1} parent=1 // pred_check_branch
      %26 = sbr.rel (0) target = $region13
    $region12: #{deci_model_forward.1} parent=1 // pred_region
      _
    $region13: #{deci_model_forward.1} parent=1 // pred_fallthru
      _
    // Predicated region
    $region14: #{deci_model_forward.1} parent=1 // pred_check
      _
    $region15: #{deci_model_forward.1} parent=1 // pred_check_branch
      %28 = sbr.rel (0) target = $region17
    $region16: #{deci_model_forward.1} parent=1 // pred_region
      _
    $region17: #{deci_model_forward.1} parent=1 // pred_fallthru
      _
    // Predicated region
    $region18: #{deci_model_forward.1} parent=1 // pred_check
      _
    $region19: #{deci_model_forward.1} parent=1 // pred_check_branch
      %30 = sbr.rel (0) target = $region21
    $region20: #{deci_model_forward.1} parent=1 // pred_region
      _
    $region21: #{deci_model_forward.1} parent=1 // pred_fallthru
      _
    // Predicated region
    $region22: #{deci_model_forward.1} parent=1 // pred_check
      _
    $region23: #{deci_model_forward.1} parent=1 // pred_check_branch
      %32 = sbr.rel (0) target = $region25
    $region24: #{deci_model_forward.1} parent=1 // pred_region
      _
    $region25: #{deci_model_forward.1} parent=1 // pred_fallthru
      _
    // Predicated region
    $region26: #{deci_model_forward.1} parent=1 // pred_check
      _
    $region27: #{deci_model_forward.1} parent=1 // pred_check_branch
      %34 = sbr.rel (0) target = $region29
    $region28: #{deci_model_forward.1} parent=1 // pred_region
      %35 = dma.done [#allocation4], 16
    $region29: #{deci_model_forward.1} parent=1 // pred_fallthru
      _
    %36 = sfence
    %s38 = sld [smem:[#allocation2]]
    %s39 = scalar_lea.vmem %s1, %s38
    %v40 = vld [vmem:[%s39] sm:$0x1]
    %s41 = sld [smem:[#allocation2 + $0x1]]
    %s42 = scalar_lea.vmem %s1, %s41
    %v43 = vld [vmem:[%s42] sm:$0x1]
    %s44 = sld [smem:[#allocation2 + $0x2]]
    %s45 = scalar_lea.vmem %s1, %s44
    %v46 = vld [vmem:[%s45] sm:$0x1]
    %s47 = sld [smem:[#allocation2 + $0x3]]
    %s48 = scalar_lea.vmem %s1, %s47
    %v49 = vld [vmem:[%s48] sm:$0x1]
    %s50 = sld [smem:[#allocation2 + $0x4]]
    %s51 = scalar_lea.vmem %s1, %s50
    %v52 = vld [vmem:[%s51] sm:$0x1]
    %s53 = sld [smem:[#allocation2 + $0x5]]
    %s54 = scalar_lea.vmem %s1, %s53
    %v55 = vld [vmem:[%s54] sm:$0x1]
    %s56 = sld [smem:[#allocation2 + $0x6]]
    %s57 = scalar_lea.vmem %s1, %s56
    %v58 = vld [vmem:[%s57] sm:$0x1]
    %s59 = sld [smem:[#allocation2 + $0x7]]
    %s60 = scalar_lea.vmem %s1, %s59
    %v61 = vld [vmem:[%s60] sm:$0x1]
    %v64 = vunpack.c.l.s4 1966171168
    %v65 = vunpack.c.0.s8 %v64
    %v66 = vlaneseq
    %v67 = vshrl.u32 %v66, 7
    %v68 = vsub.s32 %v65, %v67
    %v69 = vrot.slane %v43, %v68
    %v71 = vunpack.c.l.s4 1966171168
    %v72 = vunpack.c.0.s8 %v71
    %v73 = vlaneseq
    %v74 = vshrl.u32 %v73, 7
    %v75 = vsub.s32 %v72, %v74
    %v76 = vrot.slane %v69, %v75
    %v78 = vshll.u32 %v76, 16
    %v82 = vcombine.low %v46, %v46
    %v84 = vunpack.c.l.s4 1966171168
    %v85 = vunpack.c.0.s8 %v84
    %v86 = vlaneseq
    %v87 = vshrl.u32 %v86, 7
    %v88 = vsub.s32 %v85, %v87
    %v89 = vrot.slane %v82, %v88
    %v91 = vunpack.c.l.s4 1966171168
    %v92 = vunpack.c.0.s8 %v91
    %v93 = vlaneseq
    %v94 = vshrl.u32 %v93, 7
    %v95 = vsub.s32 %v92, %v94
    %v96 = vrot.slane %v89, %v95
    %v99 = vunpack.c.l.s4 1966171168
    %v100 = vunpack.c.0.s8 %v99
    %v101 = vlaneseq
    %v102 = vshrl.u32 %v101, 7
    %v103 = vsub.s32 %v100, %v102
    %v104 = vrot.slane %v49, %v103
    %v106 = vunpack.c.l.s4 1966171168
    %v107 = vunpack.c.0.s8 %v106
    %v108 = vlaneseq
    %v109 = vshrl.u32 %v108, 7
    %v110 = vsub.s32 %v107, %v109
    %v111 = vrot.slane %v104, %v110
    %v113 = vshll.u32 %v111, 16
    %v115 = vrot.slane %v113, 7
    %v119 = vunpack.c.l.s4 1966171168
    %v120 = vunpack.c.0.s8 %v119
    %v121 = vlaneseq
    %v122 = vshrl.u32 %v121, 7
    %v123 = vsub.s32 %v120, %v122
    %v124 = vrot.slane %v52, %v123
    %v125 = vcombine.low %v124, %v124
    %v127 = vunpack.c.l.s4 1966171168
    %v128 = vunpack.c.0.s8 %v127
    %v129 = vlaneseq
    %v130 = vshrl.u32 %v129, 7
    %v131 = vsub.s32 %v128, %v130
    %v132 = vrot.slane %v125, %v131
    %v135 = vunpack.c.l.s4 1966171168
    %v136 = vunpack.c.0.s8 %v135
    %v137 = vlaneseq
    %v138 = vshrl.u32 %v137, 7
    %v139 = vsub.s32 %v136, %v138
    %v140 = vrot.slane %v55, %v139
    %v142 = vunpack.c.l.s4 1966171168
    %v143 = vunpack.c.0.s8 %v142
    %v144 = vlaneseq
    %v145 = vshrl.u32 %v144, 7
    %v146 = vsub.s32 %v143, %v145
    %v147 = vrot.slane %v140, %v146
    %v149 = vshll.u32 %v147, 16
    %v151 = vrot.slane %v149, 6
    %v154 = vcombine.low %v58, %v58
    %v156 = vunpack.c.l.s4 1966171168
    %v157 = vunpack.c.0.s8 %v156
    %v158 = vlaneseq
    %v159 = vshrl.u32 %v158, 7
    %v160 = vsub.s32 %v157, %v159
    %v161 = vrot.slane %v154, %v160
    %v162 = vcombine.low %v161, %v161
    %v164 = vunpack.c.l.s4 1966171168
    %v165 = vunpack.c.0.s8 %v164
    %v166 = vlaneseq
    %v167 = vshrl.u32 %v166, 7
    %v168 = vsub.s32 %v165, %v167
    %v169 = vrot.slane %v162, %v168
    %v172 = vunpack.c.l.s4 1966171168
    %v173 = vunpack.c.0.s8 %v172
    %v174 = vlaneseq
    %v175 = vshrl.u32 %v174, 7
    %v176 = vsub.s32 %v173, %v175
    %v177 = vrot.slane %v61, %v176
    %v179 = vunpack.c.l.s4 1966171168
    %v180 = vunpack.c.0.s8 %v179
    %v181 = vlaneseq
    %v182 = vshrl.u32 %v181, 7
    %v183 = vsub.s32 %v180, %v182
    %v184 = vrot.slane %v177, %v183
    %v186 = vshll.u32 %v184, 16
    %v188 = vrot.slane %v186, 5
    %vm190 = vcmask 1040384
    %vm191 = vsmask.f32 256
    %vm192 = vmand %vm190, %vm191
    %v193 = vsel %vm192, %v40, %v78
    %vm194 = vcmask 1040384
    %v197 = vsel %vm194, %v193, %v96
    %vm199 = vcmask 1041408
    %vm200 = vsmask.f32 1280
    %vm201 = vmand %vm199, %vm200
    %v202 = vsel %vm201, %v197, %v115
    %vm203 = vcmask 1041408
    %v206 = vsel %vm203, %v202, %v132
    %vm208 = vcmask 1042432
    %vm209 = vsmask.f32 2304
    %vm210 = vmand %vm208, %vm209
    %v211 = vsel %vm210, %v206, %v151
    %vm212 = vcmask 1042432
    %v215 = vsel %vm212, %v211, %v169
    %vm217 = vcmask 1043456
    %vm218 = vsmask.f32 3328
    %vm219 = vmand %vm217, %vm218
    %v220 = vsel %vm219, %v215, %v188
    %v221 = vunpack.c.l.bf16 %v220
    %v222 = vld [vmem:[%s2] sm:$0xff]
    %s223 = scalar_lea.vmem %s2, 8
    %v224 = vld [vmem:[%s223] sm:$0xff]
    %v225 = vlaneseq
    %v226 = vshrl.u32 %v225, 7
    %v227 = vlaneseq
    %v228 = vand.u32 %v227, 127
    %vm229 = vcmp.ge.s32.totalorder %v226, %v228
    %v230 = vsel %vm229, 0.0, -1e+30
    %v231 = vld [vmem:[%s3] sm:$0x1]
    %v232 = vld [vmem:[%s4] sm:$0xff]
    %v233 = vld [vmem:[%s4 + $0x40] sm:$0xff]
    %v234 = vld [vmem:[%s4 + $0x80] sm:$0xff]
    %v235 = vld [vmem:[%s4 + $0xc0] sm:$0xff]
    %v236 = vld [vmem:[%s4 + $0x4] sm:$0xf]
    %v237 = vld [vmem:[%s4 + $0x44] sm:$0xf]
    %v238 = vld [vmem:[%s4 + $0x84] sm:$0xf]
    %v239 = vld [vmem:[%s4 + $0xc4] sm:$0xf]
    %v240 = vmul.f32 %v221, %v221
    %vm241 = vcmask 261120
    %v242 = vsel %vm241, %v240, 0.0
    %243 = vadd.xlane.f32.xlu0 %v242
    %v244 = vpop.xlane.xlu0 %243
    %v245 = vrcp.pop 32.0
    %v246 = vmul.f32 %v244, %v245
    %v247 = vadd.f32 %v246, 1e-06
    %v248 = vrsqrt.pop %v247
    %v249 = vmul.f32 %v221, %v248
    %v250 = vlaneseq
    %v251 = vshrl.u32 %v250, 7
    %v252 = vsub.s32 0, %v251
    %v253 = vrot.slane %v231, %v252
    %v254 = vmul.f32 %v249, %v253
    %v255 = vpack.c.bf16 %v254, %v254
    %v260 = vunpack.c.l.b16 %v232
    %v261 = vunpack.c.h.b16 %v232
    %v262 = vunpack.c.l.b16 %v233
    %v263 = vunpack.c.h.b16 %v233
    %v264 = vunpack.c.l.b16 %v234
    %v265 = vunpack.c.h.b16 %v234
    %v266 = vunpack.c.l.b16 %v235
    %v267 = vunpack.c.h.b16 %v235
    %v268 = vpack.c.b16 %v262, %v260
    %v269 = vpack.c.b16 %v263, %v261
    %v270 = vpack.c.b16 %v266, %v264
    %v271 = vpack.c.b16 %v267, %v265
    %v277 = vsel %vm241, %v255, 0
    %279 = vmatprep.subr.bf16.mxu0 %v269
    %280 = vmatpush1.bf16.msra.mxu0 %v268
    %281 = vmatprep.subr.bf16.mxu0 %v271
    %282 = vmatpush1.bf16.msra.mxu0 %v270
    %283 = vmatprep.subr.bf16.mxu0 0
    %284 = vmatpush1.bf16.msra.mxu0 0
    %285 = vmatprep.subr.bf16.mxu0 0
    %286 = vmatpush1.bf16.msra.mxu0 0
    %287 = vmatprep.subr.bf16.mxu0 0
    %288 = vmatpush1.bf16.msra.mxu0 0
    %289 = vmatprep.subr.bf16.mxu0 0
    %290 = vmatpush1.bf16.msra.mxu0 0
    %291 = vmatprep.subr.bf16.mxu0 0
    %292 = vmatpush1.bf16.msra.mxu0 0
    %293 = vmatprep.subr.bf16.mxu0 0
    %294 = vmatpush1.bf16.msra.mxu0 0
    %295 = vmatprep.subr.bf16.mxu0 0
    %296 = vmatpush1.bf16.msra.mxu0 0
    %297 = vmatprep.subr.bf16.mxu0 0
    %298 = vmatpush1.bf16.msra.mxu0 0
    %299 = vmatprep.subr.bf16.mxu0 0
    %300 = vmatpush1.bf16.msra.mxu0 0
    %301 = vmatprep.subr.bf16.mxu0 0
    %302 = vmatpush1.bf16.msra.mxu0 0
    %303 = vmatprep.subr.bf16.mxu0 0
    %304 = vmatpush1.bf16.msra.mxu0 0
    %305 = vmatprep.subr.bf16.mxu0 0
    %306 = vmatpush1.bf16.msra.mxu0 0
    %307 = vmatprep.subr.bf16.mxu0 0
    %308 = vmatpush1.bf16.msra.mxu0 0
    %309 = vmatprep.subr.bf16.mxu0 0
    %310 = vmatpush1.bf16.msra.mxu0 0
    %311 = vmatprep.mubr.bf16.mxu0 0
    %312 = vmatmul.mubr.bf16.gmra.mrb[0].mxu0 %v277
    %v313 = vpop.f32.mrb[0].mxu0
    %v314 = vadd.f32 0.0, %v313
    %v315 = vpop.f32.mrb[0].mxu0
    %v316 = vadd.f32 0.0, %v315
    %v317 = vpop.f32.mrb[0].mxu0
    %v318 = vpop.f32.mrb[0].mxu0
    %319 = vdwg.mxu0
    %v320 = vmul.f32 %v314, %v222
    %322 = vrot.lane.b32.xlu0 %v224, 96
    %v323 = vpop.permute.xlu0 %322
    %v325 = vmul.f32 %v314, %v323
    %327 = vrot.lane.b32.xlu0 %v325, 32
    %v328 = vpop.permute.xlu0 %327
    %v330 = vadd.f32 %v320, %v328
    %332 = vrot.lane.b32.xlu0 %v222, 32
    %v333 = vpop.permute.xlu0 %332
    %v335 = vmul.f32 %v314, %v333
    %v336 = vmul.f32 %v316, %v224
    %338 = vrot.lane.b32.xlu0 %v336, 32
    %v339 = vpop.permute.xlu0 %338
    %v341 = vadd.f32 %v335, %v339
    %343 = vrot.lane.b32.xlu0 %v330, 120
    %v344 = vpop.permute.xlu0 %343
    %346 = vrot.lane.b32.xlu0 %v330, 112
    %v347 = vpop.permute.xlu0 %346
    %349 = vrot.lane.b32.xlu0 %v330, 104
    %v350 = vpop.permute.xlu0 %349
    %v352 = vcombine.low %v330, %v347
    %v353 = vcombine.high %v330, %v347
    %v355 = vunpack.c.l.s4 1983009808
    %v356 = vunpack.c.0.s8 %v355
    %v357 = vlaneseq
    %v358 = vshrl.u32 %v357, 7
    %v359 = vsub.s32 %v356, %v358
    %v360 = vrot.slane %v352, %v359
    %v362 = vunpack.c.l.s4 1983009808
    %v363 = vunpack.c.0.s8 %v362
    %v364 = vlaneseq
    %v365 = vshrl.u32 %v364, 7
    %v366 = vsub.s32 %v363, %v365
    %v367 = vrot.slane %v353, %v366
    %v368 = vcombine.low %v344, %v350
    %v369 = vcombine.high %v344, %v350
    %v371 = vunpack.c.l.s4 1983009808
    %v372 = vunpack.c.0.s8 %v371
    %v373 = vlaneseq
    %v374 = vshrl.u32 %v373, 7
    %v375 = vsub.s32 %v372, %v374
    %v376 = vrot.slane %v368, %v375
    %v378 = vunpack.c.l.s4 1983009808
    %v379 = vunpack.c.0.s8 %v378
    %v380 = vlaneseq
    %v381 = vshrl.u32 %v380, 7
    %v382 = vsub.s32 %v379, %v381
    %v383 = vrot.slane %v369, %v382
    %v384 = vcombine.low %v360, %v376
    %v385 = vcombine.high %v360, %v376
    %v387 = vunpack.c.l.s4 1934713408
    %v388 = vunpack.c.0.s8 %v387
    %v389 = vlaneseq
    %v390 = vshrl.u32 %v389, 7
    %v391 = vsub.s32 %v388, %v390
    %v392 = vrot.slane %v384, %v391
    %v394 = vunpack.c.l.s4 1934713408
    %v395 = vunpack.c.0.s8 %v394
    %v396 = vlaneseq
    %v397 = vshrl.u32 %v396, 7
    %v398 = vsub.s32 %v395, %v397
    %v399 = vrot.slane %v385, %v398
    %v400 = vcombine.low %v367, %v383
    %v401 = vcombine.high %v367, %v383
    %v403 = vunpack.c.l.s4 1934713408
    %v404 = vunpack.c.0.s8 %v403
    %v405 = vlaneseq
    %v406 = vshrl.u32 %v405, 7
    %v407 = vsub.s32 %v404, %v406
    %v408 = vrot.slane %v400, %v407
    %v410 = vunpack.c.l.s4 1934713408
    %v411 = vunpack.c.0.s8 %v410
    %v412 = vlaneseq
    %v413 = vshrl.u32 %v412, 7
    %v414 = vsub.s32 %v411, %v413
    %v415 = vrot.slane %v401, %v414
    %v416 = vcombine.high %v392, 0.0
    %v417 = vcombine.high %v399, 0.0
    %v418 = vcombine.high %v408, 0.0
    %v419 = vcombine.high %v415, 0.0
    %v420 = vcombine.low %v392, %v399
    %v422 = vunpack.c.l.s4 1983009808
    %v423 = vunpack.c.0.s8 %v422
    %v424 = vlaneseq
    %v425 = vshrl.u32 %v424, 7
    %v426 = vsub.s32 %v423, %v425
    %v427 = vrot.slane %v420, %v426
    %v428 = vcombine.low %v416, %v417
    %v430 = vunpack.c.l.s4 1983009808
    %v431 = vunpack.c.0.s8 %v430
    %v432 = vlaneseq
    %v433 = vshrl.u32 %v432, 7
    %v434 = vsub.s32 %v431, %v433
    %v435 = vrot.slane %v428, %v434
    %v436 = vcombine.low %v408, %v415
    %v438 = vunpack.c.l.s4 1983009808
    %v439 = vunpack.c.0.s8 %v438
    %v440 = vlaneseq
    %v441 = vshrl.u32 %v440, 7
    %v442 = vsub.s32 %v439, %v441
    %v443 = vrot.slane %v436, %v442
    %v444 = vcombine.low %v418, %v419
    %v446 = vunpack.c.l.s4 1983009808
    %v447 = vunpack.c.0.s8 %v446
    %v448 = vlaneseq
    %v449 = vshrl.u32 %v448, 7
    %v450 = vsub.s32 %v447, %v449
    %v451 = vrot.slane %v444, %v450
    %v452 = vcombine.low %v427, %v435
    %v453 = vcombine.high %v427, %v435
    %v455 = vunpack.c.l.s4 1934713408
    %v456 = vunpack.c.0.s8 %v455
    %v457 = vlaneseq
    %v458 = vshrl.u32 %v457, 7
    %v459 = vsub.s32 %v456, %v458
    %v460 = vrot.slane %v452, %v459
    %v462 = vunpack.c.l.s4 1934713408
    %v463 = vunpack.c.0.s8 %v462
    %v464 = vlaneseq
    %v465 = vshrl.u32 %v464, 7
    %v466 = vsub.s32 %v463, %v465
    %v467 = vrot.slane %v453, %v466
    %v468 = vcombine.low %v443, %v451
    %v469 = vcombine.high %v443, %v451
    %v471 = vunpack.c.l.s4 1934713408
    %v472 = vunpack.c.0.s8 %v471
    %v473 = vlaneseq
    %v474 = vshrl.u32 %v473, 7
    %v475 = vsub.s32 %v472, %v474
    %v476 = vrot.slane %v468, %v475
    %v478 = vunpack.c.l.s4 1934713408
    %v479 = vunpack.c.0.s8 %v478
    %v480 = vlaneseq
    %v481 = vshrl.u32 %v480, 7
    %v482 = vsub.s32 %v479, %v481
    %v483 = vrot.slane %v469, %v482
    %v484 = vcombine.low %v460, %v476
    %v485 = vcombine.high %v460, %v476
    %v486 = vcombine.low %v467, %v483
    %v487 = vcombine.high %v467, %v483
    %489 = vrot.lane.b32.xlu0 %v341, 120
    %v490 = vpop.permute.xlu0 %489
    %491 = vrot.lane.b32.xlu0 %v341, 112
    %v492 = vpop.permute.xlu0 %491
    %493 = vrot.lane.b32.xlu0 %v341, 104
    %v494 = vpop.permute.xlu0 %493
    %495 = vrot.lane.b32.xlu0 %v341, 96
    %v496 = vpop.permute.xlu0 %495
    %497 = vrot.lane.b32.xlu0 %v490, 96
    %v498 = vpop.permute.xlu0 %497
    %499 = vrot.lane.b32.xlu0 %v492, 96
    %v500 = vpop.permute.xlu0 %499
    %501 = vrot.lane.b32.xlu0 %v494, 96
    %v502 = vpop.permute.xlu0 %501
    %v507 = vcombine.low %v496, %v500
    %v508 = vcombine.high %v496, %v500
    %v510 = vunpack.c.l.s4 1983009808
    %v511 = vunpack.c.0.s8 %v510
    %v512 = vlaneseq
    %v513 = vshrl.u32 %v512, 7
    %v514 = vsub.s32 %v511, %v513
    %v515 = vrot.slane %v507, %v514
    %v517 = vunpack.c.l.s4 1983009808
    %v518 = vunpack.c.0.s8 %v517
    %v519 = vlaneseq
    %v520 = vshrl.u32 %v519, 7
    %v521 = vsub.s32 %v518, %v520
    %v522 = vrot.slane %v508, %v521
    %v523 = vcombine.low %v498, %v502
    %v524 = vcombine.high %v498, %v502
    %v526 = vunpack.c.l.s4 1983009808
    %v527 = vunpack.c.0.s8 %v526
    %v528 = vlaneseq
    %v529 = vshrl.u32 %v528, 7
    %v530 = vsub.s32 %v527, %v529
    %v531 = vrot.slane %v523, %v530
    %v533 = vunpack.c.l.s4 1983009808
    %v534 = vunpack.c.0.s8 %v533
    %v535 = vlaneseq
    %v536 = vshrl.u32 %v535, 7
    %v537 = vsub.s32 %v534, %v536
    %v538 = vrot.slane %v524, %v537
    %v539 = vcombine.low %v515, %v531
    %v540 = vcombine.high %v515, %v531
    %v542 = vunpack.c.l.s4 1934713408
    %v543 = vunpack.c.0.s8 %v542
    %v544 = vlaneseq
    %v545 = vshrl.u32 %v544, 7
    %v546 = vsub.s32 %v543, %v545
    %v547 = vrot.slane %v539, %v546
    %v549 = vunpack.c.l.s4 1934713408
    %v550 = vunpack.c.0.s8 %v549
    %v551 = vlaneseq
    %v552 = vshrl.u32 %v551, 7
    %v553 = vsub.s32 %v550, %v552
    %v554 = vrot.slane %v540, %v553
    %v555 = vcombine.low %v522, %v538
    %v556 = vcombine.high %v522, %v538
    %v558 = vunpack.c.l.s4 1934713408
    %v559 = vunpack.c.0.s8 %v558
    %v560 = vlaneseq
    %v561 = vshrl.u32 %v560, 7
    %v562 = vsub.s32 %v559, %v561
    %v563 = vrot.slane %v555, %v562
    %v565 = vunpack.c.l.s4 1934713408
    %v566 = vunpack.c.0.s8 %v565
    %v567 = vlaneseq
    %v568 = vshrl.u32 %v567, 7
    %v569 = vsub.s32 %v566, %v568
    %v570 = vrot.slane %v556, %v569
    %v571 = vcombine.high %v547, 0.0
    %v572 = vcombine.high %v554, 0.0
    %v573 = vcombine.high %v563, 0.0
    %v574 = vcombine.high %v570, 0.0
    %v575 = vcombine.low %v547, %v554
    %v577 = vunpack.c.l.s4 1983009808
    %v578 = vunpack.c.0.s8 %v577
    %v579 = vlaneseq
    %v580 = vshrl.u32 %v579, 7
    %v581 = vsub.s32 %v578, %v580
    %v582 = vrot.slane %v575, %v581
    %v583 = vcombine.low %v571, %v572
    %v585 = vunpack.c.l.s4 1983009808
    %v586 = vunpack.c.0.s8 %v585
    %v587 = vlaneseq
    %v588 = vshrl.u32 %v587, 7
    %v589 = vsub.s32 %v586, %v588
    %v590 = vrot.slane %v583, %v589
    %v591 = vcombine.low %v563, %v570
    %v593 = vunpack.c.l.s4 1983009808
    %v594 = vunpack.c.0.s8 %v593
    %v595 = vlaneseq
    %v596 = vshrl.u32 %v595, 7
    %v597 = vsub.s32 %v594, %v596
    %v598 = vrot.slane %v591, %v597
    %v599 = vcombine.low %v573, %v574
    %v601 = vunpack.c.l.s4 1983009808
    %v602 = vunpack.c.0.s8 %v601
    %v603 = vlaneseq
    %v604 = vshrl.u32 %v603, 7
    %v605 = vsub.s32 %v602, %v604
    %v606 = vrot.slane %v599, %v605
    %v607 = vcombine.low %v582, %v590
    %v608 = vcombine.high %v582, %v590
    %v610 = vunpack.c.l.s4 1934713408
    %v611 = vunpack.c.0.s8 %v610
    %v612 = vlaneseq
    %v613 = vshrl.u32 %v612, 7
    %v614 = vsub.s32 %v611, %v613
    %v615 = vrot.slane %v607, %v614
    %v617 = vunpack.c.l.s4 1934713408
    %v618 = vunpack.c.0.s8 %v617
    %v619 = vlaneseq
    %v620 = vshrl.u32 %v619, 7
    %v621 = vsub.s32 %v618, %v620
    %v622 = vrot.slane %v608, %v621
    %v623 = vcombine.low %v598, %v606
    %v624 = vcombine.high %v598, %v606
    %v626 = vunpack.c.l.s4 1934713408
    %v627 = vunpack.c.0.s8 %v626
    %v628 = vlaneseq
    %v629 = vshrl.u32 %v628, 7
    %v630 = vsub.s32 %v627, %v629
    %v631 = vrot.slane %v623, %v630
    %v633 = vunpack.c.l.s4 1934713408
    %v634 = vunpack.c.0.s8 %v633
    %v635 = vlaneseq
    %v636 = vshrl.u32 %v635, 7
    %v637 = vsub.s32 %v634, %v636
    %v638 = vrot.slane %v624, %v637
    %v639 = vcombine.low %v615, %v631
    %v640 = vcombine.high %v615, %v631
    %v641 = vcombine.low %v622, %v638
    %v642 = vcombine.high %v622, %v638
    %644 = vrot.lane.b32.xlu0 %v314, 120
    %v645 = vpop.permute.xlu0 %644
    %646 = vrot.lane.b32.xlu0 %v314, 112
    %v647 = vpop.permute.xlu0 %646
    %648 = vrot.lane.b32.xlu0 %v314, 104
    %v649 = vpop.permute.xlu0 %648
    %650 = vrot.lane.b32.xlu0 %v314, 64
    %v651 = vpop.permute.xlu0 %650
    %652 = vrot.lane.b32.xlu0 %v645, 64
    %v653 = vpop.permute.xlu0 %652
    %654 = vrot.lane.b32.xlu0 %v647, 64
    %v655 = vpop.permute.xlu0 %654
    %656 = vrot.lane.b32.xlu0 %v649, 64
    %v657 = vpop.permute.xlu0 %656
    %v662 = vcombine.low %v651, %v655
    %v663 = vcombine.high %v651, %v655
    %v665 = vunpack.c.l.s4 1983009808
    %v666 = vunpack.c.0.s8 %v665
    %v667 = vlaneseq
    %v668 = vshrl.u32 %v667, 7
    %v669 = vsub.s32 %v666, %v668
    %v670 = vrot.slane %v662, %v669
    %v672 = vunpack.c.l.s4 1983009808
    %v673 = vunpack.c.0.s8 %v672
    %v674 = vlaneseq
    %v675 = vshrl.u32 %v674, 7
    %v676 = vsub.s32 %v673, %v675
    %v677 = vrot.slane %v663, %v676
    %v678 = vcombine.low %v653, %v657
    %v679 = vcombine.high %v653, %v657
    %v681 = vunpack.c.l.s4 1983009808
    %v682 = vunpack.c.0.s8 %v681
    %v683 = vlaneseq
    %v684 = vshrl.u32 %v683, 7
    %v685 = vsub.s32 %v682, %v684
    %v686 = vrot.slane %v678, %v685
    %v688 = vunpack.c.l.s4 1983009808
    %v689 = vunpack.c.0.s8 %v688
    %v690 = vlaneseq
    %v691 = vshrl.u32 %v690, 7
    %v692 = vsub.s32 %v689, %v691
    %v693 = vrot.slane %v679, %v692
    %v694 = vcombine.low %v670, %v686
    %v695 = vcombine.high %v670, %v686
    %v697 = vunpack.c.l.s4 1934713408
    %v698 = vunpack.c.0.s8 %v697
    %v699 = vlaneseq
    %v700 = vshrl.u32 %v699, 7
    %v701 = vsub.s32 %v698, %v700
    %v702 = vrot.slane %v694, %v701
    %v704 = vunpack.c.l.s4 1934713408
    %v705 = vunpack.c.0.s8 %v704
    %v706 = vlaneseq
    %v707 = vshrl.u32 %v706, 7
    %v708 = vsub.s32 %v705, %v707
    %v709 = vrot.slane %v695, %v708
    %v710 = vcombine.low %v677, %v693
    %v711 = vcombine.high %v677, %v693
    %v713 = vunpack.c.l.s4 1934713408
    %v714 = vunpack.c.0.s8 %v713
    %v715 = vlaneseq
    %v716 = vshrl.u32 %v715, 7
    %v717 = vsub.s32 %v714, %v716
    %v718 = vrot.slane %v710, %v717
    %v720 = vunpack.c.l.s4 1934713408
    %v721 = vunpack.c.0.s8 %v720
    %v722 = vlaneseq
    %v723 = vshrl.u32 %v722, 7
    %v724 = vsub.s32 %v721, %v723
    %v725 = vrot.slane %v711, %v724
    %v726 = vcombine.high %v702, 0.0
    %v727 = vcombine.high %v709, 0.0
    %v728 = vcombine.high %v718, 0.0
    %v729 = vcombine.high %v725, 0.0
    %v730 = vcombine.low %v702, %v709
    %v732 = vunpack.c.l.s4 1983009808
    %v733 = vunpack.c.0.s8 %v732
    %v734 = vlaneseq
    %v735 = vshrl.u32 %v734, 7
    %v736 = vsub.s32 %v733, %v735
    %v737 = vrot.slane %v730, %v736
    %v738 = vcombine.low %v726, %v727
    %v740 = vunpack.c.l.s4 1983009808
    %v741 = vunpack.c.0.s8 %v740
    %v742 = vlaneseq
    %v743 = vshrl.u32 %v742, 7
    %v744 = vsub.s32 %v741, %v743
    %v745 = vrot.slane %v738, %v744
    %v746 = vcombine.low %v718, %v725
    %v748 = vunpack.c.l.s4 1983009808
    %v749 = vunpack.c.0.s8 %v748
    %v750 = vlaneseq
    %v751 = vshrl.u32 %v750, 7
    %v752 = vsub.s32 %v749, %v751
    %v753 = vrot.slane %v746, %v752
    %v754 = vcombine.low %v728, %v729
    %v756 = vunpack.c.l.s4 1983009808
    %v757 = vunpack.c.0.s8 %v756
    %v758 = vlaneseq
    %v759 = vshrl.u32 %v758, 7
    %v760 = vsub.s32 %v757, %v759
    %v761 = vrot.slane %v754, %v760
    %v762 = vcombine.low %v737, %v745
    %v763 = vcombine.high %v737, %v745
    %v765 = vunpack.c.l.s4 1934713408
    %v766 = vunpack.c.0.s8 %v765
    %v767 = vlaneseq
    %v768 = vshrl.u32 %v767, 7
    %v769 = vsub.s32 %v766, %v768
    %v770 = vrot.slane %v762, %v769
    %v772 = vunpack.c.l.s4 1934713408
    %v773 = vunpack.c.0.s8 %v772
    %v774 = vlaneseq
    %v775 = vshrl.u32 %v774, 7
    %v776 = vsub.s32 %v773, %v775
    %v777 = vrot.slane %v763, %v776
    %v778 = vcombine.low %v753, %v761
    %v779 = vcombine.high %v753, %v761
    %v781 = vunpack.c.l.s4 1934713408
    %v782 = vunpack.c.0.s8 %v781
    %v783 = vlaneseq
    %v784 = vshrl.u32 %v783, 7
    %v785 = vsub.s32 %v782, %v784
    %v786 = vrot.slane %v778, %v785
    %v788 = vunpack.c.l.s4 1934713408
    %v789 = vunpack.c.0.s8 %v788
    %v790 = vlaneseq
    %v791 = vshrl.u32 %v790, 7
    %v792 = vsub.s32 %v789, %v791
    %v793 = vrot.slane %v779, %v792
    %v794 = vcombine.low %v770, %v786
    %v795 = vcombine.high %v770, %v786
    %v796 = vcombine.low %v777, %v793
    %v797 = vcombine.high %v777, %v793
    %vm798 = vcmask 64512
    %v800 = vsel %vm798, %v484, 0
    %v803 = vsel %vm798, %v639, 0
    %805 = vmatprep.subr.mxu0 0.0
    %806 = vmatpush1.xpose.msra.mxu0 %v803
    %807 = vmatprep.subr.mxu0 0.0
    %808 = vmatpush1.xpose.msra.mxu0 0.0
    %809 = vmatprep.subr.mxu0 0.0
    %810 = vmatpush1.xpose.msra.mxu0 0.0
    %811 = vmatprep.subr.mxu0 0.0
    %812 = vmatpush1.xpose.msra.mxu0 0.0
    %813 = vmatprep.subr.mxu0 0.0
    %814 = vmatpush1.xpose.msra.mxu0 0.0
    %815 = vmatprep.subr.mxu0 0.0
    %816 = vmatpush1.xpose.msra.mxu0 0.0
    %817 = vmatprep.subr.mxu0 0.0
    %818 = vmatpush1.xpose.msra.mxu0 0.0
    %819 = vmatprep.subr.mxu0 0.0
    %820 = vmatpush1.xpose.msra.mxu0 0.0
    %821 = vmatprep.subr.mxu0 0.0
    %822 = vmatpush1.xpose.msra.mxu0 0.0
    %823 = vmatprep.subr.mxu0 0.0
    %824 = vmatpush1.xpose.msra.mxu0 0.0
    %825 = vmatprep.subr.mxu0 0.0
    %826 = vmatpush1.xpose.msra.mxu0 0.0
    %827 = vmatprep.subr.mxu0 0.0
    %828 = vmatpush1.xpose.msra.mxu0 0.0
    %829 = vmatprep.subr.mxu0 0.0
    %830 = vmatpush1.xpose.msra.mxu0 0.0
    %831 = vmatprep.subr.mxu0 0.0
    %832 = vmatpush1.xpose.msra.mxu0 0.0
    %833 = vmatprep.subr.mxu0 0.0
    %834 = vmatpush1.xpose.msra.mxu0 0.0
    %835 = vmatprep.subr.mxu0 0.0
    %836 = vmatpush1.xpose.msra.mxu0 0.0
    %837 = vmatprep.subr.mxu0 0.0
    %838 = vmatpush1.xpose.msra.mxu0 0.0
    %839 = vmatprep.subr.mxu0 0.0
    %840 = vmatpush1.xpose.msra.mxu0 0.0
    %841 = vmatprep.subr.mxu0 0.0
    %842 = vmatpush1.xpose.msra.mxu0 0.0
    %843 = vmatprep.subr.mxu0 0.0
    %844 = vmatpush1.xpose.msra.mxu0 0.0
    %845 = vmatprep.subr.mxu0 0.0
    %846 = vmatpush1.xpose.msra.mxu0 0.0
    %847 = vmatprep.subr.mxu0 0.0
    %848 = vmatpush1.xpose.msra.mxu0 0.0
    %849 = vmatprep.subr.mxu0 0.0
    %850 = vmatpush1.xpose.msra.mxu0 0.0
    %851 = vmatprep.subr.mxu0 0.0
    %852 = vmatpush1.xpose.msra.mxu0 0.0
    %853 = vmatprep.subr.mxu0 0.0
    %854 = vmatpush1.xpose.msra.mxu0 0.0
    %855 = vmatprep.subr.mxu0 0.0
    %856 = vmatpush1.xpose.msra.mxu0 0.0
    %857 = vmatprep.subr.mxu0 0.0
    %858 = vmatpush1.xpose.msra.mxu0 0.0
    %859 = vmatprep.subr.mxu0 0.0
    %860 = vmatpush1.xpose.msra.mxu0 0.0
    %861 = vmatprep.subr.mxu0 0.0
    %862 = vmatpush1.xpose.msra.mxu0 0.0
    %863 = vmatprep.subr.mxu0 0.0
    %864 = vmatpush1.xpose.msra.mxu0 0.0
    %865 = vmatprep.subr.mxu0 0.0
    %866 = vmatpush1.xpose.msra.mxu0 0.0
    %867 = vmatprep.subr.mxu0 0.0
    %868 = vmatpush1.xpose.msra.mxu0 0.0
    %869 = vmatprep.mubr.f32.mxu0 0.0
    %870 = vmatmul.mubr.f32.gmra.mrb[0].mxu0 %v800
    %v871 = vpop.f32.mrb[0].mxu0
    %v872 = vadd.f32 0.0, %v871
    %v873 = vpop.f32.mrb[0].mxu0
    %874 = vdwg.mxu0
    %v876 = vsel %vm798, %v485, 0
    %v879 = vsel %vm798, %v640, 0
    %881 = vmatprep.subr.mxu0 0.0
    %882 = vmatpush1.xpose.msra.mxu0 %v879
    %883 = vmatprep.subr.mxu0 0.0
    %884 = vmatpush1.xpose.msra.mxu0 0.0
    %885 = vmatprep.subr.mxu0 0.0
    %886 = vmatpush1.xpose.msra.mxu0 0.0
    %887 = vmatprep.subr.mxu0 0.0
    %888 = vmatpush1.xpose.msra.mxu0 0.0
    %889 = vmatprep.subr.mxu0 0.0
    %890 = vmatpush1.xpose.msra.mxu0 0.0
    %891 = vmatprep.subr.mxu0 0.0
    %892 = vmatpush1.xpose.msra.mxu0 0.0
    %893 = vmatprep.subr.mxu0 0.0
    %894 = vmatpush1.xpose.msra.mxu0 0.0
    %895 = vmatprep.subr.mxu0 0.0
    %896 = vmatpush1.xpose.msra.mxu0 0.0
    %897 = vmatprep.subr.mxu0 0.0
    %898 = vmatpush1.xpose.msra.mxu0 0.0
    %899 = vmatprep.subr.mxu0 0.0
    %900 = vmatpush1.xpose.msra.mxu0 0.0
    %901 = vmatprep.subr.mxu0 0.0
    %902 = vmatpush1.xpose.msra.mxu0 0.0
    %903 = vmatprep.subr.mxu0 0.0
    %904 = vmatpush1.xpose.msra.mxu0 0.0
    %905 = vmatprep.subr.mxu0 0.0
    %906 = vmatpush1.xpose.msra.mxu0 0.0
    %907 = vmatprep.subr.mxu0 0.0
    %908 = vmatpush1.xpose.msra.mxu0 0.0
    %909 = vmatprep.subr.mxu0 0.0
    %910 = vmatpush1.xpose.msra.mxu0 0.0
    %911 = vmatprep.subr.mxu0 0.0
    %912 = vmatpush1.xpose.msra.mxu0 0.0
    %913 = vmatprep.subr.mxu0 0.0
    %914 = vmatpush1.xpose.msra.mxu0 0.0
    %915 = vmatprep.subr.mxu0 0.0
    %916 = vmatpush1.xpose.msra.mxu0 0.0
    %917 = vmatprep.subr.mxu0 0.0
    %918 = vmatpush1.xpose.msra.mxu0 0.0
    %919 = vmatprep.subr.mxu0 0.0
    %920 = vmatpush1.xpose.msra.mxu0 0.0
    %921 = vmatprep.subr.mxu0 0.0
    %922 = vmatpush1.xpose.msra.mxu0 0.0
    %923 = vmatprep.subr.mxu0 0.0
    %924 = vmatpush1.xpose.msra.mxu0 0.0
    %925 = vmatprep.subr.mxu0 0.0
    %926 = vmatpush1.xpose.msra.mxu0 0.0
    %927 = vmatprep.subr.mxu0 0.0
    %928 = vmatpush1.xpose.msra.mxu0 0.0
    %929 = vmatprep.subr.mxu0 0.0
    %930 = vmatpush1.xpose.msra.mxu0 0.0
    %931 = vmatprep.subr.mxu0 0.0
    %932 = vmatpush1.xpose.msra.mxu0 0.0
    %933 = vmatprep.subr.mxu0 0.0
    %934 = vmatpush1.xpose.msra.mxu0 0.0
    %935 = vmatprep.subr.mxu0 0.0
    %936 = vmatpush1.xpose.msra.mxu0 0.0
    %937 = vmatprep.subr.mxu0 0.0
    %938 = vmatpush1.xpose.msra.mxu0 0.0
    %939 = vmatprep.subr.mxu0 0.0
    %940 = vmatpush1.xpose.msra.mxu0 0.0
    %941 = vmatprep.subr.mxu0 0.0
    %942 = vmatpush1.xpose.msra.mxu0 0.0
    %943 = vmatprep.subr.mxu0 0.0
    %944 = vmatpush1.xpose.msra.mxu0 0.0
    %945 = vmatprep.mubr.f32.mxu0 0.0
    %946 = vmatmul.mubr.f32.gmra.mrb[0].mxu0 %v876
    %v947 = vpop.f32.mrb[0].mxu0
    %v948 = vadd.f32 0.0, %v947
    %v949 = vpop.f32.mrb[0].mxu0
    %950 = vdwg.mxu0
    %v952 = vsel %vm798, %v486, 0
    %v955 = vsel %vm798, %v641, 0
    %957 = vmatprep.subr.mxu0 0.0
    %958 = vmatpush1.xpose.msra.mxu0 %v955
    %959 = vmatprep.subr.mxu0 0.0
    %960 = vmatpush1.xpose.msra.mxu0 0.0
    %961 = vmatprep.subr.mxu0 0.0
    %962 = vmatpush1.xpose.msra.mxu0 0.0
    %963 = vmatprep.subr.mxu0 0.0
    %964 = vmatpush1.xpose.msra.mxu0 0.0
    %965 = vmatprep.subr.mxu0 0.0
    %966 = vmatpush1.xpose.msra.mxu0 0.0
    %967 = vmatprep.subr.mxu0 0.0
    %968 = vmatpush1.xpose.msra.mxu0 0.0
    %969 = vmatprep.subr.mxu0 0.0
    %970 = vmatpush1.xpose.msra.mxu0 0.0
    %971 = vmatprep.subr.mxu0 0.0
    %972 = vmatpush1.xpose.msra.mxu0 0.0
    %973 = vmatprep.subr.mxu0 0.0
    %974 = vmatpush1.xpose.msra.mxu0 0.0
    %975 = vmatprep.subr.mxu0 0.0
    %976 = vmatpush1.xpose.msra.mxu0 0.0
    %977 = vmatprep.subr.mxu0 0.0
    %978 = vmatpush1.xpose.msra.mxu0 0.0
    %979 = vmatprep.subr.mxu0 0.0
    %980 = vmatpush1.xpose.msra.mxu0 0.0
    %981 = vmatprep.subr.mxu0 0.0
    %982 = vmatpush1.xpose.msra.mxu0 0.0
    %983 = vmatprep.subr.mxu0 0.0
    %984 = vmatpush1.xpose.msra.mxu0 0.0
    %985 = vmatprep.subr.mxu0 0.0
    %986 = vmatpush1.xpose.msra.mxu0 0.0
    %987 = vmatprep.subr.mxu0 0.0
    %988 = vmatpush1.xpose.msra.mxu0 0.0
    %989 = vmatprep.subr.mxu0 0.0
    %990 = vmatpush1.xpose.msra.mxu0 0.0
    %991 = vmatprep.subr.mxu0 0.0
    %992 = vmatpush1.xpose.msra.mxu0 0.0
    %993 = vmatprep.subr.mxu0 0.0
    %994 = vmatpush1.xpose.msra.mxu0 0.0
    %995 = vmatprep.subr.mxu0 0.0
    %996 = vmatpush1.xpose.msra.mxu0 0.0
    %997 = vmatprep.subr.mxu0 0.0
    %998 = vmatpush1.xpose.msra.mxu0 0.0
    %999 = vmatprep.subr.mxu0 0.0
    %1000 = vmatpush1.xpose.msra.mxu0 0.0
    %1001 = vmatprep.subr.mxu0 0.0
    %1002 = vmatpush1.xpose.msra.mxu0 0.0
    %1003 = vmatprep.subr.mxu0 0.0
    %1004 = vmatpush1.xpose.msra.mxu0 0.0
    %1005 = vmatprep.subr.mxu0 0.0
    %1006 = vmatpush1.xpose.msra.mxu0 0.0
    %1007 = vmatprep.subr.mxu0 0.0
    %1008 = vmatpush1.xpose.msra.mxu0 0.0
    %1009 = vmatprep.subr.mxu0 0.0
    %1010 = vmatpush1.xpose.msra.mxu0 0.0
    %1011 = vmatprep.subr.mxu0 0.0
    %1012 = vmatpush1.xpose.msra.mxu0 0.0
    %1013 = vmatprep.subr.mxu0 0.0
    %1014 = vmatpush1.xpose.msra.mxu0 0.0
    %1015 = vmatprep.subr.mxu0 0.0
    %1016 = vmatpush1.xpose.msra.mxu0 0.0
    %1017 = vmatprep.subr.mxu0 0.0
    %1018 = vmatpush1.xpose.msra.mxu0 0.0
    %1019 = vmatprep.subr.mxu0 0.0
    %1020 = vmatpush1.xpose.msra.mxu0 0.0
    %1021 = vmatprep.mubr.f32.mxu0 0.0
    %1022 = vmatmul.mubr.f32.gmra.mrb[0].mxu0 %v952
    %v1023 = vpop.f32.mrb[0].mxu0
    %v1024 = vadd.f32 0.0, %v1023
    %v1025 = vpop.f32.mrb[0].mxu0
    %1026 = vdwg.mxu0
    %v1028 = vsel %vm798, %v487, 0
    %v1031 = vsel %vm798, %v642, 0
    %1033 = vmatprep.subr.mxu0 0.0
    %1034 = vmatpush1.xpose.msra.mxu0 %v1031
    %1035 = vmatprep.subr.mxu0 0.0
    %1036 = vmatpush1.xpose.msra.mxu0 0.0
    %1037 = vmatprep.subr.mxu0 0.0
    %1038 = vmatpush1.xpose.msra.mxu0 0.0
    %1039 = vmatprep.subr.mxu0 0.0
    %1040 = vmatpush1.xpose.msra.mxu0 0.0
    %1041 = vmatprep.subr.mxu0 0.0
    %1042 = vmatpush1.xpose.msra.mxu0 0.0
    %1043 = vmatprep.subr.mxu0 0.0
    %1044 = vmatpush1.xpose.msra.mxu0 0.0
    %1045 = vmatprep.subr.mxu0 0.0
    %1046 = vmatpush1.xpose.msra.mxu0 0.0
    %1047 = vmatprep.subr.mxu0 0.0
    %1048 = vmatpush1.xpose.msra.mxu0 0.0
    %1049 = vmatprep.subr.mxu0 0.0
    %1050 = vmatpush1.xpose.msra.mxu0 0.0
    %1051 = vmatprep.subr.mxu0 0.0
    %1052 = vmatpush1.xpose.msra.mxu0 0.0
    %1053 = vmatprep.subr.mxu0 0.0
    %1054 = vmatpush1.xpose.msra.mxu0 0.0
    %1055 = vmatprep.subr.mxu0 0.0
    %1056 = vmatpush1.xpose.msra.mxu0 0.0
    %1057 = vmatprep.subr.mxu0 0.0
    %1058 = vmatpush1.xpose.msra.mxu0 0.0
    %1059 = vmatprep.subr.mxu0 0.0
    %1060 = vmatpush1.xpose.msra.mxu0 0.0
    %1061 = vmatprep.subr.mxu0 0.0
    %1062 = vmatpush1.xpose.msra.mxu0 0.0
    %1063 = vmatprep.subr.mxu0 0.0
    %1064 = vmatpush1.xpose.msra.mxu0 0.0
    %1065 = vmatprep.subr.mxu0 0.0
    %1066 = vmatpush1.xpose.msra.mxu0 0.0
    %1067 = vmatprep.subr.mxu0 0.0
    %1068 = vmatpush1.xpose.msra.mxu0 0.0
    %1069 = vmatprep.subr.mxu0 0.0
    %1070 = vmatpush1.xpose.msra.mxu0 0.0
    %1071 = vmatprep.subr.mxu0 0.0
    %1072 = vmatpush1.xpose.msra.mxu0 0.0
    %1073 = vmatprep.subr.mxu0 0.0
    %1074 = vmatpush1.xpose.msra.mxu0 0.0
    %1075 = vmatprep.subr.mxu0 0.0
    %1076 = vmatpush1.xpose.msra.mxu0 0.0
    %1077 = vmatprep.subr.mxu0 0.0
    %1078 = vmatpush1.xpose.msra.mxu0 0.0
    %1079 = vmatprep.subr.mxu0 0.0
    %1080 = vmatpush1.xpose.msra.mxu0 0.0
    %1081 = vmatprep.subr.mxu0 0.0
    %1082 = vmatpush1.xpose.msra.mxu0 0.0
    %1083 = vmatprep.subr.mxu0 0.0
    %1084 = vmatpush1.xpose.msra.mxu0 0.0
    %1085 = vmatprep.subr.mxu0 0.0
    %1086 = vmatpush1.xpose.msra.mxu0 0.0
    %1087 = vmatprep.subr.mxu0 0.0
    %1088 = vmatpush1.xpose.msra.mxu0 0.0
    %1089 = vmatprep.subr.mxu0 0.0
    %1090 = vmatpush1.xpose.msra.mxu0 0.0
    %1091 = vmatprep.subr.mxu0 0.0
    %1092 = vmatpush1.xpose.msra.mxu0 0.0
    %1093 = vmatprep.subr.mxu0 0.0
    %1094 = vmatpush1.xpose.msra.mxu0 0.0
    %1095 = vmatprep.subr.mxu0 0.0
    %1096 = vmatpush1.xpose.msra.mxu0 0.0
    %1097 = vmatprep.mubr.f32.mxu0 0.0
    %1098 = vmatmul.mubr.f32.gmra.mrb[0].mxu0 %v1028
    %v1099 = vpop.f32.mrb[0].mxu0
    %v1100 = vadd.f32 0.0, %v1099
    %v1101 = vpop.f32.mrb[0].mxu0
    %1102 = vdwg.mxu0
    %v1103 = vmul.f32 %v872, 0.35355338
    %v1104 = vmul.f32 %v948, 0.35355338
    %v1105 = vmul.f32 %v1024, 0.35355338
    %v1106 = vmul.f32 %v1100, 0.35355338
    %v1107 = vadd.f32 %v1103, %v230
    %v1108 = vadd.f32 %v1104, %v230
    %v1109 = vadd.f32 %v1105, %v230
    %v1110 = vadd.f32 %v1106, %v230
    %v1111 = vsel %vm798, %v1107, -inf
    %1112 = vmax.xlane.f32.xlu0 %v1111
    %v1113 = vpop.xlane.xlu0 %1112
    %v1114 = vsel %vm798, %v1108, -inf
    %1115 = vmax.xlane.f32.xlu0 %v1114
    %v1116 = vpop.xlane.xlu0 %1115
    %v1117 = vsel %vm798, %v1109, -inf
    %1118 = vmax.xlane.f32.xlu0 %v1117
    %v1119 = vpop.xlane.xlu0 %1118
    %v1120 = vsel %vm798, %v1110, -inf
    %1121 = vmax.xlane.f32.xlu0 %v1120
    %v1122 = vpop.xlane.xlu0 %1121
    %v1123 = vsub.f32 %v1107, %v1113
    %v1124 = vsub.f32 %v1108, %v1116
    %v1125 = vsub.f32 %v1109, %v1119
    %v1126 = vsub.f32 %v1110, %v1122
    %v1127 = vmul.f32 %v1123, 1.442695
    %v1128 = vpow.pop %v1127
    %v1129 = vmul.f32 %v1124, 1.442695
    %v1130 = vpow.pop %v1129
    %v1131 = vmul.f32 %v1125, 1.442695
    %v1132 = vpow.pop %v1131
    %v1133 = vmul.f32 %v1126, 1.442695
    %v1134 = vpow.pop %v1133
    %v1135 = vsel %vm798, %v1128, 0.0
    %1136 = vadd.xlane.f32.xlu0 %v1135
    %v1137 = vpop.xlane.xlu0 %1136
    %v1138 = vsel %vm798, %v1130, 0.0
    %1139 = vadd.xlane.f32.xlu0 %v1138
    %v1140 = vpop.xlane.xlu0 %1139
    %v1141 = vsel %vm798, %v1132, 0.0
    %1142 = vadd.xlane.f32.xlu0 %v1141
    %v1143 = vpop.xlane.xlu0 %1142
    %v1144 = vsel %vm798, %v1134, 0.0
    %1145 = vadd.xlane.f32.xlu0 %v1144
    %v1146 = vpop.xlane.xlu0 %1145
    %v1147 = vrcp.pop %v1137
    %v1148 = vrcp.pop %v1140
    %v1149 = vrcp.pop %v1143
    %v1150 = vrcp.pop %v1146
    %v1151 = vmul.f32 %v1128, %v1147
    %v1152 = vmul.f32 %v1130, %v1148
    %v1153 = vmul.f32 %v1132, %v1149
    %v1154 = vmul.f32 %v1134, %v1150
    %v1156 = vsel %vm798, %v1151, 0
    %1158 = vmatprep.subr.mxu0 0.0
    %1159 = vmatpush1.msra.mxu0 %v794
    %1160 = vmatprep.subr.mxu0 0.0
    %1161 = vmatpush1.msra.mxu0 0.0
    %1162 = vmatprep.subr.mxu0 0.0
    %1163 = vmatpush1.msra.mxu0 0.0
    %1164 = vmatprep.subr.mxu0 0.0
    %1165 = vmatpush1.msra.mxu0 0.0
    %1166 = vmatprep.subr.mxu0 0.0
    %1167 = vmatpush1.msra.mxu0 0.0
    %1168 = vmatprep.subr.mxu0 0.0
    %1169 = vmatpush1.msra.mxu0 0.0
    %1170 = vmatprep.subr.mxu0 0.0
    %1171 = vmatpush1.msra.mxu0 0.0
    %1172 = vmatprep.subr.mxu0 0.0
    %1173 = vmatpush1.msra.mxu0 0.0
    %1174 = vmatprep.subr.mxu0 0.0
    %1175 = vmatpush1.msra.mxu0 0.0
    %1176 = vmatprep.subr.mxu0 0.0
    %1177 = vmatpush1.msra.mxu0 0.0
    %1178 = vmatprep.subr.mxu0 0.0
    %1179 = vmatpush1.msra.mxu0 0.0
    %1180 = vmatprep.subr.mxu0 0.0
    %1181 = vmatpush1.msra.mxu0 0.0
    %1182 = vmatprep.subr.mxu0 0.0
    %1183 = vmatpush1.msra.mxu0 0.0
    %1184 = vmatprep.subr.mxu0 0.0
    %1185 = vmatpush1.msra.mxu0 0.0
    %1186 = vmatprep.subr.mxu0 0.0
    %1187 = vmatpush1.msra.mxu0 0.0
    %1188 = vmatprep.subr.mxu0 0.0
    %1189 = vmatpush1.msra.mxu0 0.0
    %1190 = vmatprep.subr.mxu0 0.0
    %1191 = vmatpush1.msra.mxu0 0.0
    %1192 = vmatprep.subr.mxu0 0.0
    %1193 = vmatpush1.msra.mxu0 0.0
    %1194 = vmatprep.subr.mxu0 0.0
    %1195 = vmatpush1.msra.mxu0 0.0
    %1196 = vmatprep.subr.mxu0 0.0
    %1197 = vmatpush1.msra.mxu0 0.0
    %1198 = vmatprep.subr.mxu0 0.0
    %1199 = vmatpush1.msra.mxu0 0.0
    %1200 = vmatprep.subr.mxu0 0.0
    %1201 = vmatpush1.msra.mxu0 0.0
    %1202 = vmatprep.subr.mxu0 0.0
    %1203 = vmatpush1.msra.mxu0 0.0
    %1204 = vmatprep.subr.mxu0 0.0
    %1205 = vmatpush1.msra.mxu0 0.0
    %1206 = vmatprep.subr.mxu0 0.0
    %1207 = vmatpush1.msra.mxu0 0.0
    %1208 = vmatprep.subr.mxu0 0.0
    %1209 = vmatpush1.msra.mxu0 0.0
    %1210 = vmatprep.subr.mxu0 0.0
    %1211 = vmatpush1.msra.mxu0 0.0
    %1212 = vmatprep.subr.mxu0 0.0
    %1213 = vmatpush1.msra.mxu0 0.0
    %1214 = vmatprep.subr.mxu0 0.0
    %1215 = vmatpush1.msra.mxu0 0.0
    %1216 = vmatprep.subr.mxu0 0.0
    %1217 = vmatpush1.msra.mxu0 0.0
    %1218 = vmatprep.subr.mxu0 0.0
    %1219 = vmatpush1.msra.mxu0 0.0
    %1220 = vmatprep.subr.mxu0 0.0
    %1221 = vmatpush1.msra.mxu0 0.0
    %1222 = vmatprep.mubr.f32.mxu0 0.0
    %1223 = vmatmul.mubr.f32.gmra.mrb[0].mxu0 %v1156
    %v1224 = vpop.f32.mrb[0].mxu0
    %v1225 = vadd.f32 0.0, %v1224
    %v1226 = vpop.f32.mrb[0].mxu0
    %1227 = vdwg.mxu0
    %v1229 = vsel %vm798, %v1152, 0
    %1231 = vmatprep.subr.mxu0 0.0
    %1232 = vmatpush1.msra.mxu0 %v795
    %1233 = vmatprep.subr.mxu0 0.0
    %1234 = vmatpush1.msra.mxu0 0.0
    %1235 = vmatprep.subr.mxu0 0.0
    %1236 = vmatpush1.msra.mxu0 0.0
    %1237 = vmatprep.subr.mxu0 0.0
    %1238 = vmatpush1.msra.mxu0 0.0
    %1239 = vmatprep.subr.mxu0 0.0
    %1240 = vmatpush1.msra.mxu0 0.0
    %1241 = vmatprep.subr.mxu0 0.0
    %1242 = vmatpush1.msra.mxu0 0.0
    %1243 = vmatprep.subr.mxu0 0.0
    %1244 = vmatpush1.msra.mxu0 0.0
    %1245 = vmatprep.subr.mxu0 0.0
    %1246 = vmatpush1.msra.mxu0 0.0
    %1247 = vmatprep.subr.mxu0 0.0
    %1248 = vmatpush1.msra.mxu0 0.0
    %1249 = vmatprep.subr.mxu0 0.0
    %1250 = vmatpush1.msra.mxu0 0.0
    %1251 = vmatprep.subr.mxu0 0.0
    %1252 = vmatpush1.msra.mxu0 0.0
    %1253 = vmatprep.subr.mxu0 0.0
    %1254 = vmatpush1.msra.mxu0 0.0
    %1255 = vmatprep.subr.mxu0 0.0
    %1256 = vmatpush1.msra.mxu0 0.0
    %1257 = vmatprep.subr.mxu0 0.0
    %1258 = vmatpush1.msra.mxu0 0.0
    %1259 = vmatprep.subr.mxu0 0.0
    %1260 = vmatpush1.msra.mxu0 0.0
    %1261 = vmatprep.subr.mxu0 0.0
    %1262 = vmatpush1.msra.mxu0 0.0
    %1263 = vmatprep.subr.mxu0 0.0
    %1264 = vmatpush1.msra.mxu0 0.0
    %1265 = vmatprep.subr.mxu0 0.0
    %1266 = vmatpush1.msra.mxu0 0.0
    %1267 = vmatprep.subr.mxu0 0.0
    %1268 = vmatpush1.msra.mxu0 0.0
    %1269 = vmatprep.subr.mxu0 0.0
    %1270 = vmatpush1.msra.mxu0 0.0
    %1271 = vmatprep.subr.mxu0 0.0
    %1272 = vmatpush1.msra.mxu0 0.0
    %1273 = vmatprep.subr.mxu0 0.0
    %1274 = vmatpush1.msra.mxu0 0.0
    %1275 = vmatprep.subr.mxu0 0.0
    %1276 = vmatpush1.msra.mxu0 0.0
    %1277 = vmatprep.subr.mxu0 0.0
    %1278 = vmatpush1.msra.mxu0 0.0
    %1279 = vmatprep.subr.mxu0 0.0
    %1280 = vmatpush1.msra.mxu0 0.0
    %1281 = vmatprep.subr.mxu0 0.0
    %1282 = vmatpush1.msra.mxu0 0.0
    %1283 = vmatprep.subr.mxu0 0.0
    %1284 = vmatpush1.msra.mxu0 0.0
    %1285 = vmatprep.subr.mxu0 0.0
    %1286 = vmatpush1.msra.mxu0 0.0
    %1287 = vmatprep.subr.mxu0 0.0
    %1288 = vmatpush1.msra.mxu0 0.0
    %1289 = vmatprep.subr.mxu0 0.0
    %1290 = vmatpush1.msra.mxu0 0.0
    %1291 = vmatprep.subr.mxu0 0.0
    %1292 = vmatpush1.msra.mxu0 0.0
    %1293 = vmatprep.subr.mxu0 0.0
    %1294 = vmatpush1.msra.mxu0 0.0
    %1295 = vmatprep.mubr.f32.mxu0 0.0
    %1296 = vmatmul.mubr.f32.gmra.mrb[0].mxu0 %v1229
    %v1297 = vpop.f32.mrb[0].mxu0
    %v1298 = vadd.f32 0.0, %v1297
    %v1299 = vpop.f32.mrb[0].mxu0
    %1300 = vdwg.mxu0
    %v1302 = vsel %vm798, %v1153, 0
    %1304 = vmatprep.subr.mxu0 0.0
    %1305 = vmatpush1.msra.mxu0 %v796
    %1306 = vmatprep.subr.mxu0 0.0
    %1307 = vmatpush1.msra.mxu0 0.0
    %1308 = vmatprep.subr.mxu0 0.0
    %1309 = vmatpush1.msra.mxu0 0.0
    %1310 = vmatprep.subr.mxu0 0.0
    %1311 = vmatpush1.msra.mxu0 0.0
    %1312 = vmatprep.subr.mxu0 0.0
    %1313 = vmatpush1.msra.mxu0 0.0
    %1314 = vmatprep.subr.mxu0 0.0
    %1315 = vmatpush1.msra.mxu0 0.0
    %1316 = vmatprep.subr.mxu0 0.0
    %1317 = vmatpush1.msra.mxu0 0.0
    %1318 = vmatprep.subr.mxu0 0.0
    %1319 = vmatpush1.msra.mxu0 0.0
    %1320 = vmatprep.subr.mxu0 0.0
    %1321 = vmatpush1.msra.mxu0 0.0
    %1322 = vmatprep.subr.mxu0 0.0
    %1323 = vmatpush1.msra.mxu0 0.0
    %1324 = vmatprep.subr.mxu0 0.0
    %1325 = vmatpush1.msra.mxu0 0.0
    %1326 = vmatprep.subr.mxu0 0.0
    %1327 = vmatpush1.msra.mxu0 0.0
    %1328 = vmatprep.subr.mxu0 0.0
    %1329 = vmatpush1.msra.mxu0 0.0
    %1330 = vmatprep.subr.mxu0 0.0
    %1331 = vmatpush1.msra.mxu0 0.0
    %1332 = vmatprep.subr.mxu0 0.0
    %1333 = vmatpush1.msra.mxu0 0.0
    %1334 = vmatprep.subr.mxu0 0.0
    %1335 = vmatpush1.msra.mxu0 0.0
    %1336 = vmatprep.subr.mxu0 0.0
    %1337 = vmatpush1.msra.mxu0 0.0
    %1338 = vmatprep.subr.mxu0 0.0
    %1339 = vmatpush1.msra.mxu0 0.0
    %1340 = vmatprep.subr.mxu0 0.0
    %1341 = vmatpush1.msra.mxu0 0.0
    %1342 = vmatprep.subr.mxu0 0.0
    %1343 = vmatpush1.msra.mxu0 0.0
    %1344 = vmatprep.subr.mxu0 0.0
    %1345 = vmatpush1.msra.mxu0 0.0
    %1346 = vmatprep.subr.mxu0 0.0
    %1347 = vmatpush1.msra.mxu0 0.0
    %1348 = vmatprep.subr.mxu0 0.0
    %1349 = vmatpush1.msra.mxu0 0.0
    %1350 = vmatprep.subr.mxu0 0.0
    %1351 = vmatpush1.msra.mxu0 0.0
    %1352 = vmatprep.subr.mxu0 0.0
    %1353 = vmatpush1.msra.mxu0 0.0
    %1354 = vmatprep.subr.mxu0 0.0
    %1355 = vmatpush1.msra.mxu0 0.0
    %1356 = vmatprep.subr.mxu0 0.0
    %1357 = vmatpush1.msra.mxu0 0.0
    %1358 = vmatprep.subr.mxu0 0.0
    %1359 = vmatpush1.msra.mxu0 0.0
    %1360 = vmatprep.subr.mxu0 0.0
    %1361 = vmatpush1.msra.mxu0 0.0
    %1362 = vmatprep.subr.mxu0 0.0
    %1363 = vmatpush1.msra.mxu0 0.0
    %1364 = vmatprep.subr.mxu0 0.0
    %1365 = vmatpush1.msra.mxu0 0.0
    %1366 = vmatprep.subr.mxu0 0.0
    %1367 = vmatpush1.msra.mxu0 0.0
    %1368 = vmatprep.mubr.f32.mxu0 0.0
    %1369 = vmatmul.mubr.f32.gmra.mrb[0].mxu0 %v1302
    %v1370 = vpop.f32.mrb[0].mxu0
    %v1371 = vadd.f32 0.0, %v1370
    %v1372 = vpop.f32.mrb[0].mxu0
    %1373 = vdwg.mxu0
    %v1375 = vsel %vm798, %v1154, 0
    %1377 = vmatprep.subr.mxu0 0.0
    %1378 = vmatpush1.msra.mxu0 %v797
    %1379 = vmatprep.subr.mxu0 0.0
    %1380 = vmatpush1.msra.mxu0 0.0
    %1381 = vmatprep.subr.mxu0 0.0
    %1382 = vmatpush1.msra.mxu0 0.0
    %1383 = vmatprep.subr.mxu0 0.0
    %1384 = vmatpush1.msra.mxu0 0.0
    %1385 = vmatprep.subr.mxu0 0.0
    %1386 = vmatpush1.msra.mxu0 0.0
    %1387 = vmatprep.subr.mxu0 0.0
    %1388 = vmatpush1.msra.mxu0 0.0
    %1389 = vmatprep.subr.mxu0 0.0
    %1390 = vmatpush1.msra.mxu0 0.0
    %1391 = vmatprep.subr.mxu0 0.0
    %1392 = vmatpush1.msra.mxu0 0.0
    %1393 = vmatprep.subr.mxu0 0.0
    %1394 = vmatpush1.msra.mxu0 0.0
    %1395 = vmatprep.subr.mxu0 0.0
    %1396 = vmatpush1.msra.mxu0 0.0
    %1397 = vmatprep.subr.mxu0 0.0
    %1398 = vmatpush1.msra.mxu0 0.0
    %1399 = vmatprep.subr.mxu0 0.0
    %1400 = vmatpush1.msra.mxu0 0.0
    %1401 = vmatprep.subr.mxu0 0.0
    %1402 = vmatpush1.msra.mxu0 0.0
    %1403 = vmatprep.subr.mxu0 0.0
    %1404 = vmatpush1.msra.mxu0 0.0
    %1405 = vmatprep.subr.mxu0 0.0
    %1406 = vmatpush1.msra.mxu0 0.0
    %1407 = vmatprep.subr.mxu0 0.0
    %1408 = vmatpush1.msra.mxu0 0.0
    %1409 = vmatprep.subr.mxu0 0.0
    %1410 = vmatpush1.msra.mxu0 0.0
    %1411 = vmatprep.subr.mxu0 0.0
    %1412 = vmatpush1.msra.mxu0 0.0
    %1413 = vmatprep.subr.mxu0 0.0
    %1414 = vmatpush1.msra.mxu0 0.0
    %1415 = vmatprep.subr.mxu0 0.0
    %1416 = vmatpush1.msra.mxu0 0.0
    %1417 = vmatprep.subr.mxu0 0.0
    %1418 = vmatpush1.msra.mxu0 0.0
    %1419 = vmatprep.subr.mxu0 0.0
    %1420 = vmatpush1.msra.mxu0 0.0
    %1421 = vmatprep.subr.mxu0 0.0
    %1422 = vmatpush1.msra.mxu0 0.0
    %1423 = vmatprep.subr.mxu0 0.0
    %1424 = vmatpush1.msra.mxu0 0.0
    %1425 = vmatprep.subr.mxu0 0.0
    %1426 = vmatpush1.msra.mxu0 0.0
    %1427 = vmatprep.subr.mxu0 0.0
    %1428 = vmatpush1.msra.mxu0 0.0
    %1429 = vmatprep.subr.mxu0 0.0
    %1430 = vmatpush1.msra.mxu0 0.0
    %1431 = vmatprep.subr.mxu0 0.0
    %1432 = vmatpush1.msra.mxu0 0.0
    %1433 = vmatprep.subr.mxu0 0.0
    %1434 = vmatpush1.msra.mxu0 0.0
    %1435 = vmatprep.subr.mxu0 0.0
    %1436 = vmatpush1.msra.mxu0 0.0
    %1437 = vmatprep.subr.mxu0 0.0
    %1438 = vmatpush1.msra.mxu0 0.0
    %1439 = vmatprep.subr.mxu0 0.0
    %1440 = vmatpush1.msra.mxu0 0.0
    %1441 = vmatprep.mubr.f32.mxu0 0.0
    %1442 = vmatmul.mubr.f32.gmra.mrb[0].mxu0 %v1375
    %v1443 = vpop.f32.mrb[0].mxu0
    %v1444 = vadd.f32 0.0, %v1443
    %v1445 = vpop.f32.mrb[0].mxu0
    %1446 = vdwg.mxu0
    %v1447 = vcombine.low %v1225, %v1371
    %v1448 = vcombine.high %v1225, %v1371
    %v1450 = vunpack.c.l.s4 1983009808
    %v1451 = vunpack.c.0.s8 %v1450
    %v1452 = vlaneseq
    %v1453 = vshrl.u32 %v1452, 7
    %v1454 = vsub.s32 %v1451, %v1453
    %v1455 = vrot.slane %v1447, %v1454
    %v1457 = vunpack.c.l.s4 1983009808
    %v1458 = vunpack.c.0.s8 %v1457
    %v1459 = vlaneseq
    %v1460 = vshrl.u32 %v1459, 7
    %v1461 = vsub.s32 %v1458, %v1460
    %v1462 = vrot.slane %v1448, %v1461
    %v1463 = vcombine.low %v1298, %v1444
    %v1464 = vcombine.high %v1298, %v1444
    %v1466 = vunpack.c.l.s4 1983009808
    %v1467 = vunpack.c.0.s8 %v1466
    %v1468 = vlaneseq
    %v1469 = vshrl.u32 %v1468, 7
    %v1470 = vsub.s32 %v1467, %v1469
    %v1471 = vrot.slane %v1463, %v1470
    %v1473 = vunpack.c.l.s4 1983009808
    %v1474 = vunpack.c.0.s8 %v1473
    %v1475 = vlaneseq
    %v1476 = vshrl.u32 %v1475, 7
    %v1477 = vsub.s32 %v1474, %v1476
    %v1478 = vrot.slane %v1464, %v1477
    %v1479 = vcombine.low %v1455, %v1471
    %v1480 = vcombine.high %v1455, %v1471
    %v1482 = vunpack.c.l.s4 1934713408
    %v1483 = vunpack.c.0.s8 %v1482
    %v1484 = vlaneseq
    %v1485 = vshrl.u32 %v1484, 7
    %v1486 = vsub.s32 %v1483, %v1485
    %v1487 = vrot.slane %v1479, %v1486
    %v1489 = vunpack.c.l.s4 1934713408
    %v1490 = vunpack.c.0.s8 %v1489
    %v1491 = vlaneseq
    %v1492 = vshrl.u32 %v1491, 7
    %v1493 = vsub.s32 %v1490, %v1492
    %v1494 = vrot.slane %v1480, %v1493
    %v1495 = vcombine.low %v1462, %v1478
    %v1496 = vcombine.high %v1462, %v1478
    %v1498 = vunpack.c.l.s4 1934713408
    %v1499 = vunpack.c.0.s8 %v1498
    %v1500 = vlaneseq
    %v1501 = vshrl.u32 %v1500, 7
    %v1502 = vsub.s32 %v1499, %v1501
    %v1503 = vrot.slane %v1495, %v1502
    %v1505 = vunpack.c.l.s4 1934713408
    %v1506 = vunpack.c.0.s8 %v1505
    %v1507 = vlaneseq
    %v1508 = vshrl.u32 %v1507, 7
    %v1509 = vsub.s32 %v1506, %v1508
    %v1510 = vrot.slane %v1496, %v1509
    %v1511 = vcombine.high %v1487, 0.0
    %v1512 = vcombine.high %v1494, 0.0
    %v1513 = vcombine.high %v1503, 0.0
    %v1514 = vcombine.high %v1510, 0.0
    %v1515 = vcombine.low %v1487, %v1494
    %v1517 = vunpack.c.l.s4 1983009808
    %v1518 = vunpack.c.0.s8 %v1517
    %v1519 = vlaneseq
    %v1520 = vshrl.u32 %v1519, 7
    %v1521 = vsub.s32 %v1518, %v1520
    %v1522 = vrot.slane %v1515, %v1521
    %v1523 = vcombine.low %v1511, %v1512
    %v1525 = vunpack.c.l.s4 1983009808
    %v1526 = vunpack.c.0.s8 %v1525
    %v1527 = vlaneseq
    %v1528 = vshrl.u32 %v1527, 7
    %v1529 = vsub.s32 %v1526, %v1528
    %v1530 = vrot.slane %v1523, %v1529
    %v1531 = vcombine.low %v1503, %v1510
    %v1533 = vunpack.c.l.s4 1983009808
    %v1534 = vunpack.c.0.s8 %v1533
    %v1535 = vlaneseq
    %v1536 = vshrl.u32 %v1535, 7
    %v1537 = vsub.s32 %v1534, %v1536
    %v1538 = vrot.slane %v1531, %v1537
    %v1539 = vcombine.low %v1513, %v1514
    %v1541 = vunpack.c.l.s4 1983009808
    %v1542 = vunpack.c.0.s8 %v1541
    %v1543 = vlaneseq
    %v1544 = vshrl.u32 %v1543, 7
    %v1545 = vsub.s32 %v1542, %v1544
    %v1546 = vrot.slane %v1539, %v1545
    %v1547 = vcombine.low %v1522, %v1530
    %v1548 = vcombine.high %v1522, %v1530
    %v1550 = vunpack.c.l.s4 1934713408
    %v1551 = vunpack.c.0.s8 %v1550
    %v1552 = vlaneseq
    %v1553 = vshrl.u32 %v1552, 7
    %v1554 = vsub.s32 %v1551, %v1553
    %v1555 = vrot.slane %v1547, %v1554
    %v1557 = vunpack.c.l.s4 1934713408
    %v1558 = vunpack.c.0.s8 %v1557
    %v1559 = vlaneseq
    %v1560 = vshrl.u32 %v1559, 7
    %v1561 = vsub.s32 %v1558, %v1560
    %v1562 = vrot.slane %v1548, %v1561
    %v1563 = vcombine.low %v1538, %v1546
    %v1564 = vcombine.high %v1538, %v1546
    %v1566 = vunpack.c.l.s4 1934713408
    %v1567 = vunpack.c.0.s8 %v1566
    %v1568 = vlaneseq
    %v1569 = vshrl.u32 %v1568, 7
    %v1570 = vsub.s32 %v1567, %v1569
    %v1571 = vrot.slane %v1563, %v1570
    %v1573 = vunpack.c.l.s4 1934713408
    %v1574 = vunpack.c.0.s8 %v1573
    %v1575 = vlaneseq
    %v1576 = vshrl.u32 %v1575, 7
    %v1577 = vsub.s32 %v1574, %v1576
    %v1578 = vrot.slane %v1564, %v1577
    %v1579 = vcombine.low %v1555, %v1571
    %v1580 = vcombine.high %v1555, %v1571
    %v1581 = vcombine.low %v1562, %v1578
    %v1582 = vcombine.high %v1562, %v1578
    %1584 = vrot.lane.b32.xlu0 %v1580, 8
    %v1585 = vpop.permute.xlu0 %1584
    %1588 = vrot.lane.b32.xlu0 %v1581, 16
    %v1589 = vpop.permute.xlu0 %1588
    %1592 = vrot.lane.b32.xlu0 %v1582, 24
    %v1593 = vpop.permute.xlu0 %1592
    %v1595 = vsel %vm798, %v1579, %v1585
    %vm1596 = vcmask 130048
    %v1597 = vsel %vm1596, %v1595, %v1589
    %vm1598 = vcmask 195584
    %v1599 = vsel %vm1598, %v1597, %v1593
    %v1600 = vpack.c.bf16 %v1599, %v1599
    %v1601 = vld [vmem:[%s3 + $0x1] sm:$0x1]
    %v1602 = vld [vmem:[%s4 + $0x4] sm:$0xff]
    %v1603 = vld [vmem:[%s4 + $0xc] sm:$0xff]
    %v1604 = vld [vmem:[%s4 + $0x14] sm:$0xf]
    %v1605 = vld [vmem:[%s4 + $0x44] sm:$0xff]
    %v1606 = vld [vmem:[%s4 + $0x4c] sm:$0xff]
    %v1607 = vld [vmem:[%s4 + $0x54] sm:$0xf]
    %v1608 = vld [vmem:[%s4 + $0x84] sm:$0xff]
    %v1609 = vld [vmem:[%s4 + $0x8c] sm:$0xff]
    %v1610 = vld [vmem:[%s4 + $0x94] sm:$0xf]
    %v1611 = vld [vmem:[%s4 + $0xc4] sm:$0xff]
    %v1612 = vld [vmem:[%s4 + $0xcc] sm:$0xff]
    %v1613 = vld [vmem:[%s4 + $0xd4] sm:$0xf]
    %v1614 = vld [vmem:[%s5] sm:$0xf]
    %v1615 = vld [vmem:[%s5 + $0x4] sm:$0xf]
    %v1616 = vld [vmem:[%s5 + $0x8] sm:$0xf]
    %v1617 = vld [vmem:[%s5 + $0xc] sm:$0xf]
    %v1618 = vld [vmem:[%s5 + $0x10] sm:$0xf]
    %v1619 = vld [vmem:[%s5 + $0x14] sm:$0xf]
    %v1620 = vld [vmem:[%s5 + $0x18] sm:$0xf]
    %v1621 = vld [vmem:[%s5 + $0x1c] sm:$0xf]
    %v1622 = vld [vmem:[%s5 + $0x20] sm:$0xf]
    %v1623 = vld [vmem:[%s5 + $0x24] sm:$0xf]
    %v1624 = vld [vmem:[%s5 + $0x28] sm:$0xf]
    %v1625 = vld [vmem:[%s5 + $0x2c] sm:$0xf]
    %v1626 = vld [vmem:[%s5 + $0x30] sm:$0xf]
    %v1627 = vld [vmem:[%s5 + $0x34] sm:$0xf]
    %v1628 = vld [vmem:[%s5 + $0x38] sm:$0xf]
    %v1629 = vld [vmem:[%s5 + $0x3c] sm:$0xf]
    %v1630 = vld [vmem:[%s5 + $0x40] sm:$0xf]
    %v1631 = vld [vmem:[%s5 + $0x44] sm:$0xf]
    %v1632 = vld [vmem:[%s5 + $0x48] sm:$0xf]
    %v1633 = vld [vmem:[%s5 + $0x4c] sm:$0xf]
    %v1634 = vld [vmem:[%s5 + $0x50] sm:$0xf]
    %v1635 = vld [vmem:[%s5 + $0x54] sm:$0xf]
    %v1636 = vld [vmem:[%s5 + $0x58] sm:$0xf]
    %v1637 = vld [vmem:[%s5 + $0x5c] sm:$0xf]
    %v1638 = vld [vmem:[%s5 + $0x60] sm:$0xf]
    %v1639 = vld [vmem:[%s5 + $0x64] sm:$0xf]
    %v1640 = vld [vmem:[%s5 + $0x68] sm:$0xf]
    %v1641 = vld [vmem:[%s5 + $0x6c] sm:$0xf]
    %v1642 = vld [vmem:[%s5 + $0x70] sm:$0xf]
    %v1643 = vld [vmem:[%s5 + $0x74] sm:$0xf]
    %v1644 = vld [vmem:[%s5 + $0x78] sm:$0xf]
    %v1645 = vld [vmem:[%s5 + $0x7c] sm:$0xf]
    %v1650 = vunpack.c.l.b16 %v236
    %v1651 = vunpack.c.l.b16 %v237
    %v1652 = vunpack.c.l.b16 %v238
    %v1653 = vunpack.c.l.b16 %v239
    %v1654 = vpack.c.b16 %v1651, %v1650
    %v1655 = vpack.c.b16 %v1653, %v1652
    %1656 = vrot.lane.b32.xlu0 %v1654, 96
    %v1657 = vpop.permute.xlu0 %1656
    %1658 = vrot.lane.b32.xlu0 %v1655, 96
    %v1659 = vpop.permute.xlu0 %1658
    %v1663 = vsel %vm241, %v1600, 0
    %1665 = vmatprep.subr.bf16.mxu0 0
    %1666 = vmatpush1.bf16.msra.mxu0 %v1657
    %1667 = vmatprep.subr.bf16.mxu0 0
    %1668 = vmatpush1.bf16.msra.mxu0 %v1659
    %1669 = vmatprep.subr.bf16.mxu0 0
    %1670 = vmatpush1.bf16.msra.mxu0 0
    %1671 = vmatprep.subr.bf16.mxu0 0
    %1672 = vmatpush1.bf16.msra.mxu0 0
    %1673 = vmatprep.subr.bf16.mxu0 0
    %1674 = vmatpush1.bf16.msra.mxu0 0
    %1675 = vmatprep.subr.bf16.mxu0 0
    %1676 = vmatpush1.bf16.msra.mxu0 0
    %1677 = vmatprep.subr.bf16.mxu0 0
    %1678 = vmatpush1.bf16.msra.mxu0 0
    %1679 = vmatprep.subr.bf16.mxu0 0
    %1680 = vmatpush1.bf16.msra.mxu0 0
    %1681 = vmatprep.subr.bf16.mxu0 0
    %1682 = vmatpush1.bf16.msra.mxu0 0
    %1683 = vmatprep.subr.bf16.mxu0 0
    %1684 = vmatpush1.bf16.msra.mxu0 0
    %1685 = vmatprep.subr.bf16.mxu0 0
    %1686 = vmatpush1.bf16.msra.mxu0 0
    %1687 = vmatprep.subr.bf16.mxu0 0
    %1688 = vmatpush1.bf16.msra.mxu0 0
    %1689 = vmatprep.subr.bf16.mxu0 0
    %1690 = vmatpush1.bf16.msra.mxu0 0
    %1691 = vmatprep.subr.bf16.mxu0 0
    %1692 = vmatpush1.bf16.msra.mxu0 0
    %1693 = vmatprep.subr.bf16.mxu0 0
    %1694 = vmatpush1.bf16.msra.mxu0 0
    %1695 = vmatprep.subr.bf16.mxu0 0
    %1696 = vmatpush1.bf16.msra.mxu0 0
    %1697 = vmatprep.mubr.bf16.mxu0 0
    %1698 = vmatmul.mubr.bf16.gmra.mrb[0].mxu0 %v1663
    %v1699 = vpop.f32.mrb[0].mxu0
    %v1700 = vadd.f32 %v221, %v1699
    %v1701 = vpop.f32.mrb[0].mxu0
    %v1702 = vpop.f32.mrb[0].mxu0
    %v1703 = vpop.f32.mrb[0].mxu0
    %1704 = vdwg.mxu0
    %v1705 = vmul.f32 %v1700, %v1700
    %v1706 = vsel %vm241, %v1705, 0.0
    %1707 = vadd.xlane.f32.xlu0 %v1706
    %v1708 = vpop.xlane.xlu0 %1707
    %v1709 = vmul.f32 %v1708, %v245
    %v1710 = vadd.f32 %v1709, 1e-06
    %v1711 = vrsqrt.pop %v1710
    %v1712 = vmul.f32 %v1700, %v1711
    %v1713 = vlaneseq
    %v1714 = vshrl.u32 %v1713, 7
    %v1715 = vsub.s32 0, %v1714
    %v1716 = vrot.slane %v1601, %v1715
    %v1717 = vmul.f32 %v1712, %v1716
    %v1718 = vpack.c.bf16 %v1717, %v1717
    %v1731 = vunpack.c.l.b16 %v1602
    %v1732 = vunpack.c.h.b16 %v1602
    %v1733 = vunpack.c.l.b16 %v1603
    %v1734 = vunpack.c.h.b16 %v1603
    %v1735 = vunpack.c.l.b16 %v1604
    %v1736 = vunpack.c.l.b16 %v1605
    %v1737 = vunpack.c.h.b16 %v1605
    %v1738 = vunpack.c.l.b16 %v1606
    %v1739 = vunpack.c.h.b16 %v1606
    %v1740 = vunpack.c.l.b16 %v1607
    %v1741 = vunpack.c.l.b16 %v1608
    %v1742 = vunpack.c.h.b16 %v1608
    %v1743 = vunpack.c.l.b16 %v1609
    %v1744 = vunpack.c.h.b16 %v1609
    %v1745 = vunpack.c.l.b16 %v1610
    %v1746 = vunpack.c.l.b16 %v1611
    %v1747 = vunpack.c.h.b16 %v1611
    %v1748 = vunpack.c.l.b16 %v1612
    %v1749 = vunpack.c.h.b16 %v1612
    %v1750 = vunpack.c.l.b16 %v1613
    %v1751 = vpack.c.b16 %v1736, %v1731
    %v1752 = vpack.c.b16 %v1737, %v1732
    %v1753 = vpack.c.b16 %v1738, %v1733
    %v1754 = vpack.c.b16 %v1739, %v1734
    %v1755 = vpack.c.b16 %v1740, %v1735
    %v1756 = vpack.c.b16 %v1746, %v1741
    %v1757 = vpack.c.b16 %v1747, %v1742
    %v1758 = vpack.c.b16 %v1748, %v1743
    %v1759 = vpack.c.b16 %v1749, %v1744
    %v1760 = vpack.c.b16 %v1750, %v1745
    %1761 = vrot.lane.b32.xlu0 %v1751, 64
    %v1762 = vpop.permute.xlu0 %1761
    %1763 = vrot.lane.b32.xlu0 %v1752, 64
    %v1764 = vpop.permute.xlu0 %1763
    %1765 = vrot.lane.b32.xlu0 %v1753, 64
    %v1766 = vpop.permute.xlu0 %1765
    %1767 = vrot.lane.b32.xlu0 %v1754, 64
    %v1768 = vpop.permute.xlu0 %1767
    %1769 = vrot.lane.b32.xlu0 %v1755, 64
    %v1770 = vpop.permute.xlu0 %1769
    %1771 = vrot.lane.b32.xlu0 %v1756, 64
    %v1772 = vpop.permute.xlu0 %1771
    %1773 = vrot.lane.b32.xlu0 %v1757, 64
    %v1774 = vpop.permute.xlu0 %1773
    %1775 = vrot.lane.b32.xlu0 %v1758, 64
    %v1776 = vpop.permute.xlu0 %1775
    %1777 = vrot.lane.b32.xlu0 %v1759, 64
    %v1778 = vpop.permute.xlu0 %1777
    %1779 = vrot.lane.b32.xlu0 %v1760, 64
    %v1780 = vpop.permute.xlu0 %1779
    %vm1781 = vcmask 523264
    %v1782 = vsel %vm1781, %v1762, %v1764
    %v1783 = vsel %vm1781, %v1764, %v1766
    %v1784 = vsel %vm1781, %v1766, %v1768
    %v1785 = vsel %vm1781, %v1768, %v1770
    %v1786 = vsel %vm1781, %v1772, %v1774
    %v1787 = vsel %vm1781, %v1774, %v1776
    %v1788 = vsel %vm1781, %v1776, %v1778
    %v1789 = vsel %vm1781, %v1778, %v1780
    %v1799 = vsel %vm241, %v1718, 0
    %1801 = vmatprep.subr.bf16.mxu0 %v1783
    %1802 = vmatpush1.bf16.msra.mxu0 %v1782
    %1803 = vmatprep.subr.bf16.mxu0 %v1787
    %1804 = vmatpush1.bf16.msra.mxu0 %v1786
    %1805 = vmatprep.subr.bf16.mxu0 0
    %1806 = vmatpush1.bf16.msra.mxu0 0
    %1807 = vmatprep.subr.bf16.mxu0 0
    %1808 = vmatpush1.bf16.msra.mxu0 0
    %1809 = vmatprep.subr.bf16.mxu0 0
    %1810 = vmatpush1.bf16.msra.mxu0 0
    %1811 = vmatprep.subr.bf16.mxu0 0
    %1812 = vmatpush1.bf16.msra.mxu0 0
    %1813 = vmatprep.subr.bf16.mxu0 0
    %1814 = vmatpush1.bf16.msra.mxu0 0
    %1815 = vmatprep.subr.bf16.mxu0 0
    %1816 = vmatpush1.bf16.msra.mxu0 0
    %1817 = vmatprep.subr.bf16.mxu0 0
    %1818 = vmatpush1.bf16.msra.mxu0 0
    %1819 = vmatprep.subr.bf16.mxu0 0
    %1820 = vmatpush1.bf16.msra.mxu0 0
    %1821 = vmatprep.subr.bf16.mxu0 0
    %1822 = vmatpush1.bf16.msra.mxu0 0
    %1823 = vmatprep.subr.bf16.mxu0 0
    %1824 = vmatpush1.bf16.msra.mxu0 0
    %1825 = vmatprep.subr.bf16.mxu0 0
    %1826 = vmatpush1.bf16.msra.mxu0 0
    %1827 = vmatprep.subr.bf16.mxu0 0
    %1828 = vmatpush1.bf16.msra.mxu0 0
    %1829 = vmatprep.subr.bf16.mxu0 0
    %1830 = vmatpush1.bf16.msra.mxu0 0
    %1831 = vmatprep.subr.bf16.mxu0 0
    %1832 = vmatpush1.bf16.msra.mxu0 0
    %1833 = vmatprep.mubr.bf16.mxu0 0
    %1834 = vmatmul.mubr.bf16.gmra.mrb[0].mxu0 %v1799
    %v1835 = vpop.f32.mrb[0].mxu0
    %v1836 = vadd.f32 0.0, %v1835
    %v1837 = vpop.f32.mrb[0].mxu0
    %v1838 = vadd.f32 0.0, %v1837
    %v1839 = vpop.f32.mrb[0].mxu0
    %v1840 = vpop.f32.mrb[0].mxu0
    %1841 = vdwg.mxu0
    %1842 = vmatprep.subr.bf16.mxu0 %v1785
    %1843 = vmatpush1.bf16.msra.mxu0 %v1784
    %1844 = vmatprep.subr.bf16.mxu0 %v1789
    %1845 = vmatpush1.bf16.msra.mxu0 %v1788
    %1846 = vmatprep.subr.bf16.mxu0 0
    %1847 = vmatpush1.bf16.msra.mxu0 0
    %1848 = vmatprep.subr.bf16.mxu0 0
    %1849 = vmatpush1.bf16.msra.mxu0 0
    %1850 = vmatprep.subr.bf16.mxu0 0
    %1851 = vmatpush1.bf16.msra.mxu0 0
    %1852 = vmatprep.subr.bf16.mxu0 0
    %1853 = vmatpush1.bf16.msra.mxu0 0
    %1854 = vmatprep.subr.bf16.mxu0 0
    %1855 = vmatpush1.bf16.msra.mxu0 0
    %1856 = vmatprep.subr.bf16.mxu0 0
    %1857 = vmatpush1.bf16.msra.mxu0 0
    %1858 = vmatprep.subr.bf16.mxu0 0
    %1859 = vmatpush1.bf16.msra.mxu0 0
    %1860 = vmatprep.subr.bf16.mxu0 0
    %1861 = vmatpush1.bf16.msra.mxu0 0
    %1862 = vmatprep.subr.bf16.mxu0 0
    %1863 = vmatpush1.bf16.msra.mxu0 0
    %1864 = vmatprep.subr.bf16.mxu0 0
    %1865 = vmatpush1.bf16.msra.mxu0 0
    %1866 = vmatprep.subr.bf16.mxu0 0
    %1867 = vmatpush1.bf16.msra.mxu0 0
    %1868 = vmatprep.subr.bf16.mxu0 0
    %1869 = vmatpush1.bf16.msra.mxu0 0
    %1870 = vmatprep.subr.bf16.mxu0 0
    %1871 = vmatpush1.bf16.msra.mxu0 0
    %1872 = vmatprep.subr.bf16.mxu0 0
    %1873 = vmatpush1.bf16.msra.mxu0 0
    %1874 = vmatprep.mubr.bf16.mxu0 0
    %1875 = vmatmul.mubr.bf16.gmra.mrb[0].mxu0 %v1799
    %v1876 = vpop.f32.mrb[0].mxu0
    %v1877 = vadd.f32 0.0, %v1876
    %v1878 = vpop.f32.mrb[0].mxu0
    %v1879 = vadd.f32 0.0, %v1878
    %v1880 = vpop.f32.mrb[0].mxu0
    %v1881 = vpop.f32.mrb[0].mxu0
    %1882 = vdwg.mxu0
    %v1883 = vxor.u32 %v1836, 2147483648
    %v1884 = vxor.u32 %v1838, 2147483648
    %v1885 = vmul.f32 %v1883, 1.442695
    %v1886 = vpow.pop %v1885
    %v1887 = vmul.f32 %v1884, 1.442695
    %v1888 = vpow.pop %v1887
    %v1889 = vadd.f32 %v1886, 1.0
    %v1890 = vadd.f32 %v1888, 1.0
    %v1891 = vrcp.pop %v1889
    %v1892 = vmul.f32 1.0, %v1891
    %v1893 = vrcp.pop %v1890
    %v1894 = vmul.f32 1.0, %v1893
    %v1895 = vmul.f32 %v1836, %v1892
    %v1896 = vmul.f32 %v1838, %v1894
    %v1897 = vmul.f32 %v1895, %v1877
    %v1898 = vmul.f32 %v1896, %v1879
    %v1899 = vpack.c.bf16 %v1897, %v1897
    %v1900 = vpack.c.bf16 %v1898, %v1898
    %v1901 = vld [vmem:[%s3 + $0x2] sm:$0x1]
    %v1902 = vld [vmem:[%s4 + $0x14] sm:$0xff]
    %v1903 = vld [vmem:[%s4 + $0x1c] sm:$0xff]
    %v1904 = vld [vmem:[%s4 + $0x24] sm:$0xf]
    %v1905 = vld [vmem:[%s4 + $0x54] sm:$0xff]
    %v1906 = vld [vmem:[%s4 + $0x5c] sm:$0xff]
    %v1907 = vld [vmem:[%s4 + $0x64] sm:$0xf]
    %v1908 = vld [vmem:[%s4 + $0x94] sm:$0xff]
    %v1909 = vld [vmem:[%s4 + $0x9c] sm:$0xff]
    %v1910 = vld [vmem:[%s4 + $0xa4] sm:$0xf]
    %v1911 = vld [vmem:[%s4 + $0xd4] sm:$0xff]
    %v1912 = vld [vmem:[%s4 + $0xdc] sm:$0xff]
    %v1913 = vld [vmem:[%s4 + $0xe4] sm:$0xf]
    %v1914 = vld [vmem:[%s5 + $0x80] sm:$0xf]
    %v1915 = vld [vmem:[%s5 + $0x84] sm:$0xf]
    %v1916 = vld [vmem:[%s5 + $0x88] sm:$0xf]
    %v1917 = vld [vmem:[%s5 + $0x8c] sm:$0xf]
    %v1918 = vld [vmem:[%s5 + $0x90] sm:$0xf]
    %v1919 = vld [vmem:[%s5 + $0x94] sm:$0xf]
    %v1920 = vld [vmem:[%s5 + $0x98] sm:$0xf]
    %v1921 = vld [vmem:[%s5 + $0x9c] sm:$0xf]
    %v1922 = vld [vmem:[%s5 + $0xa0] sm:$0xf]
    %v1923 = vld [vmem:[%s5 + $0xa4] sm:$0xf]
    %v1924 = vld [vmem:[%s5 + $0xa8] sm:$0xf]
    %v1925 = vld [vmem:[%s5 + $0xac] sm:$0xf]
    %v1926 = vld [vmem:[%s5 + $0xb0] sm:$0xf]
    %v1927 = vld [vmem:[%s5 + $0xb4] sm:$0xf]
    %v1928 = vld [vmem:[%s5 + $0xb8] sm:$0xf]
    %v1929 = vld [vmem:[%s5 + $0xbc] sm:$0xf]
    %v1930 = vld [vmem:[%s5 + $0xc0] sm:$0xf]
    %v1931 = vld [vmem:[%s5 + $0xc4] sm:$0xf]
    %v1932 = vld [vmem:[%s5 + $0xc8] sm:$0xf]
    %v1933 = vld [vmem:[%s5 + $0xcc] sm:$0xf]
    %v1934 = vld [vmem:[%s5 + $0xd0] sm:$0xf]
    %v1935 = vld [vmem:[%s5 + $0xd4] sm:$0xf]
    %v1936 = vld [vmem:[%s5 + $0xd8] sm:$0xf]
    %v1937 = vld [vmem:[%s5 + $0xdc] sm:$0xf]
    %v1938 = vld [vmem:[%s5 + $0xe0] sm:$0xf]
    %v1939 = vld [vmem:[%s5 + $0xe4] sm:$0xf]
    %v1940 = vld [vmem:[%s5 + $0xe8] sm:$0xf]
    %v1941 = vld [vmem:[%s5 + $0xec] sm:$0xf]
    %v1942 = vld [vmem:[%s5 + $0xf0] sm:$0xf]
    %v1943 = vld [vmem:[%s5 + $0xf4] sm:$0xf]
    %v1944 = vld [vmem:[%s5 + $0xf8] sm:$0xf]
    %v1945 = vld [vmem:[%s5 + $0xfc] sm:$0xf]
    %v1978 = vunpack.c.l.b16 %v1614
    %v1979 = vunpack.c.l.b16 %v1615
    %v1980 = vunpack.c.l.b16 %v1616
    %v1981 = vunpack.c.l.b16 %v1617
    %v1982 = vunpack.c.l.b16 %v1618
    %v1983 = vunpack.c.l.b16 %v1619
    %v1984 = vunpack.c.l.b16 %v1620
    %v1985 = vunpack.c.l.b16 %v1621
    %v1986 = vunpack.c.l.b16 %v1622
    %v1987 = vunpack.c.l.b16 %v1623
    %v1988 = vunpack.c.l.b16 %v1624
    %v1989 = vunpack.c.l.b16 %v1625
    %v1990 = vunpack.c.l.b16 %v1626
    %v1991 = vunpack.c.l.b16 %v1627
    %v1992 = vunpack.c.l.b16 %v1628
    %v1993 = vunpack.c.l.b16 %v1629
    %v1994 = vunpack.c.l.b16 %v1630
    %v1995 = vunpack.c.l.b16 %v1631
    %v1996 = vunpack.c.l.b16 %v1632
    %v1997 = vunpack.c.l.b16 %v1633
    %v1998 = vunpack.c.l.b16 %v1634
    %v1999 = vunpack.c.l.b16 %v1635
    %v2000 = vunpack.c.l.b16 %v1636
    %v2001 = vunpack.c.l.b16 %v1637
    %v2002 = vunpack.c.l.b16 %v1638
    %v2003 = vunpack.c.l.b16 %v1639
    %v2004 = vunpack.c.l.b16 %v1640
    %v2005 = vunpack.c.l.b16 %v1641
    %v2006 = vunpack.c.l.b16 %v1642
    %v2007 = vunpack.c.l.b16 %v1643
    %v2008 = vunpack.c.l.b16 %v1644
    %v2009 = vunpack.c.l.b16 %v1645
    %v2010 = vpack.c.b16 %v1979, %v1978
    %v2011 = vpack.c.b16 %v1981, %v1980
    %v2012 = vpack.c.b16 %v1983, %v1982
    %v2013 = vpack.c.b16 %v1985, %v1984
    %v2014 = vpack.c.b16 %v1987, %v1986
    %v2015 = vpack.c.b16 %v1989, %v1988
    %v2016 = vpack.c.b16 %v1991, %v1990
    %v2017 = vpack.c.b16 %v1993, %v1992
    %v2018 = vpack.c.b16 %v1995, %v1994
    %v2019 = vpack.c.b16 %v1997, %v1996
    %v2020 = vpack.c.b16 %v1999, %v1998
    %v2021 = vpack.c.b16 %v2001, %v2000
    %v2022 = vpack.c.b16 %v2003, %v2002
    %v2023 = vpack.c.b16 %v2005, %v2004
    %v2024 = vpack.c.b16 %v2007, %v2006
    %v2025 = vpack.c.b16 %v2009, %v2008
    %2042 = vmatprep.subr.bf16.mxu0 0
    %2043 = vmatpush1.bf16.msra.mxu0 %v2010
    %2044 = vmatprep.subr.bf16.mxu0 0
    %2045 = vmatpush1.bf16.msra.mxu0 %v2011
    %2046 = vmatprep.subr.bf16.mxu0 0
    %2047 = vmatpush1.bf16.msra.mxu0 %v2012
    %2048 = vmatprep.subr.bf16.mxu0 0
    %2049 = vmatpush1.bf16.msra.mxu0 %v2013
    %2050 = vmatprep.subr.bf16.mxu0 0
    %2051 = vmatpush1.bf16.msra.mxu0 %v2014
    %2052 = vmatprep.subr.bf16.mxu0 0
    %2053 = vmatpush1.bf16.msra.mxu0 %v2015
    %2054 = vmatprep.subr.bf16.mxu0 0
    %2055 = vmatpush1.bf16.msra.mxu0 %v2016
    %2056 = vmatprep.subr.bf16.mxu0 0
    %2057 = vmatpush1.bf16.msra.mxu0 %v2017
    %2058 = vmatprep.subr.bf16.mxu0 0
    %2059 = vmatpush1.bf16.msra.mxu0 %v2018
    %2060 = vmatprep.subr.bf16.mxu0 0
    %2061 = vmatpush1.bf16.msra.mxu0 %v2019
    %2062 = vmatprep.subr.bf16.mxu0 0
    %2063 = vmatpush1.bf16.msra.mxu0 %v2020
    %2064 = vmatprep.subr.bf16.mxu0 0
    %2065 = vmatpush1.bf16.msra.mxu0 %v2021
    %2066 = vmatprep.subr.bf16.mxu0 0
    %2067 = vmatpush1.bf16.msra.mxu0 %v2022
    %2068 = vmatprep.subr.bf16.mxu0 0
    %2069 = vmatpush1.bf16.msra.mxu0 %v2023
    %2070 = vmatprep.subr.bf16.mxu0 0
    %2071 = vmatpush1.bf16.msra.mxu0 %v2024
    %2072 = vmatprep.subr.bf16.mxu0 0
    %2073 = vmatpush1.bf16.msra.mxu0 %v2025
    %2074 = vmatprep.mubr.bf16.mxu0 %v1900
    %2075 = vmatmul.mubr.bf16.gmra.mrb[0].mxu0 %v1899
    %v2076 = vpop.f32.mrb[0].mxu0
    %v2077 = vadd.f32 %v1700, %v2076
    %v2078 = vpop.f32.mrb[0].mxu0
    %v2079 = vpop.f32.mrb[0].mxu0
    %v2080 = vpop.f32.mrb[0].mxu0
    %2081 = vdwg.mxu0
    %v2082 = vmul.f32 %v2077, %v2077
    %v2083 = vsel %vm241, %v2082, 0.0
    %2084 = vadd.xlane.f32.xlu0 %v2083
    %v2085 = vpop.xlane.xlu0 %2084
    %v2086 = vmul.f32 %v2085, %v245
    %v2087 = vadd.f32 %v2086, 1e-06
    %v2088 = vrsqrt.pop %v2087
    %v2089 = vmul.f32 %v2077, %v2088
    %v2090 = vlaneseq
    %v2091 = vshrl.u32 %v2090, 7
    %v2092 = vsub.s32 0, %v2091
    %v2093 = vrot.slane %v1901, %v2092
    %v2094 = vmul.f32 %v2089, %v2093
    %v2095 = vpack.c.bf16 %v2094, %v2094
    %v2108 = vunpack.c.l.b16 %v1902
    %v2109 = vunpack.c.h.b16 %v1902
    %v2110 = vunpack.c.l.b16 %v1903
    %v2111 = vunpack.c.h.b16 %v1903
    %v2112 = vunpack.c.l.b16 %v1904
    %v2113 = vunpack.c.l.b16 %v1905
    %v2114 = vunpack.c.h.b16 %v1905
    %v2115 = vunpack.c.l.b16 %v1906
    %v2116 = vunpack.c.h.b16 %v1906
    %v2117 = vunpack.c.l.b16 %v1907
    %v2118 = vunpack.c.l.b16 %v1908
    %v2119 = vunpack.c.h.b16 %v1908
    %v2120 = vunpack.c.l.b16 %v1909
    %v2121 = vunpack.c.h.b16 %v1909
    %v2122 = vunpack.c.l.b16 %v1910
    %v2123 = vunpack.c.l.b16 %v1911
    %v2124 = vunpack.c.h.b16 %v1911
    %v2125 = vunpack.c.l.b16 %v1912
    %v2126 = vunpack.c.h.b16 %v1912
    %v2127 = vunpack.c.l.b16 %v1913
    %v2128 = vpack.c.b16 %v2113, %v2108
    %v2129 = vpack.c.b16 %v2114, %v2109
    %v2130 = vpack.c.b16 %v2115, %v2110
    %v2131 = vpack.c.b16 %v2116, %v2111
    %v2132 = vpack.c.b16 %v2117, %v2112
    %v2133 = vpack.c.b16 %v2123, %v2118
    %v2134 = vpack.c.b16 %v2124, %v2119
    %v2135 = vpack.c.b16 %v2125, %v2120
    %v2136 = vpack.c.b16 %v2126, %v2121
    %v2137 = vpack.c.b16 %v2127, %v2122
    %2138 = vrot.lane.b32.xlu0 %v2128, 64
    %v2139 = vpop.permute.xlu0 %2138
    %2140 = vrot.lane.b32.xlu0 %v2129, 64
    %v2141 = vpop.permute.xlu0 %2140
    %2142 = vrot.lane.b32.xlu0 %v2130, 64
    %v2143 = vpop.permute.xlu0 %2142
    %2144 = vrot.lane.b32.xlu0 %v2131, 64
    %v2145 = vpop.permute.xlu0 %2144
    %2146 = vrot.lane.b32.xlu0 %v2132, 64
    %v2147 = vpop.permute.xlu0 %2146
    %2148 = vrot.lane.b32.xlu0 %v2133, 64
    %v2149 = vpop.permute.xlu0 %2148
    %2150 = vrot.lane.b32.xlu0 %v2134, 64
    %v2151 = vpop.permute.xlu0 %2150
    %2152 = vrot.lane.b32.xlu0 %v2135, 64
    %v2153 = vpop.permute.xlu0 %2152
    %2154 = vrot.lane.b32.xlu0 %v2136, 64
    %v2155 = vpop.permute.xlu0 %2154
    %2156 = vrot.lane.b32.xlu0 %v2137, 64
    %v2157 = vpop.permute.xlu0 %2156
    %v2158 = vsel %vm1781, %v2139, %v2141
    %v2159 = vsel %vm1781, %v2141, %v2143
    %v2160 = vsel %vm1781, %v2143, %v2145
    %v2161 = vsel %vm1781, %v2145, %v2147
    %v2162 = vsel %vm1781, %v2149, %v2151
    %v2163 = vsel %vm1781, %v2151, %v2153
    %v2164 = vsel %vm1781, %v2153, %v2155
    %v2165 = vsel %vm1781, %v2155, %v2157
    %v2175 = vsel %vm241, %v2095, 0
    %2177 = vmatprep.subr.bf16.mxu0 %v2159
    %2178 = vmatpush1.bf16.msra.mxu0 %v2158
    %2179 = vmatprep.subr.bf16.mxu0 %v2163
    %2180 = vmatpush1.bf16.msra.mxu0 %v2162
    %2181 = vmatprep.subr.bf16.mxu0 0
    %2182 = vmatpush1.bf16.msra.mxu0 0
    %2183 = vmatprep.subr.bf16.mxu0 0
    %2184 = vmatpush1.bf16.msra.mxu0 0
    %2185 = vmatprep.subr.bf16.mxu0 0
    %2186 = vmatpush1.bf16.msra.mxu0 0
    %2187 = vmatprep.subr.bf16.mxu0 0
    %2188 = vmatpush1.bf16.msra.mxu0 0
    %2189 = vmatprep.subr.bf16.mxu0 0
    %2190 = vmatpush1.bf16.msra.mxu0 0
    %2191 = vmatprep.subr.bf16.mxu0 0
    %2192 = vmatpush1.bf16.msra.mxu0 0
    %2193 = vmatprep.subr.bf16.mxu0 0
    %2194 = vmatpush1.bf16.msra.mxu0 0
    %2195 = vmatprep.subr.bf16.mxu0 0
    %2196 = vmatpush1.bf16.msra.mxu0 0
    %2197 = vmatprep.subr.bf16.mxu0 0
    %2198 = vmatpush1.bf16.msra.mxu0 0
    %2199 = vmatprep.subr.bf16.mxu0 0
    %2200 = vmatpush1.bf16.msra.mxu0 0
    %2201 = vmatprep.subr.bf16.mxu0 0
    %2202 = vmatpush1.bf16.msra.mxu0 0
    %2203 = vmatprep.subr.bf16.mxu0 0
    %2204 = vmatpush1.bf16.msra.mxu0 0
    %2205 = vmatprep.subr.bf16.mxu0 0
    %2206 = vmatpush1.bf16.msra.mxu0 0
    %2207 = vmatprep.subr.bf16.mxu0 0
    %2208 = vmatpush1.bf16.msra.mxu0 0
    %2209 = vmatprep.mubr.bf16.mxu0 0
    %2210 = vmatmul.mubr.bf16.gmra.mrb[0].mxu0 %v2175
    %v2211 = vpop.f32.mrb[0].mxu0
    %v2212 = vadd.f32 0.0, %v2211
    %v2213 = vpop.f32.mrb[0].mxu0
    %v2214 = vadd.f32 0.0, %v2213
    %v2215 = vpop.f32.mrb[0].mxu0
    %v2216 = vpop.f32.mrb[0].mxu0
    %2217 = vdwg.mxu0
    %2218 = vmatprep.subr.bf16.mxu0 %v2161
    %2219 = vmatpush1.bf16.msra.mxu0 %v2160
    %2220 = vmatprep.subr.bf16.mxu0 %v2165
    %2221 = vmatpush1.bf16.msra.mxu0 %v2164
    %2222 = vmatprep.subr.bf16.mxu0 0
    %2223 = vmatpush1.bf16.msra.mxu0 0
    %2224 = vmatprep.subr.bf16.mxu0 0
    %2225 = vmatpush1.bf16.msra.mxu0 0
    %2226 = vmatprep.subr.bf16.mxu0 0
    %2227 = vmatpush1.bf16.msra.mxu0 0
    %2228 = vmatprep.subr.bf16.mxu0 0
    %2229 = vmatpush1.bf16.msra.mxu0 0
    %2230 = vmatprep.subr.bf16.mxu0 0
    %2231 = vmatpush1.bf16.msra.mxu0 0
    %2232 = vmatprep.subr.bf16.mxu0 0
    %2233 = vmatpush1.bf16.msra.mxu0 0
    %2234 = vmatprep.subr.bf16.mxu0 0
    %2235 = vmatpush1.bf16.msra.mxu0 0
    %2236 = vmatprep.subr.bf16.mxu0 0
    %2237 = vmatpush1.bf16.msra.mxu0 0
    %2238 = vmatprep.subr.bf16.mxu0 0
    %2239 = vmatpush1.bf16.msra.mxu0 0
    %2240 = vmatprep.subr.bf16.mxu0 0
    %2241 = vmatpush1.bf16.msra.mxu0 0
    %2242 = vmatprep.subr.bf16.mxu0 0
    %2243 = vmatpush1.bf16.msra.mxu0 0
    %2244 = vmatprep.subr.bf16.mxu0 0
    %2245 = vmatpush1.bf16.msra.mxu0 0
    %2246 = vmatprep.subr.bf16.mxu0 0
    %2247 = vmatpush1.bf16.msra.mxu0 0
    %2248 = vmatprep.subr.bf16.mxu0 0
    %2249 = vmatpush1.bf16.msra.mxu0 0
    %2250 = vmatprep.mubr.bf16.mxu0 0
    %2251 = vmatmul.mubr.bf16.gmra.mrb[0].mxu0 %v2175
    %v2252 = vpop.f32.mrb[0].mxu0
    %v2253 = vadd.f32 0.0, %v2252
    %v2254 = vpop.f32.mrb[0].mxu0
    %v2255 = vadd.f32 0.0, %v2254
    %v2256 = vpop.f32.mrb[0].mxu0
    %v2257 = vpop.f32.mrb[0].mxu0
    %2258 = vdwg.mxu0
    %v2259 = vxor.u32 %v2212, 2147483648
    %v2260 = vxor.u32 %v2214, 2147483648
    %v2261 = vmul.f32 %v2259, 1.442695
    %v2262 = vpow.pop %v2261
    %v2263 = vmul.f32 %v2260, 1.442695
    %v2264 = vpow.pop %v2263
    %v2265 = vadd.f32 %v2262, 1.0
    %v2266 = vadd.f32 %v2264, 1.0
    %v2267 = vrcp.pop %v2265
    %v2268 = vmul.f32 1.0, %v2267
    %v2269 = vrcp.pop %v2266
    %v2270 = vmul.f32 1.0, %v2269
    %v2271 = vmul.f32 %v2212, %v2268
    %v2272 = vmul.f32 %v2214, %v2270
    %v2273 = vmul.f32 %v2271, %v2253
    %v2274 = vmul.f32 %v2272, %v2255
    %v2275 = vpack.c.bf16 %v2273, %v2273
    %v2276 = vpack.c.bf16 %v2274, %v2274
    %v2277 = vld [vmem:[%s3 + $0x3] sm:$0x1]
    %v2278 = vld [vmem:[%s4 + $0x24] sm:$0xff]
    %v2279 = vld [vmem:[%s4 + $0x64] sm:$0xff]
    %v2280 = vld [vmem:[%s4 + $0xa4] sm:$0xff]
    %v2281 = vld [vmem:[%s4 + $0xe4] sm:$0xff]
    %v2282 = vld [vmem:[%s4 + $0x28] sm:$0xf]
    %v2283 = vld [vmem:[%s4 + $0x68] sm:$0xf]
    %v2284 = vld [vmem:[%s4 + $0xa8] sm:$0xf]
    %v2285 = vld [vmem:[%s4 + $0xe8] sm:$0xf]
    %v2318 = vunpack.c.l.b16 %v1914
    %v2319 = vunpack.c.l.b16 %v1915
    %v2320 = vunpack.c.l.b16 %v1916
    %v2321 = vunpack.c.l.b16 %v1917
    %v2322 = vunpack.c.l.b16 %v1918
    %v2323 = vunpack.c.l.b16 %v1919
    %v2324 = vunpack.c.l.b16 %v1920
    %v2325 = vunpack.c.l.b16 %v1921
    %v2326 = vunpack.c.l.b16 %v1922
    %v2327 = vunpack.c.l.b16 %v1923
    %v2328 = vunpack.c.l.b16 %v1924
    %v2329 = vunpack.c.l.b16 %v1925
    %v2330 = vunpack.c.l.b16 %v1926
    %v2331 = vunpack.c.l.b16 %v1927
    %v2332 = vunpack.c.l.b16 %v1928
    %v2333 = vunpack.c.l.b16 %v1929
    %v2334 = vunpack.c.l.b16 %v1930
    %v2335 = vunpack.c.l.b16 %v1931
    %v2336 = vunpack.c.l.b16 %v1932
    %v2337 = vunpack.c.l.b16 %v1933
    %v2338 = vunpack.c.l.b16 %v1934
    %v2339 = vunpack.c.l.b16 %v1935
    %v2340 = vunpack.c.l.b16 %v1936
    %v2341 = vunpack.c.l.b16 %v1937
    %v2342 = vunpack.c.l.b16 %v1938
    %v2343 = vunpack.c.l.b16 %v1939
    %v2344 = vunpack.c.l.b16 %v1940
    %v2345 = vunpack.c.l.b16 %v1941
    %v2346 = vunpack.c.l.b16 %v1942
    %v2347 = vunpack.c.l.b16 %v1943
    %v2348 = vunpack.c.l.b16 %v1944
    %v2349 = vunpack.c.l.b16 %v1945
    %v2350 = vpack.c.b16 %v2319, %v2318
    %v2351 = vpack.c.b16 %v2321, %v2320
    %v2352 = vpack.c.b16 %v2323, %v2322
    %v2353 = vpack.c.b16 %v2325, %v2324
    %v2354 = vpack.c.b16 %v2327, %v2326
    %v2355 = vpack.c.b16 %v2329, %v2328
    %v2356 = vpack.c.b16 %v2331, %v2330
    %v2357 = vpack.c.b16 %v2333, %v2332
    %v2358 = vpack.c.b16 %v2335, %v2334
    %v2359 = vpack.c.b16 %v2337, %v2336
    %v2360 = vpack.c.b16 %v2339, %v2338
    %v2361 = vpack.c.b16 %v2341, %v2340
    %v2362 = vpack.c.b16 %v2343, %v2342
    %v2363 = vpack.c.b16 %v2345, %v2344
    %v2364 = vpack.c.b16 %v2347, %v2346
    %v2365 = vpack.c.b16 %v2349, %v2348
    %2382 = vmatprep.subr.bf16.mxu0 0
    %2383 = vmatpush1.bf16.msra.mxu0 %v2350
    %2384 = vmatprep.subr.bf16.mxu0 0
    %2385 = vmatpush1.bf16.msra.mxu0 %v2351
    %2386 = vmatprep.subr.bf16.mxu0 0
    %2387 = vmatpush1.bf16.msra.mxu0 %v2352
    %2388 = vmatprep.subr.bf16.mxu0 0
    %2389 = vmatpush1.bf16.msra.mxu0 %v2353
    %2390 = vmatprep.subr.bf16.mxu0 0
    %2391 = vmatpush1.bf16.msra.mxu0 %v2354
    %2392 = vmatprep.subr.bf16.mxu0 0
    %2393 = vmatpush1.bf16.msra.mxu0 %v2355
    %2394 = vmatprep.subr.bf16.mxu0 0
    %2395 = vmatpush1.bf16.msra.mxu0 %v2356
    %2396 = vmatprep.subr.bf16.mxu0 0
    %2397 = vmatpush1.bf16.msra.mxu0 %v2357
    %2398 = vmatprep.subr.bf16.mxu0 0
    %2399 = vmatpush1.bf16.msra.mxu0 %v2358
    %2400 = vmatprep.subr.bf16.mxu0 0
    %2401 = vmatpush1.bf16.msra.mxu0 %v2359
    %2402 = vmatprep.subr.bf16.mxu0 0
    %2403 = vmatpush1.bf16.msra.mxu0 %v2360
    %2404 = vmatprep.subr.bf16.mxu0 0
    %2405 = vmatpush1.bf16.msra.mxu0 %v2361
    %2406 = vmatprep.subr.bf16.mxu0 0
    %2407 = vmatpush1.bf16.msra.mxu0 %v2362
    %2408 = vmatprep.subr.bf16.mxu0 0
    %2409 = vmatpush1.bf16.msra.mxu0 %v2363
    %2410 = vmatprep.subr.bf16.mxu0 0
    %2411 = vmatpush1.bf16.msra.mxu0 %v2364
    %2412 = vmatprep.subr.bf16.mxu0 0
    %2413 = vmatpush1.bf16.msra.mxu0 %v2365
    %2414 = vmatprep.mubr.bf16.mxu0 %v2276
    %2415 = vmatmul.mubr.bf16.gmra.mrb[0].mxu0 %v2275
    %v2416 = vpop.f32.mrb[0].mxu0
    %v2417 = vadd.f32 %v2077, %v2416
    %v2418 = vpop.f32.mrb[0].mxu0
    %v2419 = vpop.f32.mrb[0].mxu0
    %v2420 = vpop.f32.mrb[0].mxu0
    %2421 = vdwg.mxu0
    %v2422 = vmul.f32 %v2417, %v2417
    %v2423 = vsel %vm241, %v2422, 0.0
    %2424 = vadd.xlane.f32.xlu0 %v2423
    %v2425 = vpop.xlane.xlu0 %2424
    %v2426 = vmul.f32 %v2425, %v245
    %v2427 = vadd.f32 %v2426, 1e-06
    %v2428 = vrsqrt.pop %v2427
    %v2429 = vmul.f32 %v2417, %v2428
    %v2430 = vlaneseq
    %v2431 = vshrl.u32 %v2430, 7
    %v2432 = vsub.s32 0, %v2431
    %v2433 = vrot.slane %v2277, %v2432
    %v2434 = vmul.f32 %v2429, %v2433
    %v2435 = vpack.c.bf16 %v2434, %v2434
    %v2440 = vunpack.c.l.b16 %v2278
    %v2441 = vunpack.c.h.b16 %v2278
    %v2442 = vunpack.c.l.b16 %v2279
    %v2443 = vunpack.c.h.b16 %v2279
    %v2444 = vunpack.c.l.b16 %v2280
    %v2445 = vunpack.c.h.b16 %v2280
    %v2446 = vunpack.c.l.b16 %v2281
    %v2447 = vunpack.c.h.b16 %v2281
    %v2448 = vpack.c.b16 %v2442, %v2440
    %v2449 = vpack.c.b16 %v2443, %v2441
    %v2450 = vpack.c.b16 %v2446, %v2444
    %v2451 = vpack.c.b16 %v2447, %v2445
    %2452 = vrot.lane.b32.xlu0 %v2448, 64
    %v2453 = vpop.permute.xlu0 %2452
    %2454 = vrot.lane.b32.xlu0 %v2449, 64
    %v2455 = vpop.permute.xlu0 %2454
    %2456 = vrot.lane.b32.xlu0 %v2450, 64
    %v2457 = vpop.permute.xlu0 %2456
    %2458 = vrot.lane.b32.xlu0 %v2451, 64
    %v2459 = vpop.permute.xlu0 %2458
    %v2460 = vsel %vm1781, %v2453, %v2455
    %v2461 = vsel %vm1781, %v2457, %v2459
    %v2465 = vsel %vm241, %v2435, 0
    %2467 = vmatprep.subr.bf16.mxu0 0
    %2468 = vmatpush1.bf16.msra.mxu0 %v2460
    %2469 = vmatprep.subr.bf16.mxu0 0
    %2470 = vmatpush1.bf16.msra.mxu0 %v2461
    %2471 = vmatprep.subr.bf16.mxu0 0
    %2472 = vmatpush1.bf16.msra.mxu0 0
    %2473 = vmatprep.subr.bf16.mxu0 0
    %2474 = vmatpush1.bf16.msra.mxu0 0
    %2475 = vmatprep.subr.bf16.mxu0 0
    %2476 = vmatpush1.bf16.msra.mxu0 0
    %2477 = vmatprep.subr.bf16.mxu0 0
    %2478 = vmatpush1.bf16.msra.mxu0 0
    %2479 = vmatprep.subr.bf16.mxu0 0
    %2480 = vmatpush1.bf16.msra.mxu0 0
    %2481 = vmatprep.subr.bf16.mxu0 0
    %2482 = vmatpush1.bf16.msra.mxu0 0
    %2483 = vmatprep.subr.bf16.mxu0 0
    %2484 = vmatpush1.bf16.msra.mxu0 0
    %2485 = vmatprep.subr.bf16.mxu0 0
    %2486 = vmatpush1.bf16.msra.mxu0 0
    %2487 = vmatprep.subr.bf16.mxu0 0
    %2488 = vmatpush1.bf16.msra.mxu0 0
    %2489 = vmatprep.subr.bf16.mxu0 0
    %2490 = vmatpush1.bf16.msra.mxu0 0
    %2491 = vmatprep.subr.bf16.mxu0 0
    %2492 = vmatpush1.bf16.msra.mxu0 0
    %2493 = vmatprep.subr.bf16.mxu0 0
    %2494 = vmatpush1.bf16.msra.mxu0 0
    %2495 = vmatprep.subr.bf16.mxu0 0
    %2496 = vmatpush1.bf16.msra.mxu0 0
    %2497 = vmatprep.subr.bf16.mxu0 0
    %2498 = vmatpush1.bf16.msra.mxu0 0
    %2499 = vmatprep.mubr.bf16.mxu0 0
    %2500 = vmatmul.mubr.bf16.gmra.mrb[0].mxu0 %v2465
    %v2501 = vpop.f32.mrb[0].mxu0
    %v2502 = vadd.f32 0.0, %v2501
    %v2503 = vpop.f32.mrb[0].mxu0
    %v2504 = vpop.f32.mrb[0].mxu0
    %v2505 = vpop.f32.mrb[0].mxu0
    %2506 = vdwg.mxu0
    %v2507 = vmul.f32 %v2502, %v222
    %2508 = vrot.lane.b32.xlu0 %v224, 64
    %v2509 = vpop.permute.xlu0 %2508
    %v2511 = vmul.f32 %v2502, %v2509
    %2513 = vrot.lane.b32.xlu0 %v2511, 64
    %v2514 = vpop.permute.xlu0 %2513
    %v2516 = vadd.f32 %v2507, %v2514
    %v2517 = vmul.f32 %v2502, %v333
    %v2518 = vmul.f32 %v2502, %v323
    %2520 = vrot.lane.b32.xlu0 %v2518, 64
    %v2521 = vpop.permute.xlu0 %2520
    %v2523 = vadd.f32 %v2517, %v2521
    %2525 = vrot.lane.b32.xlu0 %v2516, 120
    %v2526 = vpop.permute.xlu0 %2525
    %2528 = vrot.lane.b32.xlu0 %v2516, 112
    %v2529 = vpop.permute.xlu0 %2528
    %2531 = vrot.lane.b32.xlu0 %v2516, 104
    %v2532 = vpop.permute.xlu0 %2531
    %v2534 = vcombine.low %v2516, %v2529
    %v2535 = vcombine.high %v2516, %v2529
    %v2537 = vunpack.c.l.s4 1983009808
    %v2538 = vunpack.c.0.s8 %v2537
    %v2539 = vlaneseq
    %v2540 = vshrl.u32 %v2539, 7
    %v2541 = vsub.s32 %v2538, %v2540
    %v2542 = vrot.slane %v2534, %v2541
    %v2544 = vunpack.c.l.s4 1983009808
    %v2545 = vunpack.c.0.s8 %v2544
    %v2546 = vlaneseq
    %v2547 = vshrl.u32 %v2546, 7
    %v2548 = vsub.s32 %v2545, %v2547
    %v2549 = vrot.slane %v2535, %v2548
    %v2550 = vcombine.low %v2526, %v2532
    %v2551 = vcombine.high %v2526, %v2532
    %v2553 = vunpack.c.l.s4 1983009808
    %v2554 = vunpack.c.0.s8 %v2553
    %v2555 = vlaneseq
    %v2556 = vshrl.u32 %v2555, 7
    %v2557 = vsub.s32 %v2554, %v2556
    %v2558 = vrot.slane %v2550, %v2557
    %v2560 = vunpack.c.l.s4 1983009808
    %v2561 = vunpack.c.0.s8 %v2560
    %v2562 = vlaneseq
    %v2563 = vshrl.u32 %v2562, 7
    %v2564 = vsub.s32 %v2561, %v2563
    %v2565 = vrot.slane %v2551, %v2564
    %v2566 = vcombine.low %v2542, %v2558
    %v2567 = vcombine.high %v2542, %v2558
    %v2569 = vunpack.c.l.s4 1934713408
    %v2570 = vunpack.c.0.s8 %v2569
    %v2571 = vlaneseq
    %v2572 = vshrl.u32 %v2571, 7
    %v2573 = vsub.s32 %v2570, %v2572
    %v2574 = vrot.slane %v2566, %v2573
    %v2576 = vunpack.c.l.s4 1934713408
    %v2577 = vunpack.c.0.s8 %v2576
    %v2578 = vlaneseq
    %v2579 = vshrl.u32 %v2578, 7
    %v2580 = vsub.s32 %v2577, %v2579
    %v2581 = vrot.slane %v2567, %v2580
    %v2582 = vcombine.low %v2549, %v2565
    %v2583 = vcombine.high %v2549, %v2565
    %v2585 = vunpack.c.l.s4 1934713408
    %v2586 = vunpack.c.0.s8 %v2585
    %v2587 = vlaneseq
    %v2588 = vshrl.u32 %v2587, 7
    %v2589 = vsub.s32 %v2586, %v2588
    %v2590 = vrot.slane %v2582, %v2589
    %v2592 = vunpack.c.l.s4 1934713408
    %v2593 = vunpack.c.0.s8 %v2592
    %v2594 = vlaneseq
    %v2595 = vshrl.u32 %v2594, 7
    %v2596 = vsub.s32 %v2593, %v2595
    %v2597 = vrot.slane %v2583, %v2596
    %v2598 = vcombine.high %v2574, 0.0
    %v2599 = vcombine.high %v2581, 0.0
    %v2600 = vcombine.high %v2590, 0.0
    %v2601 = vcombine.high %v2597, 0.0
    %v2602 = vcombine.low %v2574, %v2581
    %v2604 = vunpack.c.l.s4 1983009808
    %v2605 = vunpack.c.0.s8 %v2604
    %v2606 = vlaneseq
    %v2607 = vshrl.u32 %v2606, 7
    %v2608 = vsub.s32 %v2605, %v2607
    %v2609 = vrot.slane %v2602, %v2608
    %v2610 = vcombine.low %v2598, %v2599
    %v2612 = vunpack.c.l.s4 1983009808
    %v2613 = vunpack.c.0.s8 %v2612
    %v2614 = vlaneseq
    %v2615 = vshrl.u32 %v2614, 7
    %v2616 = vsub.s32 %v2613, %v2615
    %v2617 = vrot.slane %v2610, %v2616
    %v2618 = vcombine.low %v2590, %v2597
    %v2620 = vunpack.c.l.s4 1983009808
    %v2621 = vunpack.c.0.s8 %v2620
    %v2622 = vlaneseq
    %v2623 = vshrl.u32 %v2622, 7
    %v2624 = vsub.s32 %v2621, %v2623
    %v2625 = vrot.slane %v2618, %v2624
    %v2626 = vcombine.low %v2600, %v2601
    %v2628 = vunpack.c.l.s4 1983009808
    %v2629 = vunpack.c.0.s8 %v2628
    %v2630 = vlaneseq
    %v2631 = vshrl.u32 %v2630, 7
    %v2632 = vsub.s32 %v2629, %v2631
    %v2633 = vrot.slane %v2626, %v2632
    %v2634 = vcombine.low %v2609, %v2617
    %v2635 = vcombine.high %v2609, %v2617
    %v2637 = vunpack.c.l.s4 1934713408
    %v2638 = vunpack.c.0.s8 %v2637
    %v2639 = vlaneseq
    %v2640 = vshrl.u32 %v2639, 7
    %v2641 = vsub.s32 %v2638, %v2640
    %v2642 = vrot.slane %v2634, %v2641
    %v2644 = vunpack.c.l.s4 1934713408
    %v2645 = vunpack.c.0.s8 %v2644
    %v2646 = vlaneseq
    %v2647 = vshrl.u32 %v2646, 7
    %v2648 = vsub.s32 %v2645, %v2647
    %v2649 = vrot.slane %v2635, %v2648
    %v2650 = vcombine.low %v2625, %v2633
    %v2651 = vcombine.high %v2625, %v2633
    %v2653 = vunpack.c.l.s4 1934713408
    %v2654 = vunpack.c.0.s8 %v2653
    %v2655 = vlaneseq
    %v2656 = vshrl.u32 %v2655, 7
    %v2657 = vsub.s32 %v2654, %v2656
    %v2658 = vrot.slane %v2650, %v2657
    %v2660 = vunpack.c.l.s4 1934713408
    %v2661 = vunpack.c.0.s8 %v2660
    %v2662 = vlaneseq
    %v2663 = vshrl.u32 %v2662, 7
    %v2664 = vsub.s32 %v2661, %v2663
    %v2665 = vrot.slane %v2651, %v2664
    %v2666 = vcombine.low %v2642, %v2658
    %v2667 = vcombine.high %v2642, %v2658
    %v2668 = vcombine.low %v2649, %v2665
    %v2669 = vcombine.high %v2649, %v2665
    %2671 = vrot.lane.b32.xlu0 %v2523, 120
    %v2672 = vpop.permute.xlu0 %2671
    %2673 = vrot.lane.b32.xlu0 %v2523, 96
    %v2674 = vpop.permute.xlu0 %2673
    %2675 = vrot.lane.b32.xlu0 %v2672, 96
    %v2676 = vpop.permute.xlu0 %2675
    %v2679 = vcombine.high %v2674, 0.0
    %v2681 = vunpack.c.l.s4 1983009808
    %v2682 = vunpack.c.0.s8 %v2681
    %v2683 = vlaneseq
    %v2684 = vshrl.u32 %v2683, 7
    %v2685 = vsub.s32 %v2682, %v2684
    %v2686 = vrot.slane %v2674, %v2685
    %v2688 = vunpack.c.l.s4 1983009808
    %v2689 = vunpack.c.0.s8 %v2688
    %v2690 = vlaneseq
    %v2691 = vshrl.u32 %v2690, 7
    %v2692 = vsub.s32 %v2689, %v2691
    %v2693 = vrot.slane %v2679, %v2692
    %v2694 = vcombine.high %v2676, 0.0
    %v2696 = vunpack.c.l.s4 1983009808
    %v2697 = vunpack.c.0.s8 %v2696
    %v2698 = vlaneseq
    %v2699 = vshrl.u32 %v2698, 7
    %v2700 = vsub.s32 %v2697, %v2699
    %v2701 = vrot.slane %v2676, %v2700
    %v2703 = vunpack.c.l.s4 1983009808
    %v2704 = vunpack.c.0.s8 %v2703
    %v2705 = vlaneseq
    %v2706 = vshrl.u32 %v2705, 7
    %v2707 = vsub.s32 %v2704, %v2706
    %v2708 = vrot.slane %v2694, %v2707
    %v2709 = vcombine.low %v2686, %v2701
    %v2710 = vcombine.high %v2686, %v2701
    %v2712 = vunpack.c.l.s4 1934713408
    %v2713 = vunpack.c.0.s8 %v2712
    %v2714 = vlaneseq
    %v2715 = vshrl.u32 %v2714, 7
    %v2716 = vsub.s32 %v2713, %v2715
    %v2717 = vrot.slane %v2709, %v2716
    %v2719 = vunpack.c.l.s4 1934713408
    %v2720 = vunpack.c.0.s8 %v2719
    %v2721 = vlaneseq
    %v2722 = vshrl.u32 %v2721, 7
    %v2723 = vsub.s32 %v2720, %v2722
    %v2724 = vrot.slane %v2710, %v2723
    %v2725 = vcombine.low %v2693, %v2708
    %v2726 = vcombine.high %v2693, %v2708
    %v2728 = vunpack.c.l.s4 1934713408
    %v2729 = vunpack.c.0.s8 %v2728
    %v2730 = vlaneseq
    %v2731 = vshrl.u32 %v2730, 7
    %v2732 = vsub.s32 %v2729, %v2731
    %v2733 = vrot.slane %v2725, %v2732
    %v2735 = vunpack.c.l.s4 1934713408
    %v2736 = vunpack.c.0.s8 %v2735
    %v2737 = vlaneseq
    %v2738 = vshrl.u32 %v2737, 7
    %v2739 = vsub.s32 %v2736, %v2738
    %v2740 = vrot.slane %v2726, %v2739
    %v2741 = vcombine.high %v2717, 0.0
    %v2742 = vcombine.high %v2724, 0.0
    %v2743 = vcombine.high %v2733, 0.0
    %v2744 = vcombine.high %v2740, 0.0
    %v2745 = vcombine.low %v2717, %v2724
    %v2747 = vunpack.c.l.s4 1983009808
    %v2748 = vunpack.c.0.s8 %v2747
    %v2749 = vlaneseq
    %v2750 = vshrl.u32 %v2749, 7
    %v2751 = vsub.s32 %v2748, %v2750
    %v2752 = vrot.slane %v2745, %v2751
    %v2753 = vcombine.low %v2741, %v2742
    %v2755 = vunpack.c.l.s4 1983009808
    %v2756 = vunpack.c.0.s8 %v2755
    %v2757 = vlaneseq
    %v2758 = vshrl.u32 %v2757, 7
    %v2759 = vsub.s32 %v2756, %v2758
    %v2760 = vrot.slane %v2753, %v2759
    %v2761 = vcombine.low %v2733, %v2740
    %v2763 = vunpack.c.l.s4 1983009808
    %v2764 = vunpack.c.0.s8 %v2763
    %v2765 = vlaneseq
    %v2766 = vshrl.u32 %v2765, 7
    %v2767 = vsub.s32 %v2764, %v2766
    %v2768 = vrot.slane %v2761, %v2767
    %v2769 = vcombine.low %v2743, %v2744
    %v2771 = vunpack.c.l.s4 1983009808
    %v2772 = vunpack.c.0.s8 %v2771
    %v2773 = vlaneseq
    %v2774 = vshrl.u32 %v2773, 7
    %v2775 = vsub.s32 %v2772, %v2774
    %v2776 = vrot.slane %v2769, %v2775
    %v2777 = vcombine.low %v2752, %v2760
    %v2779 = vunpack.c.l.s4 1934713408
    %v2780 = vunpack.c.0.s8 %v2779
    %v2781 = vlaneseq
    %v2782 = vshrl.u32 %v2781, 7
    %v2783 = vsub.s32 %v2780, %v2782
    %v2784 = vrot.slane %v2777, %v2783
    %v2785 = vcombine.low %v2768, %v2776
    %v2787 = vunpack.c.l.s4 1934713408
    %v2788 = vunpack.c.0.s8 %v2787
    %v2789 = vlaneseq
    %v2790 = vshrl.u32 %v2789, 7
    %v2791 = vsub.s32 %v2788, %v2790
    %v2792 = vrot.slane %v2785, %v2791
    %v2793 = vcombine.low %v2784, %v2792
    %v2794 = vcombine.high %v2784, %v2792
    %2796 = vrot.lane.b32.xlu0 %v2502, 120
    %v2797 = vpop.permute.xlu0 %2796
    %2798 = vrot.lane.b32.xlu0 %v2502, 80
    %v2799 = vpop.permute.xlu0 %2798
    %2800 = vrot.lane.b32.xlu0 %v2797, 80
    %v2801 = vpop.permute.xlu0 %2800
    %v2804 = vcombine.high %v2799, 0.0
    %v2806 = vunpack.c.l.s4 1983009808
    %v2807 = vunpack.c.0.s8 %v2806
    %v2808 = vlaneseq
    %v2809 = vshrl.u32 %v2808, 7
    %v2810 = vsub.s32 %v2807, %v2809
    %v2811 = vrot.slane %v2799, %v2810
    %v2813 = vunpack.c.l.s4 1983009808
    %v2814 = vunpack.c.0.s8 %v2813
    %v2815 = vlaneseq
    %v2816 = vshrl.u32 %v2815, 7
    %v2817 = vsub.s32 %v2814, %v2816
    %v2818 = vrot.slane %v2804, %v2817
    %v2819 = vcombine.high %v2801, 0.0
    %v2821 = vunpack.c.l.s4 1983009808
    %v2822 = vunpack.c.0.s8 %v2821
    %v2823 = vlaneseq
    %v2824 = vshrl.u32 %v2823, 7
    %v2825 = vsub.s32 %v2822, %v2824
    %v2826 = vrot.slane %v2801, %v2825
    %v2828 = vunpack.c.l.s4 1983009808
    %v2829 = vunpack.c.0.s8 %v2828
    %v2830 = vlaneseq
    %v2831 = vshrl.u32 %v2830, 7
    %v2832 = vsub.s32 %v2829, %v2831
    %v2833 = vrot.slane %v2819, %v2832
    %v2834 = vcombine.low %v2811, %v2826
    %v2835 = vcombine.high %v2811, %v2826
    %v2837 = vunpack.c.l.s4 1934713408
    %v2838 = vunpack.c.0.s8 %v2837
    %v2839 = vlaneseq
    %v2840 = vshrl.u32 %v2839, 7
    %v2841 = vsub.s32 %v2838, %v2840
    %v2842 = vrot.slane %v2834, %v2841
    %v2844 = vunpack.c.l.s4 1934713408
    %v2845 = vunpack.c.0.s8 %v2844
    %v2846 = vlaneseq
    %v2847 = vshrl.u32 %v2846, 7
    %v2848 = vsub.s32 %v2845, %v2847
    %v2849 = vrot.slane %v2835, %v2848
    %v2850 = vcombine.low %v2818, %v2833
    %v2851 = vcombine.high %v2818, %v2833
    %v2853 = vunpack.c.l.s4 1934713408
    %v2854 = vunpack.c.0.s8 %v2853
    %v2855 = vlaneseq
    %v2856 = vshrl.u32 %v2855, 7
    %v2857 = vsub.s32 %v2854, %v2856
    %v2858 = vrot.slane %v2850, %v2857
    %v2860 = vunpack.c.l.s4 1934713408
    %v2861 = vunpack.c.0.s8 %v2860
    %v2862 = vlaneseq
    %v2863 = vshrl.u32 %v2862, 7
    %v2864 = vsub.s32 %v2861, %v2863
    %v2865 = vrot.slane %v2851, %v2864
    %v2866 = vcombine.high %v2842, 0.0
    %v2867 = vcombine.high %v2849, 0.0
    %v2868 = vcombine.high %v2858, 0.0
    %v2869 = vcombine.high %v2865, 0.0
    %v2870 = vcombine.low %v2842, %v2849
    %v2872 = vunpack.c.l.s4 1983009808
    %v2873 = vunpack.c.0.s8 %v2872
    %v2874 = vlaneseq
    %v2875 = vshrl.u32 %v2874, 7
    %v2876 = vsub.s32 %v2873, %v2875
    %v2877 = vrot.slane %v2870, %v2876
    %v2878 = vcombine.low %v2866, %v2867
    %v2880 = vunpack.c.l.s4 1983009808
    %v2881 = vunpack.c.0.s8 %v2880
    %v2882 = vlaneseq
    %v2883 = vshrl.u32 %v2882, 7
    %v2884 = vsub.s32 %v2881, %v2883
    %v2885 = vrot.slane %v2878, %v2884
    %v2886 = vcombine.low %v2858, %v2865
    %v2888 = vunpack.c.l.s4 1983009808
    %v2889 = vunpack.c.0.s8 %v2888
    %v2890 = vlaneseq
    %v2891 = vshrl.u32 %v2890, 7
    %v2892 = vsub.s32 %v2889, %v2891
    %v2893 = vrot.slane %v2886, %v2892
    %v2894 = vcombine.low %v2868, %v2869
    %v2896 = vunpack.c.l.s4 1983009808
    %v2897 = vunpack.c.0.s8 %v2896
    %v2898 = vlaneseq
    %v2899 = vshrl.u32 %v2898, 7
    %v2900 = vsub.s32 %v2897, %v2899
    %v2901 = vrot.slane %v2894, %v2900
    %v2902 = vcombine.low %v2877, %v2885
    %v2904 = vunpack.c.l.s4 1934713408
    %v2905 = vunpack.c.0.s8 %v2904
    %v2906 = vlaneseq
    %v2907 = vshrl.u32 %v2906, 7
    %v2908 = vsub.s32 %v2905, %v2907
    %v2909 = vrot.slane %v2902, %v2908
    %v2910 = vcombine.low %v2893, %v2901
    %v2912 = vunpack.c.l.s4 1934713408
    %v2913 = vunpack.c.0.s8 %v2912
    %v2914 = vlaneseq
    %v2915 = vshrl.u32 %v2914, 7
    %v2916 = vsub.s32 %v2913, %v2915
    %v2917 = vrot.slane %v2910, %v2916
    %v2918 = vcombine.low %v2909, %v2917
    %v2919 = vcombine.high %v2909, %v2917
    %v2921 = vsel %vm798, %v2666, 0
    %v2924 = vsel %vm798, %v2667, 0
    %v2927 = vsel %vm798, %v2793, 0
    %2929 = vmatprep.subr.mxu0 0.0
    %2930 = vmatpush1.xpose.msra.mxu0 %v2927
    %2931 = vmatprep.subr.mxu0 0.0
    %2932 = vmatpush1.xpose.msra.mxu0 0.0
    %2933 = vmatprep.subr.mxu0 0.0
    %2934 = vmatpush1.xpose.msra.mxu0 0.0
    %2935 = vmatprep.subr.mxu0 0.0
    %2936 = vmatpush1.xpose.msra.mxu0 0.0
    %2937 = vmatprep.subr.mxu0 0.0
    %2938 = vmatpush1.xpose.msra.mxu0 0.0
    %2939 = vmatprep.subr.mxu0 0.0
    %2940 = vmatpush1.xpose.msra.mxu0 0.0
    %2941 = vmatprep.subr.mxu0 0.0
    %2942 = vmatpush1.xpose.msra.mxu0 0.0
    %2943 = vmatprep.subr.mxu0 0.0
    %2944 = vmatpush1.xpose.msra.mxu0 0.0
    %2945 = vmatprep.subr.mxu0 0.0
    %2946 = vmatpush1.xpose.msra.mxu0 0.0
    %2947 = vmatprep.subr.mxu0 0.0
    %2948 = vmatpush1.xpose.msra.mxu0 0.0
    %2949 = vmatprep.subr.mxu0 0.0
    %2950 = vmatpush1.xpose.msra.mxu0 0.0
    %2951 = vmatprep.subr.mxu0 0.0
    %2952 = vmatpush1.xpose.msra.mxu0 0.0
    %2953 = vmatprep.subr.mxu0 0.0
    %2954 = vmatpush1.xpose.msra.mxu0 0.0
    %2955 = vmatprep.subr.mxu0 0.0
    %2956 = vmatpush1.xpose.msra.mxu0 0.0
    %2957 = vmatprep.subr.mxu0 0.0
    %2958 = vmatpush1.xpose.msra.mxu0 0.0
    %2959 = vmatprep.subr.mxu0 0.0
    %2960 = vmatpush1.xpose.msra.mxu0 0.0
    %2961 = vmatprep.subr.mxu0 0.0
    %2962 = vmatpush1.xpose.msra.mxu0 0.0
    %2963 = vmatprep.subr.mxu0 0.0
    %2964 = vmatpush1.xpose.msra.mxu0 0.0
    %2965 = vmatprep.subr.mxu0 0.0
    %2966 = vmatpush1.xpose.msra.mxu0 0.0
    %2967 = vmatprep.subr.mxu0 0.0
    %2968 = vmatpush1.xpose.msra.mxu0 0.0
    %2969 = vmatprep.subr.mxu0 0.0
    %2970 = vmatpush1.xpose.msra.mxu0 0.0
    %2971 = vmatprep.subr.mxu0 0.0
    %2972 = vmatpush1.xpose.msra.mxu0 0.0
    %2973 = vmatprep.subr.mxu0 0.0
    %2974 = vmatpush1.xpose.msra.mxu0 0.0
    %2975 = vmatprep.subr.mxu0 0.0
    %2976 = vmatpush1.xpose.msra.mxu0 0.0
    %2977 = vmatprep.subr.mxu0 0.0
    %2978 = vmatpush1.xpose.msra.mxu0 0.0
    %2979 = vmatprep.subr.mxu0 0.0
    %2980 = vmatpush1.xpose.msra.mxu0 0.0
    %2981 = vmatprep.subr.mxu0 0.0
    %2982 = vmatpush1.xpose.msra.mxu0 0.0
    %2983 = vmatprep.subr.mxu0 0.0
    %2984 = vmatpush1.xpose.msra.mxu0 0.0
    %2985 = vmatprep.subr.mxu0 0.0
    %2986 = vmatpush1.xpose.msra.mxu0 0.0
    %2987 = vmatprep.subr.mxu0 0.0
    %2988 = vmatpush1.xpose.msra.mxu0 0.0
    %2989 = vmatprep.subr.mxu0 0.0
    %2990 = vmatpush1.xpose.msra.mxu0 0.0
    %2991 = vmatprep.subr.mxu0 0.0
    %2992 = vmatpush1.xpose.msra.mxu0 0.0
    %2993 = vmatprep.mubr.f32.mxu0 0.0
    %2994 = vmatmul.mubr.f32.gmra.mrb[0].mxu0 %v2921
    %v2995 = vpop.f32.mrb[0].mxu0
    %v2996 = vadd.f32 0.0, %v2995
    %v2997 = vpop.f32.mrb[0].mxu0
    %2998 = vmatprep.mubr.f32.mxu0 0.0
    %2999 = vmatmul.mubr.f32.gmra.mrb[0].mxu0 %v2924
    %v3000 = vpop.f32.mrb[0].mxu0
    %v3001 = vadd.f32 0.0, %v3000
    %v3002 = vpop.f32.mrb[0].mxu0
    %3003 = vdwg.mxu0
    %v3005 = vsel %vm798, %v2668, 0
    %v3008 = vsel %vm798, %v2669, 0
    %v3011 = vsel %vm798, %v2794, 0
    %3013 = vmatprep.subr.mxu0 0.0
    %3014 = vmatpush1.xpose.msra.mxu0 %v3011
    %3015 = vmatprep.subr.mxu0 0.0
    %3016 = vmatpush1.xpose.msra.mxu0 0.0
    %3017 = vmatprep.subr.mxu0 0.0
    %3018 = vmatpush1.xpose.msra.mxu0 0.0
    %3019 = vmatprep.subr.mxu0 0.0
    %3020 = vmatpush1.xpose.msra.mxu0 0.0
    %3021 = vmatprep.subr.mxu0 0.0
    %3022 = vmatpush1.xpose.msra.mxu0 0.0
    %3023 = vmatprep.subr.mxu0 0.0
    %3024 = vmatpush1.xpose.msra.mxu0 0.0
    %3025 = vmatprep.subr.mxu0 0.0
    %3026 = vmatpush1.xpose.msra.mxu0 0.0
    %3027 = vmatprep.subr.mxu0 0.0
    %3028 = vmatpush1.xpose.msra.mxu0 0.0
    %3029 = vmatprep.subr.mxu0 0.0
    %3030 = vmatpush1.xpose.msra.mxu0 0.0
    %3031 = vmatprep.subr.mxu0 0.0
    %3032 = vmatpush1.xpose.msra.mxu0 0.0
    %3033 = vmatprep.subr.mxu0 0.0
    %3034 = vmatpush1.xpose.msra.mxu0 0.0
    %3035 = vmatprep.subr.mxu0 0.0
    %3036 = vmatpush1.xpose.msra.mxu0 0.0
    %3037 = vmatprep.subr.mxu0 0.0
    %3038 = vmatpush1.xpose.msra.mxu0 0.0
    %3039 = vmatprep.subr.mxu0 0.0
    %3040 = vmatpush1.xpose.msra.mxu0 0.0
    %3041 = vmatprep.subr.mxu0 0.0
    %3042 = vmatpush1.xpose.msra.mxu0 0.0
    %3043 = vmatprep.subr.mxu0 0.0
    %3044 = vmatpush1.xpose.msra.mxu0 0.0
    %3045 = vmatprep.subr.mxu0 0.0
    %3046 = vmatpush1.xpose.msra.mxu0 0.0
    %3047 = vmatprep.subr.mxu0 0.0
    %3048 = vmatpush1.xpose.msra.mxu0 0.0
    %3049 = vmatprep.subr.mxu0 0.0
    %3050 = vmatpush1.xpose.msra.mxu0 0.0
    %3051 = vmatprep.subr.mxu0 0.0
    %3052 = vmatpush1.xpose.msra.mxu0 0.0
    %3053 = vmatprep.subr.mxu0 0.0
    %3054 = vmatpush1.xpose.msra.mxu0 0.0
    %3055 = vmatprep.subr.mxu0 0.0
    %3056 = vmatpush1.xpose.msra.mxu0 0.0
    %3057 = vmatprep.subr.mxu0 0.0
    %3058 = vmatpush1.xpose.msra.mxu0 0.0
    %3059 = vmatprep.subr.mxu0 0.0
    %3060 = vmatpush1.xpose.msra.mxu0 0.0
    %3061 = vmatprep.subr.mxu0 0.0
    %3062 = vmatpush1.xpose.msra.mxu0 0.0
    %3063 = vmatprep.subr.mxu0 0.0
    %3064 = vmatpush1.xpose.msra.mxu0 0.0
    %3065 = vmatprep.subr.mxu0 0.0
    %3066 = vmatpush1.xpose.msra.mxu0 0.0
    %3067 = vmatprep.subr.mxu0 0.0
    %3068 = vmatpush1.xpose.msra.mxu0 0.0
    %3069 = vmatprep.subr.mxu0 0.0
    %3070 = vmatpush1.xpose.msra.mxu0 0.0
    %3071 = vmatprep.subr.mxu0 0.0
    %3072 = vmatpush1.xpose.msra.mxu0 0.0
    %3073 = vmatprep.subr.mxu0 0.0
    %3074 = vmatpush1.xpose.msra.mxu0 0.0
    %3075 = vmatprep.subr.mxu0 0.0
    %3076 = vmatpush1.xpose.msra.mxu0 0.0
    %3077 = vmatprep.mubr.f32.mxu0 0.0
    %3078 = vmatmul.mubr.f32.gmra.mrb[0].mxu0 %v3005
    %v3079 = vpop.f32.mrb[0].mxu0
    %v3080 = vadd.f32 0.0, %v3079
    %v3081 = vpop.f32.mrb[0].mxu0
    %3082 = vmatprep.mubr.f32.mxu0 0.0
    %3083 = vmatmul.mubr.f32.gmra.mrb[0].mxu0 %v3008
    %v3084 = vpop.f32.mrb[0].mxu0
    %v3085 = vadd.f32 0.0, %v3084
    %v3086 = vpop.f32.mrb[0].mxu0
    %3087 = vdwg.mxu0
    %v3088 = vmul.f32 %v2996, 0.35355338
    %v3089 = vmul.f32 %v3001, 0.35355338
    %v3090 = vmul.f32 %v3080, 0.35355338
    %v3091 = vmul.f32 %v3085, 0.35355338
    %v3092 = vadd.f32 %v3088, %v230
    %v3093 = vadd.f32 %v3089, %v230
    %v3094 = vadd.f32 %v3090, %v230
    %v3095 = vadd.f32 %v3091, %v230
    %v3096 = vsel %vm798, %v3092, -inf
    %3097 = vmax.xlane.f32.xlu0 %v3096
    %v3098 = vpop.xlane.xlu0 %3097
    %v3099 = vsel %vm798, %v3093, -inf
    %3100 = vmax.xlane.f32.xlu0 %v3099
    %v3101 = vpop.xlane.xlu0 %3100
    %v3102 = vsel %vm798, %v3094, -inf
    %3103 = vmax.xlane.f32.xlu0 %v3102
    %v3104 = vpop.xlane.xlu0 %3103
    %v3105 = vsel %vm798, %v3095, -inf
    %3106 = vmax.xlane.f32.xlu0 %v3105
    %v3107 = vpop.xlane.xlu0 %3106
    %v3108 = vsub.f32 %v3092, %v3098
    %v3109 = vsub.f32 %v3093, %v3101
    %v3110 = vsub.f32 %v3094, %v3104
    %v3111 = vsub.f32 %v3095, %v3107
    %v3112 = vmul.f32 %v3108, 1.442695
    %v3113 = vpow.pop %v3112
    %v3114 = vmul.f32 %v3109, 1.442695
    %v3115 = vpow.pop %v3114
    %v3116 = vmul.f32 %v3110, 1.442695
    %v3117 = vpow.pop %v3116
    %v3118 = vmul.f32 %v3111, 1.442695
    %v3119 = vpow.pop %v3118
    %v3120 = vsel %vm798, %v3113, 0.0
    %3121 = vadd.xlane.f32.xlu0 %v3120
    %v3122 = vpop.xlane.xlu0 %3121
    %v3123 = vsel %vm798, %v3115, 0.0
    %3124 = vadd.xlane.f32.xlu0 %v3123
    %v3125 = vpop.xlane.xlu0 %3124
    %v3126 = vsel %vm798, %v3117, 0.0
    %3127 = vadd.xlane.f32.xlu0 %v3126
    %v3128 = vpop.xlane.xlu0 %3127
    %v3129 = vsel %vm798, %v3119, 0.0
    %3130 = vadd.xlane.f32.xlu0 %v3129
    %v3131 = vpop.xlane.xlu0 %3130
    %v3132 = vrcp.pop %v3122
    %v3133 = vrcp.pop %v3125
    %v3134 = vrcp.pop %v3128
    %v3135 = vrcp.pop %v3131
    %v3136 = vmul.f32 %v3113, %v3132
    %v3137 = vmul.f32 %v3115, %v3133
    %v3138 = vmul.f32 %v3117, %v3134
    %v3139 = vmul.f32 %v3119, %v3135
    %v3141 = vsel %vm798, %v3136, 0
    %v3144 = vsel %vm798, %v3137, 0
    %3146 = vmatprep.subr.mxu0 0.0
    %3147 = vmatpush1.msra.mxu0 %v2918
    %3148 = vmatprep.subr.mxu0 0.0
    %3149 = vmatpush1.msra.mxu0 0.0
    %3150 = vmatprep.subr.mxu0 0.0
    %3151 = vmatpush1.msra.mxu0 0.0
    %3152 = vmatprep.subr.mxu0 0.0
    %3153 = vmatpush1.msra.mxu0 0.0
    %3154 = vmatprep.subr.mxu0 0.0
    %3155 = vmatpush1.msra.mxu0 0.0
    %3156 = vmatprep.subr.mxu0 0.0
    %3157 = vmatpush1.msra.mxu0 0.0
    %3158 = vmatprep.subr.mxu0 0.0
    %3159 = vmatpush1.msra.mxu0 0.0
    %3160 = vmatprep.subr.mxu0 0.0
    %3161 = vmatpush1.msra.mxu0 0.0
    %3162 = vmatprep.subr.mxu0 0.0
    %3163 = vmatpush1.msra.mxu0 0.0
    %3164 = vmatprep.subr.mxu0 0.0
    %3165 = vmatpush1.msra.mxu0 0.0
    %3166 = vmatprep.subr.mxu0 0.0
    %3167 = vmatpush1.msra.mxu0 0.0
    %3168 = vmatprep.subr.mxu0 0.0
    %3169 = vmatpush1.msra.mxu0 0.0
    %3170 = vmatprep.subr.mxu0 0.0
    %3171 = vmatpush1.msra.mxu0 0.0
    %3172 = vmatprep.subr.mxu0 0.0
    %3173 = vmatpush1.msra.mxu0 0.0
    %3174 = vmatprep.subr.mxu0 0.0
    %3175 = vmatpush1.msra.mxu0 0.0
    %3176 = vmatprep.subr.mxu0 0.0
    %3177 = vmatpush1.msra.mxu0 0.0
    %3178 = vmatprep.subr.mxu0 0.0
    %3179 = vmatpush1.msra.mxu0 0.0
    %3180 = vmatprep.subr.mxu0 0.0
    %3181 = vmatpush1.msra.mxu0 0.0
    %3182 = vmatprep.subr.mxu0 0.0
    %3183 = vmatpush1.msra.mxu0 0.0
    %3184 = vmatprep.subr.mxu0 0.0
    %3185 = vmatpush1.msra.mxu0 0.0
    %3186 = vmatprep.subr.mxu0 0.0
    %3187 = vmatpush1.msra.mxu0 0.0
    %3188 = vmatprep.subr.mxu0 0.0
    %3189 = vmatpush1.msra.mxu0 0.0
    %3190 = vmatprep.subr.mxu0 0.0
    %3191 = vmatpush1.msra.mxu0 0.0
    %3192 = vmatprep.subr.mxu0 0.0
    %3193 = vmatpush1.msra.mxu0 0.0
    %3194 = vmatprep.subr.mxu0 0.0
    %3195 = vmatpush1.msra.mxu0 0.0
    %3196 = vmatprep.subr.mxu0 0.0
    %3197 = vmatpush1.msra.mxu0 0.0
    %3198 = vmatprep.subr.mxu0 0.0
    %3199 = vmatpush1.msra.mxu0 0.0
    %3200 = vmatprep.subr.mxu0 0.0
    %3201 = vmatpush1.msra.mxu0 0.0
    %3202 = vmatprep.subr.mxu0 0.0
    %3203 = vmatpush1.msra.mxu0 0.0
    %3204 = vmatprep.subr.mxu0 0.0
    %3205 = vmatpush1.msra.mxu0 0.0
    %3206 = vmatprep.subr.mxu0 0.0
    %3207 = vmatpush1.msra.mxu0 0.0
    %3208 = vmatprep.subr.mxu0 0.0
    %3209 = vmatpush1.msra.mxu0 0.0
    %3210 = vmatprep.mubr.f32.mxu0 0.0
    %3211 = vmatmul.mubr.f32.gmra.mrb[0].mxu0 %v3141
    %v3212 = vpop.f32.mrb[0].mxu0
    %v3213 = vadd.f32 0.0, %v3212
    %v3214 = vpop.f32.mrb[0].mxu0
    %3215 = vmatprep.mubr.f32.mxu0 0.0
    %3216 = vmatmul.mubr.f32.gmra.mrb[0].mxu0 %v3144
    %v3217 = vpop.f32.mrb[0].mxu0
    %v3218 = vadd.f32 0.0, %v3217
    %v3219 = vpop.f32.mrb[0].mxu0
    %3220 = vdwg.mxu0
    %v3222 = vsel %vm798, %v3138, 0
    %v3225 = vsel %vm798, %v3139, 0
    %3227 = vmatprep.subr.mxu0 0.0
    %3228 = vmatpush1.msra.mxu0 %v2919
    %3229 = vmatprep.subr.mxu0 0.0
    %3230 = vmatpush1.msra.mxu0 0.0
    %3231 = vmatprep.subr.mxu0 0.0
    %3232 = vmatpush1.msra.mxu0 0.0
    %3233 = vmatprep.subr.mxu0 0.0
    %3234 = vmatpush1.msra.mxu0 0.0
    %3235 = vmatprep.subr.mxu0 0.0
    %3236 = vmatpush1.msra.mxu0 0.0
    %3237 = vmatprep.subr.mxu0 0.0
    %3238 = vmatpush1.msra.mxu0 0.0
    %3239 = vmatprep.subr.mxu0 0.0
    %3240 = vmatpush1.msra.mxu0 0.0
    %3241 = vmatprep.subr.mxu0 0.0
    %3242 = vmatpush1.msra.mxu0 0.0
    %3243 = vmatprep.subr.mxu0 0.0
    %3244 = vmatpush1.msra.mxu0 0.0
    %3245 = vmatprep.subr.mxu0 0.0
    %3246 = vmatpush1.msra.mxu0 0.0
    %3247 = vmatprep.subr.mxu0 0.0
    %3248 = vmatpush1.msra.mxu0 0.0
    %3249 = vmatprep.subr.mxu0 0.0
    %3250 = vmatpush1.msra.mxu0 0.0
    %3251 = vmatprep.subr.mxu0 0.0
    %3252 = vmatpush1.msra.mxu0 0.0
    %3253 = vmatprep.subr.mxu0 0.0
    %3254 = vmatpush1.msra.mxu0 0.0
    %3255 = vmatprep.subr.mxu0 0.0
    %3256 = vmatpush1.msra.mxu0 0.0
    %3257 = vmatprep.subr.mxu0 0.0
    %3258 = vmatpush1.msra.mxu0 0.0
    %3259 = vmatprep.subr.mxu0 0.0
    %3260 = vmatpush1.msra.mxu0 0.0
    %3261 = vmatprep.subr.mxu0 0.0
    %3262 = vmatpush1.msra.mxu0 0.0
    %3263 = vmatprep.subr.mxu0 0.0
    %3264 = vmatpush1.msra.mxu0 0.0
    %3265 = vmatprep.subr.mxu0 0.0
    %3266 = vmatpush1.msra.mxu0 0.0
    %3267 = vmatprep.subr.mxu0 0.0
    %3268 = vmatpush1.msra.mxu0 0.0
    %3269 = vmatprep.subr.mxu0 0.0
    %3270 = vmatpush1.msra.mxu0 0.0
    %3271 = vmatprep.subr.mxu0 0.0
    %3272 = vmatpush1.msra.mxu0 0.0
    %3273 = vmatprep.subr.mxu0 0.0
    %3274 = vmatpush1.msra.mxu0 0.0
    %3275 = vmatprep.subr.mxu0 0.0
    %3276 = vmatpush1.msra.mxu0 0.0
    %3277 = vmatprep.subr.mxu0 0.0
    %3278 = vmatpush1.msra.mxu0 0.0
    %3279 = vmatprep.subr.mxu0 0.0
    %3280 = vmatpush1.msra.mxu0 0.0
    %3281 = vmatprep.subr.mxu0 0.0
    %3282 = vmatpush1.msra.mxu0 0.0
    %3283 = vmatprep.subr.mxu0 0.0
    %3284 = vmatpush1.msra.mxu0 0.0
    %3285 = vmatprep.subr.mxu0 0.0
    %3286 = vmatpush1.msra.mxu0 0.0
    %3287 = vmatprep.subr.mxu0 0.0
    %3288 = vmatpush1.msra.mxu0 0.0
    %3289 = vmatprep.subr.mxu0 0.0
    %3290 = vmatpush1.msra.mxu0 0.0
    %3291 = vmatprep.mubr.f32.mxu0 0.0
    %3292 = vmatmul.mubr.f32.gmra.mrb[0].mxu0 %v3222
    %v3293 = vpop.f32.mrb[0].mxu0
    %v3294 = vadd.f32 0.0, %v3293
    %v3295 = vpop.f32.mrb[0].mxu0
    %3296 = vmatprep.mubr.f32.mxu0 0.0
    %3297 = vmatmul.mubr.f32.gmra.mrb[0].mxu0 %v3225
    %v3298 = vpop.f32.mrb[0].mxu0
    %v3299 = vadd.f32 0.0, %v3298
    %v3300 = vpop.f32.mrb[0].mxu0
    %3301 = vdwg.mxu0
    %v3302 = vcombine.low %v3213, %v3294
    %v3303 = vcombine.high %v3213, %v3294
    %v3305 = vunpack.c.l.s4 1983009808
    %v3306 = vunpack.c.0.s8 %v3305
    %v3307 = vlaneseq
    %v3308 = vshrl.u32 %v3307, 7
    %v3309 = vsub.s32 %v3306, %v3308
    %v3310 = vrot.slane %v3302, %v3309
    %v3312 = vunpack.c.l.s4 1983009808
    %v3313 = vunpack.c.0.s8 %v3312
    %v3314 = vlaneseq
    %v3315 = vshrl.u32 %v3314, 7
    %v3316 = vsub.s32 %v3313, %v3315
    %v3317 = vrot.slane %v3303, %v3316
    %v3318 = vcombine.low %v3218, %v3299
    %v3319 = vcombine.high %v3218, %v3299
    %v3321 = vunpack.c.l.s4 1983009808
    %v3322 = vunpack.c.0.s8 %v3321
    %v3323 = vlaneseq
    %v3324 = vshrl.u32 %v3323, 7
    %v3325 = vsub.s32 %v3322, %v3324
    %v3326 = vrot.slane %v3318, %v3325
    %v3328 = vunpack.c.l.s4 1983009808
    %v3329 = vunpack.c.0.s8 %v3328
    %v3330 = vlaneseq
    %v3331 = vshrl.u32 %v3330, 7
    %v3332 = vsub.s32 %v3329, %v3331
    %v3333 = vrot.slane %v3319, %v3332
    %v3334 = vcombine.low %v3310, %v3326
    %v3335 = vcombine.high %v3310, %v3326
    %v3337 = vunpack.c.l.s4 1934713408
    %v3338 = vunpack.c.0.s8 %v3337
    %v3339 = vlaneseq
    %v3340 = vshrl.u32 %v3339, 7
    %v3341 = vsub.s32 %v3338, %v3340
    %v3342 = vrot.slane %v3334, %v3341
    %v3344 = vunpack.c.l.s4 1934713408
    %v3345 = vunpack.c.0.s8 %v3344
    %v3346 = vlaneseq
    %v3347 = vshrl.u32 %v3346, 7
    %v3348 = vsub.s32 %v3345, %v3347
    %v3349 = vrot.slane %v3335, %v3348
    %v3350 = vcombine.low %v3317, %v3333
    %v3351 = vcombine.high %v3317, %v3333
    %v3353 = vunpack.c.l.s4 1934713408
    %v3354 = vunpack.c.0.s8 %v3353
    %v3355 = vlaneseq
    %v3356 = vshrl.u32 %v3355, 7
    %v3357 = vsub.s32 %v3354, %v3356
    %v3358 = vrot.slane %v3350, %v3357
    %v3360 = vunpack.c.l.s4 1934713408
    %v3361 = vunpack.c.0.s8 %v3360
    %v3362 = vlaneseq
    %v3363 = vshrl.u32 %v3362, 7
    %v3364 = vsub.s32 %v3361, %v3363
    %v3365 = vrot.slane %v3351, %v3364
    %v3366 = vcombine.high %v3342, 0.0
    %v3367 = vcombine.high %v3349, 0.0
    %v3368 = vcombine.high %v3358, 0.0
    %v3369 = vcombine.high %v3365, 0.0
    %v3370 = vcombine.low %v3342, %v3349
    %v3372 = vunpack.c.l.s4 1983009808
    %v3373 = vunpack.c.0.s8 %v3372
    %v3374 = vlaneseq
    %v3375 = vshrl.u32 %v3374, 7
    %v3376 = vsub.s32 %v3373, %v3375
    %v3377 = vrot.slane %v3370, %v3376
    %v3378 = vcombine.low %v3366, %v3367
    %v3380 = vunpack.c.l.s4 1983009808
    %v3381 = vunpack.c.0.s8 %v3380
    %v3382 = vlaneseq
    %v3383 = vshrl.u32 %v3382, 7
    %v3384 = vsub.s32 %v3381, %v3383
    %v3385 = vrot.slane %v3378, %v3384
    %v3386 = vcombine.low %v3358, %v3365
    %v3388 = vunpack.c.l.s4 1983009808
    %v3389 = vunpack.c.0.s8 %v3388
    %v3390 = vlaneseq
    %v3391 = vshrl.u32 %v3390, 7
    %v3392 = vsub.s32 %v3389, %v3391
    %v3393 = vrot.slane %v3386, %v3392
    %v3394 = vcombine.low %v3368, %v3369
    %v3396 = vunpack.c.l.s4 1983009808
    %v3397 = vunpack.c.0.s8 %v3396
    %v3398 = vlaneseq
    %v3399 = vshrl.u32 %v3398, 7
    %v3400 = vsub.s32 %v3397, %v3399
    %v3401 = vrot.slane %v3394, %v3400
    %v3402 = vcombine.low %v3377, %v3385
    %v3403 = vcombine.high %v3377, %v3385
    %v3405 = vunpack.c.l.s4 1934713408
    %v3406 = vunpack.c.0.s8 %v3405
    %v3407 = vlaneseq
    %v3408 = vshrl.u32 %v3407, 7
    %v3409 = vsub.s32 %v3406, %v3408
    %v3410 = vrot.slane %v3402, %v3409
    %v3412 = vunpack.c.l.s4 1934713408
    %v3413 = vunpack.c.0.s8 %v3412
    %v3414 = vlaneseq
    %v3415 = vshrl.u32 %v3414, 7
    %v3416 = vsub.s32 %v3413, %v3415
    %v3417 = vrot.slane %v3403, %v3416
    %v3418 = vcombine.low %v3393, %v3401
    %v3419 = vcombine.high %v3393, %v3401
    %v3421 = vunpack.c.l.s4 1934713408
    %v3422 = vunpack.c.0.s8 %v3421
    %v3423 = vlaneseq
    %v3424 = vshrl.u32 %v3423, 7
    %v3425 = vsub.s32 %v3422, %v3424
    %v3426 = vrot.slane %v3418, %v3425
    %v3428 = vunpack.c.l.s4 1934713408
    %v3429 = vunpack.c.0.s8 %v3428
    %v3430 = vlaneseq
    %v3431 = vshrl.u32 %v3430, 7
    %v3432 = vsub.s32 %v3429, %v3431
    %v3433 = vrot.slane %v3419, %v3432
    %v3434 = vcombine.low %v3410, %v3426
    %v3435 = vcombine.high %v3410, %v3426
    %v3436 = vcombine.low %v3417, %v3433
    %v3437 = vcombine.high %v3417, %v3433
    %3439 = vrot.lane.b32.xlu0 %v3435, 8
    %v3440 = vpop.permute.xlu0 %3439
    %3443 = vrot.lane.b32.xlu0 %v3436, 16
    %v3444 = vpop.permute.xlu0 %3443
    %3447 = vrot.lane.b32.xlu0 %v3437, 24
    %v3448 = vpop.permute.xlu0 %3447
    %v3450 = vsel %vm798, %v3434, %v3440
    %v3451 = vsel %vm1596, %v3450, %v3444
    %v3452 = vsel %vm1598, %v3451, %v3448
    %v3453 = vpack.c.bf16 %v3452, %v3452
    %v3454 = vld [vmem:[%s3 + $0x4] sm:$0x1]
    %v3455 = vld [vmem:[%s4 + $0x28] sm:$0xff]
    %v3456 = vld [vmem:[%s4 + $0x68] sm:$0xff]
    %v3457 = vld [vmem:[%s4 + $0xa8] sm:$0xff]
    %v3458 = vld [vmem:[%s4 + $0xe8] sm:$0xff]
    %v3459 = vld [vmem:[%s4 + $0x2c] sm:$0xf]
    %v3460 = vld [vmem:[%s4 + $0x6c] sm:$0xf]
    %v3461 = vld [vmem:[%s4 + $0xac] sm:$0xf]
    %v3462 = vld [vmem:[%s4 + $0xec] sm:$0xf]
    %v3467 = vunpack.c.l.b16 %v2282
    %v3468 = vunpack.c.l.b16 %v2283
    %v3469 = vunpack.c.l.b16 %v2284
    %v3470 = vunpack.c.l.b16 %v2285
    %v3471 = vpack.c.b16 %v3468, %v3467
    %v3472 = vpack.c.b16 %v3470, %v3469
    %3473 = vrot.lane.b32.xlu0 %v3471, 80
    %v3474 = vpop.permute.xlu0 %3473
    %3475 = vrot.lane.b32.xlu0 %v3472, 80
    %v3476 = vpop.permute.xlu0 %3475
    %v3480 = vsel %vm241, %v3453, 0
    %3482 = vmatprep.subr.bf16.mxu0 0
    %3483 = vmatpush1.bf16.msra.mxu0 %v3474
    %3484 = vmatprep.subr.bf16.mxu0 0
    %3485 = vmatpush1.bf16.msra.mxu0 %v3476
    %3486 = vmatprep.subr.bf16.mxu0 0
    %3487 = vmatpush1.bf16.msra.mxu0 0
    %3488 = vmatprep.subr.bf16.mxu0 0
    %3489 = vmatpush1.bf16.msra.mxu0 0
    %3490 = vmatprep.subr.bf16.mxu0 0
    %3491 = vmatpush1.bf16.msra.mxu0 0
    %3492 = vmatprep.subr.bf16.mxu0 0
    %3493 = vmatpush1.bf16.msra.mxu0 0
    %3494 = vmatprep.subr.bf16.mxu0 0
    %3495 = vmatpush1.bf16.msra.mxu0 0
    %3496 = vmatprep.subr.bf16.mxu0 0
    %3497 = vmatpush1.bf16.msra.mxu0 0
    %3498 = vmatprep.subr.bf16.mxu0 0
    %3499 = vmatpush1.bf16.msra.mxu0 0
    %3500 = vmatprep.subr.bf16.mxu0 0
    %3501 = vmatpush1.bf16.msra.mxu0 0
    %3502 = vmatprep.subr.bf16.mxu0 0
    %3503 = vmatpush1.bf16.msra.mxu0 0
    %3504 = vmatprep.subr.bf16.mxu0 0
    %3505 = vmatpush1.bf16.msra.mxu0 0
    %3506 = vmatprep.subr.bf16.mxu0 0
    %3507 = vmatpush1.bf16.msra.mxu0 0
    %3508 = vmatprep.subr.bf16.mxu0 0
    %3509 = vmatpush1.bf16.msra.mxu0 0
    %3510 = vmatprep.subr.bf16.mxu0 0
    %3511 = vmatpush1.bf16.msra.mxu0 0
    %3512 = vmatprep.subr.bf16.mxu0 0
    %3513 = vmatpush1.bf16.msra.mxu0 0
    %3514 = vmatprep.mubr.bf16.mxu0 0
    %3515 = vmatmul.mubr.bf16.gmra.mrb[0].mxu0 %v3480
    %v3516 = vpop.f32.mrb[0].mxu0
    %v3517 = vadd.f32 %v2417, %v3516
    %v3518 = vpop.f32.mrb[0].mxu0
    %v3519 = vpop.f32.mrb[0].mxu0
    %v3520 = vpop.f32.mrb[0].mxu0
    %3521 = vdwg.mxu0
    %v3522 = vmul.f32 %v3517, %v3517
    %v3523 = vsel %vm241, %v3522, 0.0
    %3524 = vadd.xlane.f32.xlu0 %v3523
    %v3525 = vpop.xlane.xlu0 %3524
    %v3526 = vmul.f32 %v3525, %v245
    %v3527 = vadd.f32 %v3526, 1e-06
    %v3528 = vrsqrt.pop %v3527
    %v3529 = vmul.f32 %v3517, %v3528
    %v3530 = vlaneseq
    %v3531 = vshrl.u32 %v3530, 7
    %v3532 = vsub.s32 0, %v3531
    %v3533 = vrot.slane %v3454, %v3532
    %v3534 = vmul.f32 %v3529, %v3533
    %v3535 = vpack.c.bf16 %v3534, %v3534
    %v3540 = vunpack.c.l.b16 %v3455
    %v3541 = vunpack.c.h.b16 %v3455
    %v3542 = vunpack.c.l.b16 %v3456
    %v3543 = vunpack.c.h.b16 %v3456
    %v3544 = vunpack.c.l.b16 %v3457
    %v3545 = vunpack.c.h.b16 %v3457
    %v3546 = vunpack.c.l.b16 %v3458
    %v3547 = vunpack.c.h.b16 %v3458
    %v3548 = vpack.c.b16 %v3542, %v3540
    %v3549 = vpack.c.b16 %v3543, %v3541
    %v3550 = vpack.c.b16 %v3546, %v3544
    %v3551 = vpack.c.b16 %v3547, %v3545
    %3552 = vrot.lane.b32.xlu0 %v3548, 48
    %v3553 = vpop.permute.xlu0 %3552
    %3554 = vrot.lane.b32.xlu0 %v3549, 48
    %v3555 = vpop.permute.xlu0 %3554
    %3556 = vrot.lane.b32.xlu0 %v3550, 48
    %v3557 = vpop.permute.xlu0 %3556
    %3558 = vrot.lane.b32.xlu0 %v3551, 48
    %v3559 = vpop.permute.xlu0 %3558
    %vm3560 = vcmask 392192
    %v3561 = vsel %vm3560, %v3553, %v3555
    %v3562 = vsel %vm3560, %v3557, %v3559
    %v3566 = vsel %vm241, %v3535, 0
    %3568 = vmatprep.subr.bf16.mxu0 0
    %3569 = vmatpush1.bf16.msra.mxu0 %v3561
    %3570 = vmatprep.subr.bf16.mxu0 0
    %3571 = vmatpush1.bf16.msra.mxu0 %v3562
    %3572 = vmatprep.subr.bf16.mxu0 0
    %3573 = vmatpush1.bf16.msra.mxu0 0
    %3574 = vmatprep.subr.bf16.mxu0 0
    %3575 = vmatpush1.bf16.msra.mxu0 0
    %3576 = vmatprep.subr.bf16.mxu0 0
    %3577 = vmatpush1.bf16.msra.mxu0 0
    %3578 = vmatprep.subr.bf16.mxu0 0
    %3579 = vmatpush1.bf16.msra.mxu0 0
    %3580 = vmatprep.subr.bf16.mxu0 0
    %3581 = vmatpush1.bf16.msra.mxu0 0
    %3582 = vmatprep.subr.bf16.mxu0 0
    %3583 = vmatpush1.bf16.msra.mxu0 0
    %3584 = vmatprep.subr.bf16.mxu0 0
    %3585 = vmatpush1.bf16.msra.mxu0 0
    %3586 = vmatprep.subr.bf16.mxu0 0
    %3587 = vmatpush1.bf16.msra.mxu0 0
    %3588 = vmatprep.subr.bf16.mxu0 0
    %3589 = vmatpush1.bf16.msra.mxu0 0
    %3590 = vmatprep.subr.bf16.mxu0 0
    %3591 = vmatpush1.bf16.msra.mxu0 0
    %3592 = vmatprep.subr.bf16.mxu0 0
    %3593 = vmatpush1.bf16.msra.mxu0 0
    %3594 = vmatprep.subr.bf16.mxu0 0
    %3595 = vmatpush1.bf16.msra.mxu0 0
    %3596 = vmatprep.subr.bf16.mxu0 0
    %3597 = vmatpush1.bf16.msra.mxu0 0
    %3598 = vmatprep.subr.bf16.mxu0 0
    %3599 = vmatpush1.bf16.msra.mxu0 0
    %3600 = vmatprep.mubr.bf16.mxu0 0
    %3601 = vmatmul.mubr.bf16.gmra.mrb[0].mxu0 %v3566
    %v3602 = vpop.f32.mrb[0].mxu0
    %v3603 = vadd.f32 0.0, %v3602
    %v3604 = vpop.f32.mrb[0].mxu0
    %v3605 = vpop.f32.mrb[0].mxu0
    %v3606 = vpop.f32.mrb[0].mxu0
    %3607 = vdwg.mxu0
    %v3608 = vmul.f32 %v3603, %v222
    %3609 = vrot.lane.b32.xlu0 %v224, 48
    %v3610 = vpop.permute.xlu0 %3609
    %v3612 = vmul.f32 %v3603, %v3610
    %3614 = vrot.lane.b32.xlu0 %v3612, 80
    %v3615 = vpop.permute.xlu0 %3614
    %v3617 = vadd.f32 %v3608, %v3615
    %v3618 = vmul.f32 %v3603, %v333
    %3619 = vrot.lane.b32.xlu0 %v224, 80
    %v3620 = vpop.permute.xlu0 %3619
    %v3622 = vmul.f32 %v3603, %v3620
    %3624 = vrot.lane.b32.xlu0 %v3622, 80
    %v3625 = vpop.permute.xlu0 %3624
    %v3627 = vadd.f32 %v3618, %v3625
    %3629 = vrot.lane.b32.xlu0 %v3617, 120
    %v3630 = vpop.permute.xlu0 %3629
    %3632 = vrot.lane.b32.xlu0 %v3617, 112
    %v3633 = vpop.permute.xlu0 %3632
    %3635 = vrot.lane.b32.xlu0 %v3617, 104
    %v3636 = vpop.permute.xlu0 %3635
    %v3638 = vcombine.low %v3617, %v3633
    %v3639 = vcombine.high %v3617, %v3633
    %v3641 = vunpack.c.l.s4 1983009808
    %v3642 = vunpack.c.0.s8 %v3641
    %v3643 = vlaneseq
    %v3644 = vshrl.u32 %v3643, 7
    %v3645 = vsub.s32 %v3642, %v3644
    %v3646 = vrot.slane %v3638, %v3645
    %v3648 = vunpack.c.l.s4 1983009808
    %v3649 = vunpack.c.0.s8 %v3648
    %v3650 = vlaneseq
    %v3651 = vshrl.u32 %v3650, 7
    %v3652 = vsub.s32 %v3649, %v3651
    %v3653 = vrot.slane %v3639, %v3652
    %v3654 = vcombine.low %v3630, %v3636
    %v3655 = vcombine.high %v3630, %v3636
    %v3657 = vunpack.c.l.s4 1983009808
    %v3658 = vunpack.c.0.s8 %v3657
    %v3659 = vlaneseq
    %v3660 = vshrl.u32 %v3659, 7
    %v3661 = vsub.s32 %v3658, %v3660
    %v3662 = vrot.slane %v3654, %v3661
    %v3664 = vunpack.c.l.s4 1983009808
    %v3665 = vunpack.c.0.s8 %v3664
    %v3666 = vlaneseq
    %v3667 = vshrl.u32 %v3666, 7
    %v3668 = vsub.s32 %v3665, %v3667
    %v3669 = vrot.slane %v3655, %v3668
    %v3670 = vcombine.low %v3646, %v3662
    %v3671 = vcombine.high %v3646, %v3662
    %v3673 = vunpack.c.l.s4 1934713408
    %v3674 = vunpack.c.0.s8 %v3673
    %v3675 = vlaneseq
    %v3676 = vshrl.u32 %v3675, 7
    %v3677 = vsub.s32 %v3674, %v3676
    %v3678 = vrot.slane %v3670, %v3677
    %v3680 = vunpack.c.l.s4 1934713408
    %v3681 = vunpack.c.0.s8 %v3680
    %v3682 = vlaneseq
    %v3683 = vshrl.u32 %v3682, 7
    %v3684 = vsub.s32 %v3681, %v3683
    %v3685 = vrot.slane %v3671, %v3684
    %v3686 = vcombine.low %v3653, %v3669
    %v3687 = vcombine.high %v3653, %v3669
    %v3689 = vunpack.c.l.s4 1934713408
    %v3690 = vunpack.c.0.s8 %v3689
    %v3691 = vlaneseq
    %v3692 = vshrl.u32 %v3691, 7
    %v3693 = vsub.s32 %v3690, %v3692
    %v3694 = vrot.slane %v3686, %v3693
    %v3696 = vunpack.c.l.s4 1934713408
    %v3697 = vunpack.c.0.s8 %v3696
    %v3698 = vlaneseq
    %v3699 = vshrl.u32 %v3698, 7
    %v3700 = vsub.s32 %v3697, %v3699
    %v3701 = vrot.slane %v3687, %v3700
    %v3702 = vcombine.high %v3678, 0.0
    %v3703 = vcombine.high %v3685, 0.0
    %v3704 = vcombine.high %v3694, 0.0
    %v3705 = vcombine.high %v3701, 0.0
    %v3706 = vcombine.low %v3678, %v3685
    %v3708 = vunpack.c.l.s4 1983009808
    %v3709 = vunpack.c.0.s8 %v3708
    %v3710 = vlaneseq
    %v3711 = vshrl.u32 %v3710, 7
    %v3712 = vsub.s32 %v3709, %v3711
    %v3713 = vrot.slane %v3706, %v3712
    %v3714 = vcombine.low %v3702, %v3703
    %v3716 = vunpack.c.l.s4 1983009808
    %v3717 = vunpack.c.0.s8 %v3716
    %v3718 = vlaneseq
    %v3719 = vshrl.u32 %v3718, 7
    %v3720 = vsub.s32 %v3717, %v3719
    %v3721 = vrot.slane %v3714, %v3720
    %v3722 = vcombine.low %v3694, %v3701
    %v3724 = vunpack.c.l.s4 1983009808
    %v3725 = vunpack.c.0.s8 %v3724
    %v3726 = vlaneseq
    %v3727 = vshrl.u32 %v3726, 7
    %v3728 = vsub.s32 %v3725, %v3727
    %v3729 = vrot.slane %v3722, %v3728
    %v3730 = vcombine.low %v3704, %v3705
    %v3732 = vunpack.c.l.s4 1983009808
    %v3733 = vunpack.c.0.s8 %v3732
    %v3734 = vlaneseq
    %v3735 = vshrl.u32 %v3734, 7
    %v3736 = vsub.s32 %v3733, %v3735
    %v3737 = vrot.slane %v3730, %v3736
    %v3738 = vcombine.low %v3713, %v3721
    %v3739 = vcombine.high %v3713, %v3721
    %v3741 = vunpack.c.l.s4 1934713408
    %v3742 = vunpack.c.0.s8 %v3741
    %v3743 = vlaneseq
    %v3744 = vshrl.u32 %v3743, 7
    %v3745 = vsub.s32 %v3742, %v3744
    %v3746 = vrot.slane %v3738, %v3745
    %v3748 = vunpack.c.l.s4 1934713408
    %v3749 = vunpack.c.0.s8 %v3748
    %v3750 = vlaneseq
    %v3751 = vshrl.u32 %v3750, 7
    %v3752 = vsub.s32 %v3749, %v3751
    %v3753 = vrot.slane %v3739, %v3752
    %v3754 = vcombine.low %v3729, %v3737
    %v3755 = vcombine.high %v3729, %v3737
    %v3757 = vunpack.c.l.s4 1934713408
    %v3758 = vunpack.c.0.s8 %v3757
    %v3759 = vlaneseq
    %v3760 = vshrl.u32 %v3759, 7
    %v3761 = vsub.s32 %v3758, %v3760
    %v3762 = vrot.slane %v3754, %v3761
    %v3764 = vunpack.c.l.s4 1934713408
    %v3765 = vunpack.c.0.s8 %v3764
    %v3766 = vlaneseq
    %v3767 = vshrl.u32 %v3766, 7
    %v3768 = vsub.s32 %v3765, %v3767
    %v3769 = vrot.slane %v3755, %v3768
    %v3770 = vcombine.low %v3746, %v3762
    %v3771 = vcombine.high %v3746, %v3762
    %v3772 = vcombine.low %v3753, %v3769
    %v3773 = vcombine.high %v3753, %v3769
    %v3775 = vcombine.high %v3627, %v3627
    %v3777 = vunpack.c.l.s4 1966171168
    %v3778 = vunpack.c.0.s8 %v3777
    %v3779 = vlaneseq
    %v3780 = vshrl.u32 %v3779, 7
    %v3781 = vsub.s32 %v3778, %v3780
    %v3782 = vrot.slane %v3627, %v3781
    %v3784 = vunpack.c.l.s4 1966171168
    %v3785 = vunpack.c.0.s8 %v3784
    %v3786 = vlaneseq
    %v3787 = vshrl.u32 %v3786, 7
    %v3788 = vsub.s32 %v3785, %v3787
    %v3789 = vrot.slane %v3775, %v3788
    %v3790 = vcombine.high %v3782, %v3782
    %v3791 = vcombine.high %v3789, %v3789
    %v3793 = vunpack.c.l.s4 1966171168
    %v3794 = vunpack.c.0.s8 %v3793
    %v3795 = vlaneseq
    %v3796 = vshrl.u32 %v3795, 7
    %v3797 = vsub.s32 %v3794, %v3796
    %v3798 = vrot.slane %v3782, %v3797
    %v3800 = vunpack.c.l.s4 1966171168
    %v3801 = vunpack.c.0.s8 %v3800
    %v3802 = vlaneseq
    %v3803 = vshrl.u32 %v3802, 7
    %v3804 = vsub.s32 %v3801, %v3803
    %v3805 = vrot.slane %v3789, %v3804
    %v3807 = vunpack.c.l.s4 1966171168
    %v3808 = vunpack.c.0.s8 %v3807
    %v3809 = vlaneseq
    %v3810 = vshrl.u32 %v3809, 7
    %v3811 = vsub.s32 %v3808, %v3810
    %v3812 = vrot.slane %v3790, %v3811
    %v3814 = vunpack.c.l.s4 1966171168
    %v3815 = vunpack.c.0.s8 %v3814
    %v3816 = vlaneseq
    %v3817 = vshrl.u32 %v3816, 7
    %v3818 = vsub.s32 %v3815, %v3817
    %v3819 = vrot.slane %v3791, %v3818
    %v3820 = vcombine.high %v3798, %v3798
    %v3821 = vcombine.high %v3805, %v3805
    %v3822 = vcombine.high %v3812, %v3812
    %v3823 = vcombine.high %v3819, %v3819
    %3824 = vrot.lane.b32.xlu0 %v3798, 96
    %v3825 = vpop.permute.xlu0 %3824
    %3826 = vrot.lane.b32.xlu0 %v3812, 96
    %v3827 = vpop.permute.xlu0 %3826
    %3828 = vrot.lane.b32.xlu0 %v3820, 96
    %v3829 = vpop.permute.xlu0 %3828
    %3830 = vrot.lane.b32.xlu0 %v3822, 96
    %v3831 = vpop.permute.xlu0 %3830
    %3832 = vrot.lane.b32.xlu0 %v3805, 96
    %v3833 = vpop.permute.xlu0 %3832
    %3834 = vrot.lane.b32.xlu0 %v3819, 96
    %v3835 = vpop.permute.xlu0 %3834
    %3836 = vrot.lane.b32.xlu0 %v3821, 96
    %v3837 = vpop.permute.xlu0 %3836
    %3838 = vrot.lane.b32.xlu0 %v3823, 96
    %v3839 = vpop.permute.xlu0 %3838
    %v3841 = vcombine.high %v3603, %v3603
    %v3843 = vunpack.c.l.s4 1966171168
    %v3844 = vunpack.c.0.s8 %v3843
    %v3845 = vlaneseq
    %v3846 = vshrl.u32 %v3845, 7
    %v3847 = vsub.s32 %v3844, %v3846
    %v3848 = vrot.slane %v3603, %v3847
    %v3850 = vunpack.c.l.s4 1966171168
    %v3851 = vunpack.c.0.s8 %v3850
    %v3852 = vlaneseq
    %v3853 = vshrl.u32 %v3852, 7
    %v3854 = vsub.s32 %v3851, %v3853
    %v3855 = vrot.slane %v3841, %v3854
    %v3856 = vcombine.high %v3848, %v3848
    %v3857 = vcombine.high %v3855, %v3855
    %v3859 = vunpack.c.l.s4 1966171168
    %v3860 = vunpack.c.0.s8 %v3859
    %v3861 = vlaneseq
    %v3862 = vshrl.u32 %v3861, 7
    %v3863 = vsub.s32 %v3860, %v3862
    %v3864 = vrot.slane %v3848, %v3863
    %v3866 = vunpack.c.l.s4 1966171168
    %v3867 = vunpack.c.0.s8 %v3866
    %v3868 = vlaneseq
    %v3869 = vshrl.u32 %v3868, 7
    %v3870 = vsub.s32 %v3867, %v3869
    %v3871 = vrot.slane %v3855, %v3870
    %v3873 = vunpack.c.l.s4 1966171168
    %v3874 = vunpack.c.0.s8 %v3873
    %v3875 = vlaneseq
    %v3876 = vshrl.u32 %v3875, 7
    %v3877 = vsub.s32 %v3874, %v3876
    %v3878 = vrot.slane %v3856, %v3877
    %v3880 = vunpack.c.l.s4 1966171168
    %v3881 = vunpack.c.0.s8 %v3880
    %v3882 = vlaneseq
    %v3883 = vshrl.u32 %v3882, 7
    %v3884 = vsub.s32 %v3881, %v3883
    %v3885 = vrot.slane %v3857, %v3884
    %v3886 = vcombine.high %v3864, %v3864
    %v3887 = vcombine.high %v3871, %v3871
    %v3888 = vcombine.high %v3878, %v3878
    %v3889 = vcombine.high %v3885, %v3885
    %3890 = vrot.lane.b32.xlu0 %v3864, 88
    %v3891 = vpop.permute.xlu0 %3890
    %3892 = vrot.lane.b32.xlu0 %v3878, 88
    %v3893 = vpop.permute.xlu0 %3892
    %3894 = vrot.lane.b32.xlu0 %v3886, 88
    %v3895 = vpop.permute.xlu0 %3894
    %3896 = vrot.lane.b32.xlu0 %v3888, 88
    %v3897 = vpop.permute.xlu0 %3896
    %3898 = vrot.lane.b32.xlu0 %v3871, 88
    %v3899 = vpop.permute.xlu0 %3898
    %3900 = vrot.lane.b32.xlu0 %v3885, 88
    %v3901 = vpop.permute.xlu0 %3900
    %3902 = vrot.lane.b32.xlu0 %v3887, 88
    %v3903 = vpop.permute.xlu0 %3902
    %3904 = vrot.lane.b32.xlu0 %v3889, 88
    %v3905 = vpop.permute.xlu0 %3904
    %v3906 = vcombine.low %v3825, %v3827
    %v3907 = vcombine.low %v3829, %v3831
    %v3908 = vcombine.low %v3833, %v3835
    %v3909 = vcombine.low %v3837, %v3839
    %v3911 = vunpack.c.l.s4 1966171168
    %v3912 = vunpack.c.0.s8 %v3911
    %v3913 = vlaneseq
    %v3914 = vshrl.u32 %v3913, 7
    %v3915 = vsub.s32 %v3912, %v3914
    %v3916 = vrot.slane %v3906, %v3915
    %v3918 = vunpack.c.l.s4 1966171168
    %v3919 = vunpack.c.0.s8 %v3918
    %v3920 = vlaneseq
    %v3921 = vshrl.u32 %v3920, 7
    %v3922 = vsub.s32 %v3919, %v3921
    %v3923 = vrot.slane %v3907, %v3922
    %v3925 = vunpack.c.l.s4 1966171168
    %v3926 = vunpack.c.0.s8 %v3925
    %v3927 = vlaneseq
    %v3928 = vshrl.u32 %v3927, 7
    %v3929 = vsub.s32 %v3926, %v3928
    %v3930 = vrot.slane %v3908, %v3929
    %v3932 = vunpack.c.l.s4 1966171168
    %v3933 = vunpack.c.0.s8 %v3932
    %v3934 = vlaneseq
    %v3935 = vshrl.u32 %v3934, 7
    %v3936 = vsub.s32 %v3933, %v3935
    %v3937 = vrot.slane %v3909, %v3936
    %v3938 = vcombine.low %v3916, %v3923
    %v3939 = vcombine.low %v3930, %v3937
    %v3941 = vunpack.c.l.s4 1966171168
    %v3942 = vunpack.c.0.s8 %v3941
    %v3943 = vlaneseq
    %v3944 = vshrl.u32 %v3943, 7
    %v3945 = vsub.s32 %v3942, %v3944
    %v3946 = vrot.slane %v3938, %v3945
    %v3948 = vunpack.c.l.s4 1966171168
    %v3949 = vunpack.c.0.s8 %v3948
    %v3950 = vlaneseq
    %v3951 = vshrl.u32 %v3950, 7
    %v3952 = vsub.s32 %v3949, %v3951
    %v3953 = vrot.slane %v3939, %v3952
    %v3954 = vcombine.low %v3946, %v3953
    %v3956 = vsel %vm798, %v3770, 0
    %v3959 = vsel %vm798, %v3771, 0
    %v3962 = vsel %vm798, %v3772, 0
    %v3965 = vsel %vm798, %v3773, 0
    %v3967 = vsel %vm798, %v3954, 0
    %3969 = vmatprep.subr.mxu0 0.0
    %3970 = vmatpush1.xpose.msra.mxu0 %v3967
    %3971 = vmatprep.subr.mxu0 0.0
    %3972 = vmatpush1.xpose.msra.mxu0 0.0
    %3973 = vmatprep.subr.mxu0 0.0
    %3974 = vmatpush1.xpose.msra.mxu0 0.0
    %3975 = vmatprep.subr.mxu0 0.0
    %3976 = vmatpush1.xpose.msra.mxu0 0.0
    %3977 = vmatprep.subr.mxu0 0.0
    %3978 = vmatpush1.xpose.msra.mxu0 0.0
    %3979 = vmatprep.subr.mxu0 0.0
    %3980 = vmatpush1.xpose.msra.mxu0 0.0
    %3981 = vmatprep.subr.mxu0 0.0
    %3982 = vmatpush1.xpose.msra.mxu0 0.0
    %3983 = vmatprep.subr.mxu0 0.0
    %3984 = vmatpush1.xpose.msra.mxu0 0.0
    %3985 = vmatprep.subr.mxu0 0.0
    %3986 = vmatpush1.xpose.msra.mxu0 0.0
    %3987 = vmatprep.subr.mxu0 0.0
    %3988 = vmatpush1.xpose.msra.mxu0 0.0
    %3989 = vmatprep.subr.mxu0 0.0
    %3990 = vmatpush1.xpose.msra.mxu0 0.0
    %3991 = vmatprep.subr.mxu0 0.0
    %3992 = vmatpush1.xpose.msra.mxu0 0.0
    %3993 = vmatprep.subr.mxu0 0.0
    %3994 = vmatpush1.xpose.msra.mxu0 0.0
    %3995 = vmatprep.subr.mxu0 0.0
    %3996 = vmatpush1.xpose.msra.mxu0 0.0
    %3997 = vmatprep.subr.mxu0 0.0
    %3998 = vmatpush1.xpose.msra.mxu0 0.0
    %3999 = vmatprep.subr.mxu0 0.0
    %4000 = vmatpush1.xpose.msra.mxu0 0.0
    %4001 = vmatprep.subr.mxu0 0.0
    %4002 = vmatpush1.xpose.msra.mxu0 0.0
    %4003 = vmatprep.subr.mxu0 0.0
    %4004 = vmatpush1.xpose.msra.mxu0 0.0
    %4005 = vmatprep.subr.mxu0 0.0
    %4006 = vmatpush1.xpose.msra.mxu0 0.0
    %4007 = vmatprep.subr.mxu0 0.0
    %4008 = vmatpush1.xpose.msra.mxu0 0.0
    %4009 = vmatprep.subr.mxu0 0.0
    %4010 = vmatpush1.xpose.msra.mxu0 0.0
    %4011 = vmatprep.subr.mxu0 0.0
    %4012 = vmatpush1.xpose.msra.mxu0 0.0
    %4013 = vmatprep.subr.mxu0 0.0
    %4014 = vmatpush1.xpose.msra.mxu0 0.0
    %4015 = vmatprep.subr.mxu0 0.0
    %4016 = vmatpush1.xpose.msra.mxu0 0.0
    %4017 = vmatprep.subr.mxu0 0.0
    %4018 = vmatpush1.xpose.msra.mxu0 0.0
    %4019 = vmatprep.subr.mxu0 0.0
    %4020 = vmatpush1.xpose.msra.mxu0 0.0
    %4021 = vmatprep.subr.mxu0 0.0
    %4022 = vmatpush1.xpose.msra.mxu0 0.0
    %4023 = vmatprep.subr.mxu0 0.0
    %4024 = vmatpush1.xpose.msra.mxu0 0.0
    %4025 = vmatprep.subr.mxu0 0.0
    %4026 = vmatpush1.xpose.msra.mxu0 0.0
    %4027 = vmatprep.subr.mxu0 0.0
    %4028 = vmatpush1.xpose.msra.mxu0 0.0
    %4029 = vmatprep.subr.mxu0 0.0
    %4030 = vmatpush1.xpose.msra.mxu0 0.0
    %4031 = vmatprep.subr.mxu0 0.0
    %4032 = vmatpush1.xpose.msra.mxu0 0.0
    %4033 = vmatprep.mubr.f32.mxu0 0.0
    %4034 = vmatmul.mubr.f32.gmra.mrb[0].mxu0 %v3956
    %v4035 = vpop.f32.mrb[0].mxu0
    %v4036 = vadd.f32 0.0, %v4035
    %v4037 = vpop.f32.mrb[0].mxu0
    %4038 = vmatprep.mubr.f32.mxu0 0.0
    %4039 = vmatmul.mubr.f32.gmra.mrb[0].mxu0 %v3959
    %v4040 = vpop.f32.mrb[0].mxu0
    %v4041 = vadd.f32 0.0, %v4040
    %v4042 = vpop.f32.mrb[0].mxu0
    %4043 = vmatprep.mubr.f32.mxu0 0.0
    %4044 = vmatmul.mubr.f32.gmra.mrb[0].mxu0 %v3962
    %v4045 = vpop.f32.mrb[0].mxu0
    %v4046 = vadd.f32 0.0, %v4045
    %v4047 = vpop.f32.mrb[0].mxu0
    %4048 = vmatprep.mubr.f32.mxu0 0.0
    %4049 = vmatmul.mubr.f32.gmra.mrb[0].mxu0 %v3965
    %v4050 = vpop.f32.mrb[0].mxu0
    %v4051 = vadd.f32 0.0, %v4050
    %v4052 = vpop.f32.mrb[0].mxu0
    %4053 = vdwg.mxu0
    %v4054 = vmul.f32 %v4036, 0.35355338
    %v4055 = vmul.f32 %v4041, 0.35355338
    %v4056 = vmul.f32 %v4046, 0.35355338
    %v4057 = vmul.f32 %v4051, 0.35355338
    %v4058 = vadd.f32 %v4054, %v230
    %v4059 = vadd.f32 %v4055, %v230
    %v4060 = vadd.f32 %v4056, %v230
    %v4061 = vadd.f32 %v4057, %v230
    %v4062 = vsel %vm798, %v4058, -inf
    %4063 = vmax.xlane.f32.xlu0 %v4062
    %v4064 = vpop.xlane.xlu0 %4063
    %v4065 = vsel %vm798, %v4059, -inf
    %4066 = vmax.xlane.f32.xlu0 %v4065
    %v4067 = vpop.xlane.xlu0 %4066
    %v4068 = vsel %vm798, %v4060, -inf
    %4069 = vmax.xlane.f32.xlu0 %v4068
    %v4070 = vpop.xlane.xlu0 %4069
    %v4071 = vsel %vm798, %v4061, -inf
    %4072 = vmax.xlane.f32.xlu0 %v4071
    %v4073 = vpop.xlane.xlu0 %4072
    %v4074 = vsub.f32 %v4058, %v4064
    %v4075 = vsub.f32 %v4059, %v4067
    %v4076 = vsub.f32 %v4060, %v4070
    %v4077 = vsub.f32 %v4061, %v4073
    %v4078 = vmul.f32 %v4074, 1.442695
    %v4079 = vpow.pop %v4078
    %v4080 = vmul.f32 %v4075, 1.442695
    %v4081 = vpow.pop %v4080
    %v4082 = vmul.f32 %v4076, 1.442695
    %v4083 = vpow.pop %v4082
    %v4084 = vmul.f32 %v4077, 1.442695
    %v4085 = vpow.pop %v4084
    %v4086 = vsel %vm798, %v4079, 0.0
    %4087 = vadd.xlane.f32.xlu0 %v4086
    %v4088 = vpop.xlane.xlu0 %4087
    %v4089 = vsel %vm798, %v4081, 0.0
    %4090 = vadd.xlane.f32.xlu0 %v4089
    %v4091 = vpop.xlane.xlu0 %4090
    %v4092 = vsel %vm798, %v4083, 0.0
    %4093 = vadd.xlane.f32.xlu0 %v4092
    %v4094 = vpop.xlane.xlu0 %4093
    %v4095 = vsel %vm798, %v4085, 0.0
    %4096 = vadd.xlane.f32.xlu0 %v4095
    %v4097 = vpop.xlane.xlu0 %4096
    %v4098 = vrcp.pop %v4088
    %v4099 = vrcp.pop %v4091
    %v4100 = vrcp.pop %v4094
    %v4101 = vrcp.pop %v4097
    %v4102 = vmul.f32 %v4079, %v4098
    %v4103 = vmul.f32 %v4081, %v4099
    %v4104 = vmul.f32 %v4083, %v4100
    %v4105 = vmul.f32 %v4085, %v4101
    %v4106 = vcombine.low %v3891, %v3893
    %v4107 = vcombine.low %v3895, %v3897
    %v4108 = vcombine.low %v3899, %v3901
    %v4109 = vcombine.low %v3903, %v3905
    %v4111 = vunpack.c.l.s4 1966171168
    %v4112 = vunpack.c.0.s8 %v4111
    %v4113 = vlaneseq
    %v4114 = vshrl.u32 %v4113, 7
    %v4115 = vsub.s32 %v4112, %v4114
    %v4116 = vrot.slane %v4106, %v4115
    %v4118 = vunpack.c.l.s4 1966171168
    %v4119 = vunpack.c.0.s8 %v4118
    %v4120 = vlaneseq
    %v4121 = vshrl.u32 %v4120, 7
    %v4122 = vsub.s32 %v4119, %v4121
    %v4123 = vrot.slane %v4107, %v4122
    %v4125 = vunpack.c.l.s4 1966171168
    %v4126 = vunpack.c.0.s8 %v4125
    %v4127 = vlaneseq
    %v4128 = vshrl.u32 %v4127, 7
    %v4129 = vsub.s32 %v4126, %v4128
    %v4130 = vrot.slane %v4108, %v4129
    %v4132 = vunpack.c.l.s4 1966171168
    %v4133 = vunpack.c.0.s8 %v4132
    %v4134 = vlaneseq
    %v4135 = vshrl.u32 %v4134, 7
    %v4136 = vsub.s32 %v4133, %v4135
    %v4137 = vrot.slane %v4109, %v4136
    %v4138 = vcombine.low %v4116, %v4123
    %v4139 = vcombine.low %v4130, %v4137
    %v4141 = vunpack.c.l.s4 1966171168
    %v4142 = vunpack.c.0.s8 %v4141
    %v4143 = vlaneseq
    %v4144 = vshrl.u32 %v4143, 7
    %v4145 = vsub.s32 %v4142, %v4144
    %v4146 = vrot.slane %v4138, %v4145
    %v4148 = vunpack.c.l.s4 1966171168
    %v4149 = vunpack.c.0.s8 %v4148
    %v4150 = vlaneseq
    %v4151 = vshrl.u32 %v4150, 7
    %v4152 = vsub.s32 %v4149, %v4151
    %v4153 = vrot.slane %v4139, %v4152
    %v4154 = vcombine.low %v4146, %v4153
    %v4157 = vsel %vm798, %v4102, 0
    %v4160 = vsel %vm798, %v4103, 0
    %v4163 = vsel %vm798, %v4104, 0
    %v4166 = vsel %vm798, %v4105, 0
    %4168 = vmatprep.subr.mxu0 0.0
    %4169 = vmatpush1.msra.mxu0 %v4154
    %4170 = vmatprep.subr.mxu0 0.0
    %4171 = vmatpush1.msra.mxu0 0.0
    %4172 = vmatprep.subr.mxu0 0.0
    %4173 = vmatpush1.msra.mxu0 0.0
    %4174 = vmatprep.subr.mxu0 0.0
    %4175 = vmatpush1.msra.mxu0 0.0
    %4176 = vmatprep.subr.mxu0 0.0
    %4177 = vmatpush1.msra.mxu0 0.0
    %4178 = vmatprep.subr.mxu0 0.0
    %4179 = vmatpush1.msra.mxu0 0.0
    %4180 = vmatprep.subr.mxu0 0.0
    %4181 = vmatpush1.msra.mxu0 0.0
    %4182 = vmatprep.subr.mxu0 0.0
    %4183 = vmatpush1.msra.mxu0 0.0
    %4184 = vmatprep.subr.mxu0 0.0
    %4185 = vmatpush1.msra.mxu0 0.0
    %4186 = vmatprep.subr.mxu0 0.0
    %4187 = vmatpush1.msra.mxu0 0.0
    %4188 = vmatprep.subr.mxu0 0.0
    %4189 = vmatpush1.msra.mxu0 0.0
    %4190 = vmatprep.subr.mxu0 0.0
    %4191 = vmatpush1.msra.mxu0 0.0
    %4192 = vmatprep.subr.mxu0 0.0
    %4193 = vmatpush1.msra.mxu0 0.0
    %4194 = vmatprep.subr.mxu0 0.0
    %4195 = vmatpush1.msra.mxu0 0.0
    %4196 = vmatprep.subr.mxu0 0.0
    %4197 = vmatpush1.msra.mxu0 0.0
    %4198 = vmatprep.subr.mxu0 0.0
    %4199 = vmatpush1.msra.mxu0 0.0
    %4200 = vmatprep.subr.mxu0 0.0
    %4201 = vmatpush1.msra.mxu0 0.0
    %4202 = vmatprep.subr.mxu0 0.0
    %4203 = vmatpush1.msra.mxu0 0.0
    %4204 = vmatprep.subr.mxu0 0.0
    %4205 = vmatpush1.msra.mxu0 0.0
    %4206 = vmatprep.subr.mxu0 0.0
    %4207 = vmatpush1.msra.mxu0 0.0
    %4208 = vmatprep.subr.mxu0 0.0
    %4209 = vmatpush1.msra.mxu0 0.0
    %4210 = vmatprep.subr.mxu0 0.0
    %4211 = vmatpush1.msra.mxu0 0.0
    %4212 = vmatprep.subr.mxu0 0.0
    %4213 = vmatpush1.msra.mxu0 0.0
    %4214 = vmatprep.subr.mxu0 0.0
    %4215 = vmatpush1.msra.mxu0 0.0
    %4216 = vmatprep.subr.mxu0 0.0
    %4217 = vmatpush1.msra.mxu0 0.0
    %4218 = vmatprep.subr.mxu0 0.0
    %4219 = vmatpush1.msra.mxu0 0.0
    %4220 = vmatprep.subr.mxu0 0.0
    %4221 = vmatpush1.msra.mxu0 0.0
    %4222 = vmatprep.subr.mxu0 0.0
    %4223 = vmatpush1.msra.mxu0 0.0
    %4224 = vmatprep.subr.mxu0 0.0
    %4225 = vmatpush1.msra.mxu0 0.0
    %4226 = vmatprep.subr.mxu0 0.0
    %4227 = vmatpush1.msra.mxu0 0.0
    %4228 = vmatprep.subr.mxu0 0.0
    %4229 = vmatpush1.msra.mxu0 0.0
    %4230 = vmatprep.subr.mxu0 0.0
    %4231 = vmatpush1.msra.mxu0 0.0
    %4232 = vmatprep.mubr.f32.mxu0 0.0
    %4233 = vmatmul.mubr.f32.gmra.mrb[0].mxu0 %v4157
    %v4234 = vpop.f32.mrb[0].mxu0
    %v4235 = vadd.f32 0.0, %v4234
    %v4236 = vpop.f32.mrb[0].mxu0
    %4237 = vmatprep.mubr.f32.mxu0 0.0
    %4238 = vmatmul.mubr.f32.gmra.mrb[0].mxu0 %v4160
    %v4239 = vpop.f32.mrb[0].mxu0
    %v4240 = vadd.f32 0.0, %v4239
    %v4241 = vpop.f32.mrb[0].mxu0
    %4242 = vmatprep.mubr.f32.mxu0 0.0
    %4243 = vmatmul.mubr.f32.gmra.mrb[0].mxu0 %v4163
    %v4244 = vpop.f32.mrb[0].mxu0
    %v4245 = vadd.f32 0.0, %v4244
    %v4246 = vpop.f32.mrb[0].mxu0
    %4247 = vmatprep.mubr.f32.mxu0 0.0
    %4248 = vmatmul.mubr.f32.gmra.mrb[0].mxu0 %v4166
    %v4249 = vpop.f32.mrb[0].mxu0
    %v4250 = vadd.f32 0.0, %v4249
    %v4251 = vpop.f32.mrb[0].mxu0
    %4252 = vdwg.mxu0
    %v4253 = vcombine.low %v4235, %v4245
    %v4254 = vcombine.high %v4235, %v4245
    %v4256 = vunpack.c.l.s4 1983009808
    %v4257 = vunpack.c.0.s8 %v4256
    %v4258 = vlaneseq
    %v4259 = vshrl.u32 %v4258, 7
    %v4260 = vsub.s32 %v4257, %v4259
    %v4261 = vrot.slane %v4253, %v4260
    %v4263 = vunpack.c.l.s4 1983009808
    %v4264 = vunpack.c.0.s8 %v4263
    %v4265 = vlaneseq
    %v4266 = vshrl.u32 %v4265, 7
    %v4267 = vsub.s32 %v4264, %v4266
    %v4268 = vrot.slane %v4254, %v4267
    %v4269 = vcombine.low %v4240, %v4250
    %v4270 = vcombine.high %v4240, %v4250
    %v4272 = vunpack.c.l.s4 1983009808
    %v4273 = vunpack.c.0.s8 %v4272
    %v4274 = vlaneseq
    %v4275 = vshrl.u32 %v4274, 7
    %v4276 = vsub.s32 %v4273, %v4275
    %v4277 = vrot.slane %v4269, %v4276
    %v4279 = vunpack.c.l.s4 1983009808
    %v4280 = vunpack.c.0.s8 %v4279
    %v4281 = vlaneseq
    %v4282 = vshrl.u32 %v4281, 7
    %v4283 = vsub.s32 %v4280, %v4282
    %v4284 = vrot.slane %v4270, %v4283
    %v4285 = vcombine.low %v4261, %v4277
    %v4286 = vcombine.high %v4261, %v4277
    %v4288 = vunpack.c.l.s4 1934713408
    %v4289 = vunpack.c.0.s8 %v4288
    %v4290 = vlaneseq
    %v4291 = vshrl.u32 %v4290, 7
    %v4292 = vsub.s32 %v4289, %v4291
    %v4293 = vrot.slane %v4285, %v4292
    %v4295 = vunpack.c.l.s4 1934713408
    %v4296 = vunpack.c.0.s8 %v4295
    %v4297 = vlaneseq
    %v4298 = vshrl.u32 %v4297, 7
    %v4299 = vsub.s32 %v4296, %v4298
    %v4300 = vrot.slane %v4286, %v4299
    %v4301 = vcombine.low %v4268, %v4284
    %v4302 = vcombine.high %v4268, %v4284
    %v4304 = vunpack.c.l.s4 1934713408
    %v4305 = vunpack.c.0.s8 %v4304
    %v4306 = vlaneseq
    %v4307 = vshrl.u32 %v4306, 7
    %v4308 = vsub.s32 %v4305, %v4307
    %v4309 = vrot.slane %v4301, %v4308
    %v4311 = vunpack.c.l.s4 1934713408
    %v4312 = vunpack.c.0.s8 %v4311
    %v4313 = vlaneseq
    %v4314 = vshrl.u32 %v4313, 7
    %v4315 = vsub.s32 %v4312, %v4314
    %v4316 = vrot.slane %v4302, %v4315
    %v4317 = vcombine.high %v4293, 0.0
    %v4318 = vcombine.high %v4300, 0.0
    %v4319 = vcombine.high %v4309, 0.0
    %v4320 = vcombine.high %v4316, 0.0
    %v4321 = vcombine.low %v4293, %v4300
    %v4323 = vunpack.c.l.s4 1983009808
    %v4324 = vunpack.c.0.s8 %v4323
    %v4325 = vlaneseq
    %v4326 = vshrl.u32 %v4325, 7
    %v4327 = vsub.s32 %v4324, %v4326
    %v4328 = vrot.slane %v4321, %v4327
    %v4329 = vcombine.low %v4317, %v4318
    %v4331 = vunpack.c.l.s4 1983009808
    %v4332 = vunpack.c.0.s8 %v4331
    %v4333 = vlaneseq
    %v4334 = vshrl.u32 %v4333, 7
    %v4335 = vsub.s32 %v4332, %v4334
    %v4336 = vrot.slane %v4329, %v4335
    %v4337 = vcombine.low %v4309, %v4316
    %v4339 = vunpack.c.l.s4 1983009808
    %v4340 = vunpack.c.0.s8 %v4339
    %v4341 = vlaneseq
    %v4342 = vshrl.u32 %v4341, 7
    %v4343 = vsub.s32 %v4340, %v4342
    %v4344 = vrot.slane %v4337, %v4343
    %v4345 = vcombine.low %v4319, %v4320
    %v4347 = vunpack.c.l.s4 1983009808
    %v4348 = vunpack.c.0.s8 %v4347
    %v4349 = vlaneseq
    %v4350 = vshrl.u32 %v4349, 7
    %v4351 = vsub.s32 %v4348, %v4350
    %v4352 = vrot.slane %v4345, %v4351
    %v4353 = vcombine.low %v4328, %v4336
    %v4354 = vcombine.high %v4328, %v4336
    %v4356 = vunpack.c.l.s4 1934713408
    %v4357 = vunpack.c.0.s8 %v4356
    %v4358 = vlaneseq
    %v4359 = vshrl.u32 %v4358, 7
    %v4360 = vsub.s32 %v4357, %v4359
    %v4361 = vrot.slane %v4353, %v4360
    %v4363 = vunpack.c.l.s4 1934713408
    %v4364 = vunpack.c.0.s8 %v4363
    %v4365 = vlaneseq
    %v4366 = vshrl.u32 %v4365, 7
    %v4367 = vsub.s32 %v4364, %v4366
    %v4368 = vrot.slane %v4354, %v4367
    %v4369 = vcombine.low %v4344, %v4352
    %v4370 = vcombine.high %v4344, %v4352
    %v4372 = vunpack.c.l.s4 1934713408
    %v4373 = vunpack.c.0.s8 %v4372
    %v4374 = vlaneseq
    %v4375 = vshrl.u32 %v4374, 7
    %v4376 = vsub.s32 %v4373, %v4375
    %v4377 = vrot.slane %v4369, %v4376
    %v4379 = vunpack.c.l.s4 1934713408
    %v4380 = vunpack.c.0.s8 %v4379
    %v4381 = vlaneseq
    %v4382 = vshrl.u32 %v4381, 7
    %v4383 = vsub.s32 %v4380, %v4382
    %v4384 = vrot.slane %v4370, %v4383
    %v4385 = vcombine.low %v4361, %v4377
    %v4386 = vcombine.high %v4361, %v4377
    %v4387 = vcombine.low %v4368, %v4384
    %v4388 = vcombine.high %v4368, %v4384
    %4390 = vrot.lane.b32.xlu0 %v4386, 8
    %v4391 = vpop.permute.xlu0 %4390
    %4394 = vrot.lane.b32.xlu0 %v4387, 16
    %v4395 = vpop.permute.xlu0 %4394
    %4398 = vrot.lane.b32.xlu0 %v4388, 24
    %v4399 = vpop.permute.xlu0 %4398
    %v4401 = vsel %vm798, %v4385, %v4391
    %v4402 = vsel %vm1596, %v4401, %v4395
    %v4403 = vsel %vm1598, %v4402, %v4399
    %v4404 = vpack.c.bf16 %v4403, %v4403
    %v4405 = vld [vmem:[%s3 + $0x5] sm:$0x1]
    %v4406 = vld [vmem:[%s4 + $0x2c] sm:$0xff]
    %v4407 = vld [vmem:[%s4 + $0x34] sm:$0xff]
    %v4408 = vld [vmem:[%s4 + $0x3c] sm:$0xf]
    %v4409 = vld [vmem:[%s4 + $0x6c] sm:$0xff]
    %v4410 = vld [vmem:[%s4 + $0x74] sm:$0xff]
    %v4411 = vld [vmem:[%s4 + $0x7c] sm:$0xf]
    %v4412 = vld [vmem:[%s4 + $0xac] sm:$0xff]
    %v4413 = vld [vmem:[%s4 + $0xb4] sm:$0xff]
    %v4414 = vld [vmem:[%s4 + $0xbc] sm:$0xf]
    %v4415 = vld [vmem:[%s4 + $0xec] sm:$0xff]
    %v4416 = vld [vmem:[%s4 + $0xf4] sm:$0xff]
    %v4417 = vld [vmem:[%s4 + $0xfc] sm:$0xf]
    %v4418 = vld [vmem:[%s5 + $0x100] sm:$0xf]
    %v4419 = vld [vmem:[%s5 + $0x104] sm:$0xf]
    %v4420 = vld [vmem:[%s5 + $0x108] sm:$0xf]
    %v4421 = vld [vmem:[%s5 + $0x10c] sm:$0xf]
    %v4422 = vld [vmem:[%s5 + $0x110] sm:$0xf]
    %v4423 = vld [vmem:[%s5 + $0x114] sm:$0xf]
    %v4424 = vld [vmem:[%s5 + $0x118] sm:$0xf]
    %v4425 = vld [vmem:[%s5 + $0x11c] sm:$0xf]
    %v4426 = vld [vmem:[%s5 + $0x120] sm:$0xf]
    %v4427 = vld [vmem:[%s5 + $0x124] sm:$0xf]
    %v4428 = vld [vmem:[%s5 + $0x128] sm:$0xf]
    %v4429 = vld [vmem:[%s5 + $0x12c] sm:$0xf]
    %v4430 = vld [vmem:[%s5 + $0x130] sm:$0xf]
    %v4431 = vld [vmem:[%s5 + $0x134] sm:$0xf]
    %v4432 = vld [vmem:[%s5 + $0x138] sm:$0xf]
    %v4433 = vld [vmem:[%s5 + $0x13c] sm:$0xf]
    %v4434 = vld [vmem:[%s5 + $0x140] sm:$0xf]
    %v4435 = vld [vmem:[%s5 + $0x144] sm:$0xf]
    %v4436 = vld [vmem:[%s5 + $0x148] sm:$0xf]
    %v4437 = vld [vmem:[%s5 + $0x14c] sm:$0xf]
    %v4438 = vld [vmem:[%s5 + $0x150] sm:$0xf]
    %v4439 = vld [vmem:[%s5 + $0x154] sm:$0xf]
    %v4440 = vld [vmem:[%s5 + $0x158] sm:$0xf]
    %v4441 = vld [vmem:[%s5 + $0x15c] sm:$0xf]
    %v4442 = vld [vmem:[%s5 + $0x160] sm:$0xf]
    %v4443 = vld [vmem:[%s5 + $0x164] sm:$0xf]
    %v4444 = vld [vmem:[%s5 + $0x168] sm:$0xf]
    %v4445 = vld [vmem:[%s5 + $0x16c] sm:$0xf]
    %v4446 = vld [vmem:[%s5 + $0x170] sm:$0xf]
    %v4447 = vld [vmem:[%s5 + $0x174] sm:$0xf]
    %v4448 = vld [vmem:[%s5 + $0x178] sm:$0xf]
    %v4449 = vld [vmem:[%s5 + $0x17c] sm:$0xf]
    %v4454 = vunpack.c.l.b16 %v3459
    %v4455 = vunpack.c.l.b16 %v3460
    %v4456 = vunpack.c.l.b16 %v3461
    %v4457 = vunpack.c.l.b16 %v3462
    %v4458 = vpack.c.b16 %v4455, %v4454
    %v4459 = vpack.c.b16 %v4457, %v4456
    %4460 = vrot.lane.b32.xlu0 %v4458, 88
    %v4461 = vpop.permute.xlu0 %4460
    %4462 = vrot.lane.b32.xlu0 %v4459, 88
    %v4463 = vpop.permute.xlu0 %4462
    %v4467 = vsel %vm241, %v4404, 0
    %4469 = vmatprep.subr.bf16.mxu0 0
    %4470 = vmatpush1.bf16.msra.mxu0 %v4461
    %4471 = vmatprep.subr.bf16.mxu0 0
    %4472 = vmatpush1.bf16.msra.mxu0 %v4463
    %4473 = vmatprep.subr.bf16.mxu0 0
    %4474 = vmatpush1.bf16.msra.mxu0 0
    %4475 = vmatprep.subr.bf16.mxu0 0
    %4476 = vmatpush1.bf16.msra.mxu0 0
    %4477 = vmatprep.subr.bf16.mxu0 0
    %4478 = vmatpush1.bf16.msra.mxu0 0
    %4479 = vmatprep.subr.bf16.mxu0 0
    %4480 = vmatpush1.bf16.msra.mxu0 0
    %4481 = vmatprep.subr.bf16.mxu0 0
    %4482 = vmatpush1.bf16.msra.mxu0 0
    %4483 = vmatprep.subr.bf16.mxu0 0
    %4484 = vmatpush1.bf16.msra.mxu0 0
    %4485 = vmatprep.subr.bf16.mxu0 0
    %4486 = vmatpush1.bf16.msra.mxu0 0
    %4487 = vmatprep.subr.bf16.mxu0 0
    %4488 = vmatpush1.bf16.msra.mxu0 0
    %4489 = vmatprep.subr.bf16.mxu0 0
    %4490 = vmatpush1.bf16.msra.mxu0 0
    %4491 = vmatprep.subr.bf16.mxu0 0
    %4492 = vmatpush1.bf16.msra.mxu0 0
    %4493 = vmatprep.subr.bf16.mxu0 0
    %4494 = vmatpush1.bf16.msra.mxu0 0
    %4495 = vmatprep.subr.bf16.mxu0 0
    %4496 = vmatpush1.bf16.msra.mxu0 0
    %4497 = vmatprep.subr.bf16.mxu0 0
    %4498 = vmatpush1.bf16.msra.mxu0 0
    %4499 = vmatprep.subr.bf16.mxu0 0
    %4500 = vmatpush1.bf16.msra.mxu0 0
    %4501 = vmatprep.mubr.bf16.mxu0 0
    %4502 = vmatmul.mubr.bf16.gmra.mrb[0].mxu0 %v4467
    %v4503 = vpop.f32.mrb[0].mxu0
    %v4504 = vadd.f32 %v3517, %v4503
    %v4505 = vpop.f32.mrb[0].mxu0
    %v4506 = vpop.f32.mrb[0].mxu0
    %v4507 = vpop.f32.mrb[0].mxu0
    %4508 = vdwg.mxu0
    %v4509 = vmul.f32 %v4504, %v4504
    %v4510 = vsel %vm241, %v4509, 0.0
    %4511 = vadd.xlane.f32.xlu0 %v4510
    %v4512 = vpop.xlane.xlu0 %4511
    %v4513 = vmul.f32 %v4512, %v245
    %v4514 = vadd.f32 %v4513, 1e-06
    %v4515 = vrsqrt.pop %v4514
    %v4516 = vmul.f32 %v4504, %v4515
    %v4517 = vlaneseq
    %v4518 = vshrl.u32 %v4517, 7
    %v4519 = vsub.s32 0, %v4518
    %v4520 = vrot.slane %v4405, %v4519
    %v4521 = vmul.f32 %v4516, %v4520
    %v4522 = vpack.c.bf16 %v4521, %v4521
    %v4535 = vunpack.c.l.b16 %v4406
    %v4536 = vunpack.c.h.b16 %v4406
    %v4537 = vunpack.c.l.b16 %v4407
    %v4538 = vunpack.c.h.b16 %v4407
    %v4539 = vunpack.c.l.b16 %v4408
    %v4540 = vunpack.c.l.b16 %v4409
    %v4541 = vunpack.c.h.b16 %v4409
    %v4542 = vunpack.c.l.b16 %v4410
    %v4543 = vunpack.c.h.b16 %v4410
    %v4544 = vunpack.c.l.b16 %v4411
    %v4545 = vunpack.c.l.b16 %v4412
    %v4546 = vunpack.c.h.b16 %v4412
    %v4547 = vunpack.c.l.b16 %v4413
    %v4548 = vunpack.c.h.b16 %v4413
    %v4549 = vunpack.c.l.b16 %v4414
    %v4550 = vunpack.c.l.b16 %v4415
    %v4551 = vunpack.c.h.b16 %v4415
    %v4552 = vunpack.c.l.b16 %v4416
    %v4553 = vunpack.c.h.b16 %v4416
    %v4554 = vunpack.c.l.b16 %v4417
    %v4555 = vpack.c.b16 %v4540, %v4535
    %v4556 = vpack.c.b16 %v4541, %v4536
    %v4557 = vpack.c.b16 %v4542, %v4537
    %v4558 = vpack.c.b16 %v4543, %v4538
    %v4559 = vpack.c.b16 %v4544, %v4539
    %v4560 = vpack.c.b16 %v4550, %v4545
    %v4561 = vpack.c.b16 %v4551, %v4546
    %v4562 = vpack.c.b16 %v4552, %v4547
    %v4563 = vpack.c.b16 %v4553, %v4548
    %v4564 = vpack.c.b16 %v4554, %v4549
    %4565 = vrot.lane.b32.xlu0 %v4555, 56
    %v4566 = vpop.permute.xlu0 %4565
    %4567 = vrot.lane.b32.xlu0 %v4556, 56
    %v4568 = vpop.permute.xlu0 %4567
    %4569 = vrot.lane.b32.xlu0 %v4557, 56
    %v4570 = vpop.permute.xlu0 %4569
    %4571 = vrot.lane.b32.xlu0 %v4558, 56
    %v4572 = vpop.permute.xlu0 %4571
    %4573 = vrot.lane.b32.xlu0 %v4559, 56
    %v4574 = vpop.permute.xlu0 %4573
    %4575 = vrot.lane.b32.xlu0 %v4560, 56
    %v4576 = vpop.permute.xlu0 %4575
    %4577 = vrot.lane.b32.xlu0 %v4561, 56
    %v4578 = vpop.permute.xlu0 %4577
    %4579 = vrot.lane.b32.xlu0 %v4562, 56
    %v4580 = vpop.permute.xlu0 %4579
    %4581 = vrot.lane.b32.xlu0 %v4563, 56
    %v4582 = vpop.permute.xlu0 %4581
    %4583 = vrot.lane.b32.xlu0 %v4564, 56
    %v4584 = vpop.permute.xlu0 %4583
    %vm4585 = vcmask 457728
    %v4586 = vsel %vm4585, %v4566, %v4568
    %v4587 = vsel %vm4585, %v4568, %v4570
    %v4588 = vsel %vm4585, %v4570, %v4572
    %v4589 = vsel %vm4585, %v4572, %v4574
    %v4590 = vsel %vm4585, %v4576, %v4578
    %v4591 = vsel %vm4585, %v4578, %v4580
    %v4592 = vsel %vm4585, %v4580, %v4582
    %v4593 = vsel %vm4585, %v4582, %v4584
    %v4603 = vsel %vm241, %v4522, 0
    %4605 = vmatprep.subr.bf16.mxu0 %v4587
    %4606 = vmatpush1.bf16.msra.mxu0 %v4586
    %4607 = vmatprep.subr.bf16.mxu0 %v4591
    %4608 = vmatpush1.bf16.msra.mxu0 %v4590
    %4609 = vmatprep.subr.bf16.mxu0 0
    %4610 = vmatpush1.bf16.msra.mxu0 0
    %4611 = vmatprep.subr.bf16.mxu0 0
    %4612 = vmatpush1.bf16.msra.mxu0 0
    %4613 = vmatprep.subr.bf16.mxu0 0
    %4614 = vmatpush1.bf16.msra.mxu0 0
    %4615 = vmatprep.subr.bf16.mxu0 0
    %4616 = vmatpush1.bf16.msra.mxu0 0
    %4617 = vmatprep.subr.bf16.mxu0 0
    %4618 = vmatpush1.bf16.msra.mxu0 0
    %4619 = vmatprep.subr.bf16.mxu0 0
    %4620 = vmatpush1.bf16.msra.mxu0 0
    %4621 = vmatprep.subr.bf16.mxu0 0
    %4622 = vmatpush1.bf16.msra.mxu0 0
    %4623 = vmatprep.subr.bf16.mxu0 0
    %4624 = vmatpush1.bf16.msra.mxu0 0
    %4625 = vmatprep.subr.bf16.mxu0 0
    %4626 = vmatpush1.bf16.msra.mxu0 0
    %4627 = vmatprep.subr.bf16.mxu0 0
    %4628 = vmatpush1.bf16.msra.mxu0 0
    %4629 = vmatprep.subr.bf16.mxu0 0
    %4630 = vmatpush1.bf16.msra.mxu0 0
    %4631 = vmatprep.subr.bf16.mxu0 0
    %4632 = vmatpush1.bf16.msra.mxu0 0
    %4633 = vmatprep.subr.bf16.mxu0 0
    %4634 = vmatpush1.bf16.msra.mxu0 0
    %4635 = vmatprep.subr.bf16.mxu0 0
    %4636 = vmatpush1.bf16.msra.mxu0 0
    %4637 = vmatprep.mubr.bf16.mxu0 0
    %4638 = vmatmul.mubr.bf16.gmra.mrb[0].mxu0 %v4603
    %v4639 = vpop.f32.mrb[0].mxu0
    %v4640 = vadd.f32 0.0, %v4639
    %v4641 = vpop.f32.mrb[0].mxu0
    %v4642 = vadd.f32 0.0, %v4641
    %v4643 = vpop.f32.mrb[0].mxu0
    %v4644 = vpop.f32.mrb[0].mxu0
    %4645 = vdwg.mxu0
    %4646 = vmatprep.subr.bf16.mxu0 %v4589
    %4647 = vmatpush1.bf16.msra.mxu0 %v4588
    %4648 = vmatprep.subr.bf16.mxu0 %v4593
    %4649 = vmatpush1.bf16.msra.mxu0 %v4592
    %4650 = vmatprep.subr.bf16.mxu0 0
    %4651 = vmatpush1.bf16.msra.mxu0 0
    %4652 = vmatprep.subr.bf16.mxu0 0
    %4653 = vmatpush1.bf16.msra.mxu0 0
    %4654 = vmatprep.subr.bf16.mxu0 0
    %4655 = vmatpush1.bf16.msra.mxu0 0
    %4656 = vmatprep.subr.bf16.mxu0 0
    %4657 = vmatpush1.bf16.msra.mxu0 0
    %4658 = vmatprep.subr.bf16.mxu0 0
    %4659 = vmatpush1.bf16.msra.mxu0 0
    %4660 = vmatprep.subr.bf16.mxu0 0
    %4661 = vmatpush1.bf16.msra.mxu0 0
    %4662 = vmatprep.subr.bf16.mxu0 0
    %4663 = vmatpush1.bf16.msra.mxu0 0
    %4664 = vmatprep.subr.bf16.mxu0 0
    %4665 = vmatpush1.bf16.msra.mxu0 0
    %4666 = vmatprep.subr.bf16.mxu0 0
    %4667 = vmatpush1.bf16.msra.mxu0 0
    %4668 = vmatprep.subr.bf16.mxu0 0
    %4669 = vmatpush1.bf16.msra.mxu0 0
    %4670 = vmatprep.subr.bf16.mxu0 0
    %4671 = vmatpush1.bf16.msra.mxu0 0
    %4672 = vmatprep.subr.bf16.mxu0 0
    %4673 = vmatpush1.bf16.msra.mxu0 0
    %4674 = vmatprep.subr.bf16.mxu0 0
    %4675 = vmatpush1.bf16.msra.mxu0 0
    %4676 = vmatprep.subr.bf16.mxu0 0
    %4677 = vmatpush1.bf16.msra.mxu0 0
    %4678 = vmatprep.mubr.bf16.mxu0 0
    %4679 = vmatmul.mubr.bf16.gmra.mrb[0].mxu0 %v4603
    %v4680 = vpop.f32.mrb[0].mxu0
    %v4681 = vadd.f32 0.0, %v4680
    %v4682 = vpop.f32.mrb[0].mxu0
    %v4683 = vadd.f32 0.0, %v4682
    %v4684 = vpop.f32.mrb[0].mxu0
    %v4685 = vpop.f32.mrb[0].mxu0
    %4686 = vdwg.mxu0
    %v4687 = vxor.u32 %v4640, 2147483648
    %v4688 = vxor.u32 %v4642, 2147483648
    %v4689 = vmul.f32 %v4687, 1.442695
    %v4690 = vpow.pop %v4689
    %v4691 = vmul.f32 %v4688, 1.442695
    %v4692 = vpow.pop %v4691
    %v4693 = vadd.f32 %v4690, 1.0
    %v4694 = vadd.f32 %v4692, 1.0
    %v4695 = vrcp.pop %v4693
    %v4696 = vmul.f32 1.0, %v4695
    %v4697 = vrcp.pop %v4694
    %v4698 = vmul.f32 1.0, %v4697
    %v4699 = vmul.f32 %v4640, %v4696
    %v4700 = vmul.f32 %v4642, %v4698
    %v4701 = vmul.f32 %v4699, %v4681
    %v4702 = vmul.f32 %v4700, %v4683
    %v4703 = vpack.c.bf16 %v4701, %v4701
    %v4704 = vpack.c.bf16 %v4702, %v4702
    %v4705 = vld [vmem:[%s3 + $0x6] sm:$0x1]
    %v4738 = vunpack.c.l.b16 %v4418
    %v4739 = vunpack.c.l.b16 %v4419
    %v4740 = vunpack.c.l.b16 %v4420
    %v4741 = vunpack.c.l.b16 %v4421
    %v4742 = vunpack.c.l.b16 %v4422
    %v4743 = vunpack.c.l.b16 %v4423
    %v4744 = vunpack.c.l.b16 %v4424
    %v4745 = vunpack.c.l.b16 %v4425
    %v4746 = vunpack.c.l.b16 %v4426
    %v4747 = vunpack.c.l.b16 %v4427
    %v4748 = vunpack.c.l.b16 %v4428
    %v4749 = vunpack.c.l.b16 %v4429
    %v4750 = vunpack.c.l.b16 %v4430
    %v4751 = vunpack.c.l.b16 %v4431
    %v4752 = vunpack.c.l.b16 %v4432
    %v4753 = vunpack.c.l.b16 %v4433
    %v4754 = vunpack.c.l.b16 %v4434
    %v4755 = vunpack.c.l.b16 %v4435
    %v4756 = vunpack.c.l.b16 %v4436
    %v4757 = vunpack.c.l.b16 %v4437
    %v4758 = vunpack.c.l.b16 %v4438
    %v4759 = vunpack.c.l.b16 %v4439
    %v4760 = vunpack.c.l.b16 %v4440
    %v4761 = vunpack.c.l.b16 %v4441
    %v4762 = vunpack.c.l.b16 %v4442
    %v4763 = vunpack.c.l.b16 %v4443
    %v4764 = vunpack.c.l.b16 %v4444
    %v4765 = vunpack.c.l.b16 %v4445
    %v4766 = vunpack.c.l.b16 %v4446
    %v4767 = vunpack.c.l.b16 %v4447
    %v4768 = vunpack.c.l.b16 %v4448
    %v4769 = vunpack.c.l.b16 %v4449
    %v4770 = vpack.c.b16 %v4739, %v4738
    %v4771 = vpack.c.b16 %v4741, %v4740
    %v4772 = vpack.c.b16 %v4743, %v4742
    %v4773 = vpack.c.b16 %v4745, %v4744
    %v4774 = vpack.c.b16 %v4747, %v4746
    %v4775 = vpack.c.b16 %v4749, %v4748
    %v4776 = vpack.c.b16 %v4751, %v4750
    %v4777 = vpack.c.b16 %v4753, %v4752
    %v4778 = vpack.c.b16 %v4755, %v4754
    %v4779 = vpack.c.b16 %v4757, %v4756
    %v4780 = vpack.c.b16 %v4759, %v4758
    %v4781 = vpack.c.b16 %v4761, %v4760
    %v4782 = vpack.c.b16 %v4763, %v4762
    %v4783 = vpack.c.b16 %v4765, %v4764
    %v4784 = vpack.c.b16 %v4767, %v4766
    %v4785 = vpack.c.b16 %v4769, %v4768
    %4802 = vmatprep.subr.bf16.mxu0 0
    %4803 = vmatpush1.bf16.msra.mxu0 %v4770
    %4804 = vmatprep.subr.bf16.mxu0 0
    %4805 = vmatpush1.bf16.msra.mxu0 %v4771
    %4806 = vmatprep.subr.bf16.mxu0 0
    %4807 = vmatpush1.bf16.msra.mxu0 %v4772
    %4808 = vmatprep.subr.bf16.mxu0 0
    %4809 = vmatpush1.bf16.msra.mxu0 %v4773
    %4810 = vmatprep.subr.bf16.mxu0 0
    %4811 = vmatpush1.bf16.msra.mxu0 %v4774
    %4812 = vmatprep.subr.bf16.mxu0 0
    %4813 = vmatpush1.bf16.msra.mxu0 %v4775
    %4814 = vmatprep.subr.bf16.mxu0 0
    %4815 = vmatpush1.bf16.msra.mxu0 %v4776
    %4816 = vmatprep.subr.bf16.mxu0 0
    %4817 = vmatpush1.bf16.msra.mxu0 %v4777
    %4818 = vmatprep.subr.bf16.mxu0 0
    %4819 = vmatpush1.bf16.msra.mxu0 %v4778
    %4820 = vmatprep.subr.bf16.mxu0 0
    %4821 = vmatpush1.bf16.msra.mxu0 %v4779
    %4822 = vmatprep.subr.bf16.mxu0 0
    %4823 = vmatpush1.bf16.msra.mxu0 %v4780
    %4824 = vmatprep.subr.bf16.mxu0 0
    %4825 = vmatpush1.bf16.msra.mxu0 %v4781
    %4826 = vmatprep.subr.bf16.mxu0 0
    %4827 = vmatpush1.bf16.msra.mxu0 %v4782
    %4828 = vmatprep.subr.bf16.mxu0 0
    %4829 = vmatpush1.bf16.msra.mxu0 %v4783
    %4830 = vmatprep.subr.bf16.mxu0 0
    %4831 = vmatpush1.bf16.msra.mxu0 %v4784
    %4832 = vmatprep.subr.bf16.mxu0 0
    %4833 = vmatpush1.bf16.msra.mxu0 %v4785
    %4834 = vmatprep.mubr.bf16.mxu0 %v4704
    %4835 = vmatmul.mubr.bf16.gmra.mrb[0].mxu0 %v4703
    %v4836 = vpop.f32.mrb[0].mxu0
    %v4837 = vadd.f32 %v4504, %v4836
    %v4838 = vpop.f32.mrb[0].mxu0
    %v4839 = vpop.f32.mrb[0].mxu0
    %v4840 = vpop.f32.mrb[0].mxu0
    %4841 = vdwg.mxu0
    %v4842 = vmul.f32 %v4837, %v4837
    %v4843 = vsel %vm241, %v4842, 0.0
    %4844 = vadd.xlane.f32.xlu0 %v4843
    %v4845 = vpop.xlane.xlu0 %4844
    %v4846 = vmul.f32 %v4845, %v245
    %v4847 = vadd.f32 %v4846, 1e-06
    %v4848 = vrsqrt.pop %v4847
    %v4849 = vmul.f32 %v4837, %v4848
    %v4850 = vlaneseq
    %v4851 = vshrl.u32 %v4850, 7
    %v4852 = vsub.s32 0, %v4851
    %v4853 = vrot.slane %v4705, %v4852
    %v4854 = vmul.f32 %v4849, %v4853
    %v4855 = vpack.c.bf16 %v4854, %v4854
    %vm4856 = vcmask 257024
    %4857 = vst.msk [vmem:[#allocation5] sm:$0xf] %vm4856, %v4855
    // Predicated region
    $region30: #{deci_model_forward.1} parent=1 // pred_check
      _
    $region31: #{deci_model_forward.1} parent=1 // pred_check_branch
      %4859 = sbr.rel (0) target = $region33
    $region32: #{deci_model_forward.1} parent=1 // pred_region
      %s4861 = ssub.s32 64, 64
      %4862 = vsyncadd [#allocation3], %s4861
      %s4864 = sshll.u32 [#allocation5], 4
      %s4865 = int_to_ptr.vmem [resolvable:$true] %s4864
      %4867 = dma.vmem_to_hbm [thread:$0]  %s4865, 64, %s6, [#allocation3]
    $region33: #{deci_model_forward.1} parent=1 // pred_fallthru
      _
    // Predicated region
    $region34: #{deci_model_forward.1} parent=1 // pred_check
      _
    $region35: #{deci_model_forward.1} parent=1 // pred_check_branch
      %4869 = sbr.rel (0) target = $region37
    $region36: #{deci_model_forward.1} parent=1 // pred_region
      %4870 = dma.done [#allocation3], 64
    $region37: #{deci_model_forward.1} parent=1 // pred_fallthru
      _
    %4871 = vsyncpa [#allocation3], 1
    %4872 = vsyncpa [#allocation4], 1

</llo_original>
